<compile_context>
chip_gen: v7x
topology: tpu7x:2x2x1
jax: 0.10.0
libtpu: 0.0.40
codegen_flags: <defaults>
</compile_context>

<pallas_src>
import functools

import jax
import jax.numpy as jnp
from jax.experimental import pallas as pl
from jax.experimental.pallas import tpu as pltpu

EPS = 1e-5
NEG_SLOPE = 0.1
LANE = 128


# ------------------------------ Pallas kernel ------------------------------ #

def _conv_bn_act_kernel(x_ref, w_ref, s_ref, b_ref, o_ref, acc_ref, *,
                        kq, ho, wo, use_activation):
    """One (batch, Cout-tile, Cin-tile) grid step of a stride-1 KqxKq conv.

    x_ref  : (1, Hq, Wq, TCin)     bf16  padded activation (read once from HBM)
    w_ref  : (Kq, Kq, TCin, TCout) bf16  stride-folded conv weight
    s_ref  : (1, TCout)            f32   folded BN scale
    b_ref  : (1, TCout)            f32   folded BN bias
    o_ref  : (1, Ho*Wo, TCout)     bf16  lane-dense output tile
    acc_ref: (Ho*Wo, TCout)        f32   scratch carried across the Cin axis
    """
    c = pl.program_id(2)

    @pl.when(c == 0)
    def _():
        acc_ref[...] = jnp.zeros_like(acc_ref)

    # K*K taps as static stride-1 slices of the in-VMEM tile; each tap feeds
    # one small MXU dot, accumulated in f32 (no im2col materialization).
    part = None
    for dy in range(kq):
        for dx in range(kq):
            tap = x_ref[0, dy:dy + ho, dx:dx + wo, :]          # (ho, wo, TCin)
            tap = tap.reshape(ho * wo, tap.shape[-1])
            d = jnp.dot(tap, w_ref[dy, dx],
                        preferred_element_type=jnp.float32)
            part = d if part is None else part + d
    acc_ref[...] += part

    @pl.when(c == pl.num_programs(2) - 1)
    def _():
        y = acc_ref[...] * s_ref[...] + b_ref[...]             # folded BatchNorm
        if use_activation:
            y = jnp.where(y > 0, y, NEG_SLOPE * y)             # LeakyReLU(0.1)
        o_ref[0] = y.astype(o_ref.dtype)                       # bf16 store


# ------------------------- VMEM budget / tile planner ----------------------- #

def _round_up(x, m):
    return (x + m - 1) // m * m


def _vmem_block_bytes(shape, itemsize):
    """VMEM footprint of one buffer of a block: minor dim padded to 128 lanes,
    second-minor padded to sublane packing (8 for 4-byte, 16 for 2-byte)."""
    sub = 8 * (4 // itemsize)
    lead = 1
    for d in shape[:-2]:
        lead *= d
    return lead * _round_up(shape[-2], sub) * _round_up(shape[-1], LANE) * itemsize


def _vmem_budget():
    """Generation-aware budget: ~96 MiB on 128 MiB v5e/v6e, ~48 MiB on 64 MiB
    v7x; also used verbatim as the scoped vmem_limit_bytes."""
    try:
        cap = pltpu.get_tpu_info().vmem_capacity_bytes
    except Exception:
        cap = 64 * 1024 * 1024
    return int(min((cap * 3) // 4, 96 * 1024 * 1024))


def _estimate_vmem(hq, wq, ho, wo, kq, tcin, tcout):
    b = 2 * _vmem_block_bytes((1, hq, wq, tcin), 2)        # activation tile x2 buf
    b += 2 * _vmem_block_bytes((kq, kq, tcin, tcout), 2)   # weight x2 buf
    b += 2 * 2 * _vmem_block_bytes((1, tcout), 4)          # BN scale + bias x2 buf
    b += 2 * _vmem_block_bytes((1, ho * wo, tcout), 2)     # bf16 output tile x2 buf
    b += _vmem_block_bytes((ho * wo, tcout), 4)            # f32 accumulator scratch
    return b


def _plan_tiles(hq, wq, cinp, coutp, ho, wo, kq, budget):
    """Largest (Cin-tile, Cout-tile) whose (double-buffered, lane/sublane
    padded) working set fits the budget.  Cout prefers 512/256 tiles (MXU
    fill on v6e/v7x); Cin is only tiled when 128-aligned (lane rule)."""
    cout_cands = [c for c in (512, 256, 128) if coutp % c == 0]
    cin_cands = [cinp]
    if cinp % LANE == 0:
        cin_cands += [c for c in (1024, 512, 256, 128)
                      if c < cinp and cinp % c == 0]
    for tcin in cin_cands:
        for tcout in cout_cands:
            if _estimate_vmem(hq, wq, ho, wo, kq, tcin, tcout) <= budget:
                return tcin, tcout
    # TODO(synk): row-tile the activation (halo fetched via pl.ANY +
    # make_async_copy) for feature maps too large for whole-image VMEM blocks.
    raise ValueError("ConvBlock: activation tile does not fit in VMEM; "
                     "row tiling with halo DMA not implemented.")


def _conv_bn_act_pallas(x, w, scale, bias, *, ho, wo, kq, use_activation):
    n, hq, wq, cinp = x.shape
    coutp = w.shape[3]
    budget = _vmem_budget()
    tcin, tcout = _plan_tiles(hq, wq, cinp, coutp, ho, wo, kq, budget)

    kernel = functools.partial(_conv_bn_act_kernel, kq=kq, ho=ho, wo=wo,
                               use_activation=use_activation)
    # Weight/scale/bias blocks are grid-invariant along n and along c for a
    # fixed j, so Pallas skips their re-DMA between consecutive steps.
    # TODO(synk): mark them pipeline_mode=pl.Buffered(1) (single-buffered) once
    # verified on this jax version; they are accounted as double-buffered above.
    return pl.pallas_call(
        kernel,
        out_shape=jax.ShapeDtypeStruct((n, ho * wo, coutp), jnp.bfloat16),
        grid=(n, coutp // tcout, cinp // tcin),
        in_specs=[
            pl.BlockSpec((1, hq, wq, tcin), lambda b, j, c: (b, 0, 0, c)),
            pl.BlockSpec((kq, kq, tcin, tcout), lambda b, j, c: (0, 0, c, j)),
            pl.BlockSpec((1, tcout), lambda b, j, c: (0, j)),
            pl.BlockSpec((1, tcout), lambda b, j, c: (0, j)),
        ],
        out_specs=pl.BlockSpec((1, ho * wo, tcout), lambda b, j, c: (b, 0, j)),
        scratch_shapes=[pltpu.VMEM((ho * wo, tcout), jnp.float32)],
        compiler_params=pltpu.CompilerParams(
            dimension_semantics=("parallel", "parallel", "arbitrary"),
            vmem_limit_bytes=budget),
    )(x, w, scale, bias)


# --------------------- stride folding & parameter folding ------------------- #

def _space_to_depth(x, s):
    """(N, H, W, C) -> (N, H//s, W//s, s*s*C); H and W must be multiples of s."""
    n, h, w, c = x.shape
    x = x.reshape(n, h // s, s, w // s, s, c)
    x = jnp.transpose(x, (0, 1, 3, 2, 4, 5))
    return x.reshape(n, h // s, w // s, s * s * c)


def _fold_weight_stride(w_oihw, stride):
    """OIHW conv weight -> equivalent stride-1 HWIO weight over the
    space-to-depth input: (Kq, Kq, s*s*Cin, Cout) with Kq = ceil(K / s)."""
    cout, cin, k, _ = w_oihw.shape
    s = stride
    kq = -(-k // s)
    w_hwio = jnp.transpose(w_oihw, (2, 3, 1, 0))            # (K, K, Cin, Cout)
    if s == 1:
        return w_hwio, kq
    wr = jnp.zeros((kq, s, kq, s, cin, cout), w_hwio.dtype)
    for qy in range(kq):
        for ry in range(s):
            dy = s * qy + ry
            if dy >= k:
                continue
            for qx in range(kq):
                for rx in range(s):
                    dx = s * qx + rx
                    if dx >= k:
                        continue
                    wr = wr.at[qy, ry, qx, rx].set(w_hwio[dy, dx])
    wr = jnp.transpose(wr, (0, 2, 1, 3, 4, 5))              # (Kq,Kq,s,s,Cin,Cout)
    return wr.reshape(kq, kq, s * s * cin, cout), kq


def fold_conv_bn_params(p, stride):
    """One-time preprocessing (outside the hot path): fold BN into per-channel
    scale/bias, fold the stride into the weights (space-to-depth), cast to
    bf16, and pad Cout to a multiple of 128 lanes (padded channels emit 0)."""
    w, _ = _fold_weight_stride(p['w'], stride)              # (Kq,Kq,CinEff,Cout)
    cout = w.shape[-1]
    scale = p['gamma'] / jnp.sqrt(p['var'] + EPS)
    bias = p['beta'] - p['mean'] * scale

    coutp = _round_up(cout, LANE)
    pad = coutp - cout
    w = jnp.pad(w, ((0, 0), (0, 0), (0, 0), (0, pad)))
    scale = jnp.pad(scale, (0, pad), constant_values=1.0)
    bias = jnp.pad(bias, (0, pad))

    arrays = dict(w=w.astype(jnp.bfloat16),
                  scale=scale[None, :].astype(jnp.float32),
                  bias=bias[None, :].astype(jnp.float32))
    meta = dict(cout=cout, ksize=p['w'].shape[2])
    return arrays, meta


# --------------------------------- wrappers --------------------------------- #

def conv_block_apply_nhwc(x, w, scale, bias, *, ksize, stride, padding,
                          use_activation):
    """Hot path: NHWC bf16 in -> NHWC bf16 out, Cout padded to 128 lanes.
    Chain this directly between layers (no NCHW transposes, no :cout slice)."""
    n, h, wd, _ = x.shape
    kq, cin_eff, coutp = w.shape[0], w.shape[2], w.shape[3]
    s = stride
    ho = (h + 2 * padding - ksize) // s + 1
    wo = (wd + 2 * padding - ksize) // s + 1
    # Zero-pad spatially; extra bottom/right padding makes H/W multiples of the
    # stride and covers every tap of the stride-folded kernel.
    hp = max(_round_up(h + 2 * padding, s), s * (ho + kq - 1))
    wp = max(_round_up(wd + 2 * padding, s), s * (wo + kq - 1))
    x = jnp.pad(x, ((0, 0), (padding, hp - h - padding),
                    (padding, wp - wd - padding), (0, 0)))
    if s > 1:
        # One same-size rearrangement instead of strided slicing in-kernel.
        x = _space_to_depth(x, s)
    assert x.shape[-1] == cin_eff, (x.shape, cin_eff)

    y = _conv_bn_act_pallas(x, w, scale, bias, ho=ho, wo=wo, kq=kq,
                            use_activation=use_activation)
    return y.reshape(n, ho, wo, coutp)        # contiguous split: no-copy reshape


@functools.partial(jax.jit, static_argnames=(
    "ksize", "stride", "padding", "cout", "use_activation"))
def conv_block_forward(x_nchw, w, scale, bias, *, ksize, stride, padding,
                       cout, use_activation):
    """PyTorch-boundary wrapper: NCHW f32 in / NCHW f32 out.  The transposes
    and the :cout slice exist only at this model boundary; multi-layer models
    should chain conv_block_apply_nhwc directly (NHWC, bf16, padded Cout)."""
    x = jnp.transpose(x_nchw, (0, 2, 3, 1)).astype(jnp.bfloat16)
    y = conv_block_apply_nhwc(x, w, scale, bias, ksize=ksize, stride=stride,
                              padding=padding, use_activation=use_activation)
    y = y[..., :cout].astype(jnp.float32)
    return jnp.transpose(y, (0, 3, 1, 2))


# ---------------------------- params & reference ---------------------------- #

def make_params(key, cin, cout, ksize):
    k1, k2, k3, k4, k5 = jax.random.split(key, 5)
    return dict(
        w=0.1 * jax.random.normal(k1, (cout, cin, ksize, ksize), jnp.float32),
        gamma=1.0 + 0.1 * jax.random.normal(k2, (cout,), jnp.float32),
        beta=0.1 * jax.random.normal(k3, (cout,), jnp.float32),
        mean=0.1 * jax.random.normal(k4, (cout,), jnp.float32),
        var=1.0 + jnp.abs(jax.random.normal(k5, (cout,), jnp.float32)),
    )


def conv_block_reference(x, p, stride, padding, use_activation):
    y = jax.lax.conv_general_dilated(
        x, p['w'], (stride, stride), [(padding, padding), (padding, padding)],
        dimension_numbers=('NCHW', 'OIHW', 'NCHW'),
        precision=jax.lax.Precision.HIGHEST)
    scale = p['gamma'] / jnp.sqrt(p['var'] + EPS)
    bias = p['beta'] - p['mean'] * scale
    y = y * scale[None, :, None, None] + bias[None, :, None, None]
    if use_activation:
        y = jnp.where(y > 0, y, NEG_SLOPE * y)
    return y


# ----------------------------------- main ----------------------------------- #

if __name__ == "__main__":
    key = jax.random.PRNGKey(0)
    k_x, k_p1, k_p2, k_p3 = jax.random.split(key, 4)

    N, Cin, H, W = 2, 4, 16, 16
    x = jax.random.normal(k_x, (N, Cin, H, W), jnp.float32)

    # (param_key, out_channels, kernel_size, stride, padding, use_activation)
    configs = [
        (k_p1, 8, 3, 1, 1, True),    # typical 3x3 ConvBlock
        (k_p2, 8, 1, 1, 0, True),    # 1x1 ConvBlock
        (k_p3, 16, 3, 2, 1, False),  # strided (space-to-depth path), no act
    ]

    for kk, cout, ks, st, pad, act in configs:
        params = make_params(kk, Cin, cout, ks)
        arrays, meta = fold_conv_bn_params(params, st)
        out = conv_block_forward(
            x, arrays['w'], arrays['scale'], arrays['bias'],
            ksize=meta['ksize'], stride=st, padding=pad,
            cout=meta['cout'], use_activation=act)
        out = jax.block_until_ready(out)

        ref = jax.block_until_ready(
            conv_block_reference(x, params, st, pad, act))
        assert out.shape == ref.shape, (out.shape, ref.shape)
        # bf16 MXU inputs + bf16 output store -> tolerance sized for bf16.
        assert jnp.allclose(out, ref, atol=5e-2, rtol=5e-2), (
            float(jnp.max(jnp.abs(out - ref))))

    print("KERNEL_OK")
</pallas_src>

<mosaic_0001>
module attributes {stable_mosaic.version = 11 : i64} {
  func.func @_conv_bn_act_kernel(%arg0: i32, %arg1: i32, %arg2: i32, %arg3: memref<1x18x18x4xbf16, #tpu.memory_space<vmem>>, %arg4: memref<3x3x4x128xbf16, #tpu.memory_space<vmem>>, %arg5: memref<1x128xf32, #tpu.memory_space<vmem>>, %arg6: memref<1x128xf32, #tpu.memory_space<vmem>>, %arg7: memref<1x256x128xbf16, #tpu.memory_space<vmem>>, %arg8: memref<256x128xf32, #tpu.memory_space<vmem>>) attributes {dimension_semantics = [#tpu.dimension_semantics<parallel>, #tpu.dimension_semantics<parallel>, #tpu.dimension_semantics<arbitrary>], iteration_bounds = array<i64: 2, 1, 1>, scalar_prefetch = 0 : i64, scratch_operands = 1 : i64, tpu.core_type = #tpu.core_type<tc>, window_params = [{transform_indices = @transform_0, window_bounds = array<i64: 1, 18, 18, 4>}, {transform_indices = @transform_1, window_bounds = array<i64: 3, 3, 4, 128>}, {transform_indices = @transform_2, window_bounds = array<i64: 1, 128>}, {transform_indices = @transform_3, window_bounds = array<i64: 1, 128>}, {transform_indices = @transform_4, window_bounds = array<i64: 1, 256, 128>}]} {
    %c0_i32 = arith.constant 0 : i32
    %0 = arith.cmpi eq, %arg2, %c0_i32 : i32
    %1 = arith.extui %0 : i1 to i32
    %c0_i32_0 = arith.constant 0 : i32
    %2 = arith.cmpi ne, %1, %c0_i32_0 : i32
    scf.if %2 {
      %cst_84 = arith.constant 0.000000e+00 : f32
      %71 = vector.broadcast %cst_84 : f32 to vector<256x128xf32>
      %c0_85 = arith.constant 0 : index
      %c0_86 = arith.constant 0 : index
      %72 = vector.load %arg8[%c0_85, %c0_86] : memref<256x128xf32, #tpu.memory_space<vmem>>, vector<256x128xf32>
      tpu.vector_store %arg8[%c0_85, %c0_86], %71 {strides = array<i32>} : memref<256x128xf32, #tpu.memory_space<vmem>>, vector<256x128xf32>,
    } else {
    }
    %c0 = arith.constant 0 : index
    %c0_1 = arith.constant 0 : index
    %c0_2 = arith.constant 0 : index
    %c0_3 = arith.constant 0 : index
    %3 = vector.load %arg3[%c0, %c0_1, %c0_2, %c0_3] : memref<1x18x18x4xbf16, #tpu.memory_space<vmem>>, vector<1x16x16x4xbf16>
    %4 = vector.shape_cast %3 : vector<1x16x16x4xbf16> to vector<16x16x4xbf16>
    %5 = vector.shape_cast %4 : vector<16x16x4xbf16> to vector<256x4xbf16>
    %c0_4 = arith.constant 0 : index
    %c0_5 = arith.constant 0 : index
    %c0_6 = arith.constant 0 : index
    %c0_7 = arith.constant 0 : index
    %6 = vector.load %arg4[%c0_4, %c0_5, %c0_6, %c0_7] : memref<3x3x4x128xbf16, #tpu.memory_space<vmem>>, vector<1x1x4x128xbf16>
    %7 = vector.shape_cast %6 : vector<1x1x4x128xbf16> to vector<4x128xbf16>
    %cst = arith.constant dense<0.000000e+00> : vector<256x128xf32>
    %8 = tpu.matmul %5, %7, %cst {dimension_numbers = #tpu.dot_dimension_numbers<[1], [0], [0], [1], [0, 0, 1, 1], [], []>} : vector<256x4xbf16>, vector<4x128xbf16>, vector<256x128xf32> -> vector<256x128xf32>
    %c0_8 = arith.constant 0 : index
    %c0_9 = arith.constant 0 : index
    %c1 = arith.constant 1 : index
    %c0_10 = arith.constant 0 : index
    %9 = vector.load %arg3[%c0_8, %c0_9, %c1, %c0_10] : memref<1x18x18x4xbf16, #tpu.memory_space<vmem>>, vector<1x16x16x4xbf16>
    %10 = vector.shape_cast %9 : vector<1x16x16x4xbf16> to vector<16x16x4xbf16>
    %11 = vector.shape_cast %10 : vector<16x16x4xbf16> to vector<256x4xbf16>
    %c0_11 = arith.constant 0 : index
    %c1_12 = arith.constant 1 : index
    %c0_13 = arith.constant 0 : index
    %c0_14 = arith.constant 0 : index
    %12 = vector.load %arg4[%c0_11, %c1_12, %c0_13, %c0_14] : memref<3x3x4x128xbf16, #tpu.memory_space<vmem>>, vector<1x1x4x128xbf16>
    %13 = vector.shape_cast %12 : vector<1x1x4x128xbf16> to vector<4x128xbf16>
    %cst_15 = arith.constant dense<0.000000e+00> : vector<256x128xf32>
    %14 = tpu.matmul %11, %13, %cst_15 {dimension_numbers = #tpu.dot_dimension_numbers<[1], [0], [0], [1], [0, 0, 1, 1], [], []>} : vector<256x4xbf16>, vector<4x128xbf16>, vector<256x128xf32> -> vector<256x128xf32>
    %15 = arith.addf %8, %14 : vector<256x128xf32>
    %c0_16 = arith.constant 0 : index
    %c0_17 = arith.constant 0 : index
    %c2 = arith.constant 2 : index
    %c0_18 = arith.constant 0 : index
    %16 = vector.load %arg3[%c0_16, %c0_17, %c2, %c0_18] : memref<1x18x18x4xbf16, #tpu.memory_space<vmem>>, vector<1x16x16x4xbf16>
    %17 = vector.shape_cast %16 : vector<1x16x16x4xbf16> to vector<16x16x4xbf16>
    %18 = vector.shape_cast %17 : vector<16x16x4xbf16> to vector<256x4xbf16>
    %c0_19 = arith.constant 0 : index
    %c2_20 = arith.constant 2 : index
    %c0_21 = arith.constant 0 : index
    %c0_22 = arith.constant 0 : index
    %19 = vector.load %arg4[%c0_19, %c2_20, %c0_21, %c0_22] : memref<3x3x4x128xbf16, #tpu.memory_space<vmem>>, vector<1x1x4x128xbf16>
    %20 = vector.shape_cast %19 : vector<1x1x4x128xbf16> to vector<4x128xbf16>
    %cst_23 = arith.constant dense<0.000000e+00> : vector<256x128xf32>
    %21 = tpu.matmul %18, %20, %cst_23 {dimension_numbers = #tpu.dot_dimension_numbers<[1], [0], [0], [1], [0, 0, 1, 1], [], []>} : vector<256x4xbf16>, vector<4x128xbf16>, vector<256x128xf32> -> vector<256x128xf32>
    %22 = arith.addf %15, %21 : vector<256x128xf32>
    %c0_24 = arith.constant 0 : index
    %c1_25 = arith.constant 1 : index
    %c0_26 = arith.constant 0 : index
    %c0_27 = arith.constant 0 : index
    %23 = vector.load %arg3[%c0_24, %c1_25, %c0_26, %c0_27] : memref<1x18x18x4xbf16, #tpu.memory_space<vmem>>, vector<1x16x16x4xbf16>
    %24 = vector.shape_cast %23 : vector<1x16x16x4xbf16> to vector<16x16x4xbf16>
    %25 = vector.shape_cast %24 : vector<16x16x4xbf16> to vector<256x4xbf16>
    %c1_28 = arith.constant 1 : index
    %c0_29 = arith.constant 0 : index
    %c0_30 = arith.constant 0 : index
    %c0_31 = arith.constant 0 : index
    %26 = vector.load %arg4[%c1_28, %c0_29, %c0_30, %c0_31] : memref<3x3x4x128xbf16, #tpu.memory_space<vmem>>, vector<1x1x4x128xbf16>
    %27 = vector.shape_cast %26 : vector<1x1x4x128xbf16> to vector<4x128xbf16>
    %cst_32 = arith.constant dense<0.000000e+00> : vector<256x128xf32>
    %28 = tpu.matmul %25, %27, %cst_32 {dimension_numbers = #tpu.dot_dimension_numbers<[1], [0], [0], [1], [0, 0, 1, 1], [], []>} : vector<256x4xbf16>, vector<4x128xbf16>, vector<256x128xf32> -> vector<256x128xf32>
    %29 = arith.addf %22, %28 : vector<256x128xf32>
    %c0_33 = arith.constant 0 : index
    %c1_34 = arith.constant 1 : index
    %c1_35 = arith.constant 1 : index
    %c0_36 = arith.constant 0 : index
    %30 = vector.load %arg3[%c0_33, %c1_34, %c1_35, %c0_36] : memref<1x18x18x4xbf16, #tpu.memory_space<vmem>>, vector<1x16x16x4xbf16>
    %31 = vector.shape_cast %30 : vector<1x16x16x4xbf16> to vector<16x16x4xbf16>
    %32 = vector.shape_cast %31 : vector<16x16x4xbf16> to vector<256x4xbf16>
    %c1_37 = arith.constant 1 : index
    %c1_38 = arith.constant 1 : index
    %c0_39 = arith.constant 0 : index
    %c0_40 = arith.constant 0 : index
    %33 = vector.load %arg4[%c1_37, %c1_38, %c0_39, %c0_40] : memref<3x3x4x128xbf16, #tpu.memory_space<vmem>>, vector<1x1x4x128xbf16>
    %34 = vector.shape_cast %33 : vector<1x1x4x128xbf16> to vector<4x128xbf16>
    %cst_41 = arith.constant dense<0.000000e+00> : vector<256x128xf32>
    %35 = tpu.matmul %32, %34, %cst_41 {dimension_numbers = #tpu.dot_dimension_numbers<[1], [0], [0], [1], [0, 0, 1, 1], [], []>} : vector<256x4xbf16>, vector<4x128xbf16>, vector<256x128xf32> -> vector<256x128xf32>
    %36 = arith.addf %29, %35 : vector<256x128xf32>
    %c0_42 = arith.constant 0 : index
    %c1_43 = arith.constant 1 : index
    %c2_44 = arith.constant 2 : index
    %c0_45 = arith.constant 0 : index
    %37 = vector.load %arg3[%c0_42, %c1_43, %c2_44, %c0_45] : memref<1x18x18x4xbf16, #tpu.memory_space<vmem>>, vector<1x16x16x4xbf16>
    %38 = vector.shape_cast %37 : vector<1x16x16x4xbf16> to vector<16x16x4xbf16>
    %39 = vector.shape_cast %38 : vector<16x16x4xbf16> to vector<256x4xbf16>
    %c1_46 = arith.constant 1 : index
    %c2_47 = arith.constant 2 : index
    %c0_48 = arith.constant 0 : index
    %c0_49 = arith.constant 0 : index
    %40 = vector.load %arg4[%c1_46, %c2_47, %c0_48, %c0_49] : memref<3x3x4x128xbf16, #tpu.memory_space<vmem>>, vector<1x1x4x128xbf16>
    %41 = vector.shape_cast %40 : vector<1x1x4x128xbf16> to vector<4x128xbf16>
    %cst_50 = arith.constant dense<0.000000e+00> : vector<256x128xf32>
    %42 = tpu.matmul %39, %41, %cst_50 {dimension_numbers = #tpu.dot_dimension_numbers<[1], [0], [0], [1], [0, 0, 1, 1], [], []>} : vector<256x4xbf16>, vector<4x128xbf16>, vector<256x128xf32> -> vector<256x128xf32>
    %43 = arith.addf %36, %42 : vector<256x128xf32>
    %c0_51 = arith.constant 0 : index
    %c2_52 = arith.constant 2 : index
    %c0_53 = arith.constant 0 : index
    %c0_54 = arith.constant 0 : index
    %44 = vector.load %arg3[%c0_51, %c2_52, %c0_53, %c0_54] : memref<1x18x18x4xbf16, #tpu.memory_space<vmem>>, vector<1x16x16x4xbf16>
    %45 = vector.shape_cast %44 : vector<1x16x16x4xbf16> to vector<16x16x4xbf16>
    %46 = vector.shape_cast %45 : vector<16x16x4xbf16> to vector<256x4xbf16>
    %c2_55 = arith.constant 2 : index
    %c0_56 = arith.constant 0 : index
    %c0_57 = arith.constant 0 : index
    %c0_58 = arith.constant 0 : index
    %47 = vector.load %arg4[%c2_55, %c0_56, %c0_57, %c0_58] : memref<3x3x4x128xbf16, #tpu.memory_space<vmem>>, vector<1x1x4x128xbf16>
    %48 = vector.shape_cast %47 : vector<1x1x4x128xbf16> to vector<4x128xbf16>
    %cst_59 = arith.constant dense<0.000000e+00> : vector<256x128xf32>
    %49 = tpu.matmul %46, %48, %cst_59 {dimension_numbers = #tpu.dot_dimension_numbers<[1], [0], [0], [1], [0, 0, 1, 1], [], []>} : vector<256x4xbf16>, vector<4x128xbf16>, vector<256x128xf32> -> vector<256x128xf32>
    %50 = arith.addf %43, %49 : vector<256x128xf32>
    %c0_60 = arith.constant 0 : index
    %c2_61 = arith.constant 2 : index
    %c1_62 = arith.constant 1 : index
    %c0_63 = arith.constant 0 : index
    %51 = vector.load %arg3[%c0_60, %c2_61, %c1_62, %c0_63] : memref<1x18x18x4xbf16, #tpu.memory_space<vmem>>, vector<1x16x16x4xbf16>
    %52 = vector.shape_cast %51 : vector<1x16x16x4xbf16> to vector<16x16x4xbf16>
    %53 = vector.shape_cast %52 : vector<16x16x4xbf16> to vector<256x4xbf16>
    %c2_64 = arith.constant 2 : index
    %c1_65 = arith.constant 1 : index
    %c0_66 = arith.constant 0 : index
    %c0_67 = arith.constant 0 : index
    %54 = vector.load %arg4[%c2_64, %c1_65, %c0_66, %c0_67] : memref<3x3x4x128xbf16, #tpu.memory_space<vmem>>, vector<1x1x4x128xbf16>
    %55 = vector.shape_cast %54 : vector<1x1x4x128xbf16> to vector<4x128xbf16>
    %cst_68 = arith.constant dense<0.000000e+00> : vector<256x128xf32>
    %56 = tpu.matmul %53, %55, %cst_68 {dimension_numbers = #tpu.dot_dimension_numbers<[1], [0], [0], [1], [0, 0, 1, 1], [], []>} : vector<256x4xbf16>, vector<4x128xbf16>, vector<256x128xf32> -> vector<256x128xf32>
    %57 = arith.addf %50, %56 : vector<256x128xf32>
    %c0_69 = arith.constant 0 : index
    %c2_70 = arith.constant 2 : index
    %c2_71 = arith.constant 2 : index
    %c0_72 = arith.constant 0 : index
    %58 = vector.load %arg3[%c0_69, %c2_70, %c2_71, %c0_72] : memref<1x18x18x4xbf16, #tpu.memory_space<vmem>>, vector<1x16x16x4xbf16>
    %59 = vector.shape_cast %58 : vector<1x16x16x4xbf16> to vector<16x16x4xbf16>
    %60 = vector.shape_cast %59 : vector<16x16x4xbf16> to vector<256x4xbf16>
    %c2_73 = arith.constant 2 : index
    %c2_74 = arith.constant 2 : index
    %c0_75 = arith.constant 0 : index
    %c0_76 = arith.constant 0 : index
    %61 = vector.load %arg4[%c2_73, %c2_74, %c0_75, %c0_76] : memref<3x3x4x128xbf16, #tpu.memory_space<vmem>>, vector<1x1x4x128xbf16>
    %62 = vector.shape_cast %61 : vector<1x1x4x128xbf16> to vector<4x128xbf16>
    %cst_77 = arith.constant dense<0.000000e+00> : vector<256x128xf32>
    %63 = tpu.matmul %60, %62, %cst_77 {dimension_numbers = #tpu.dot_dimension_numbers<[1], [0], [0], [1], [0, 0, 1, 1], [], []>} : vector<256x4xbf16>, vector<4x128xbf16>, vector<256x128xf32> -> vector<256x128xf32>
    %64 = arith.addf %57, %63 : vector<256x128xf32>
    %c0_78 = arith.constant 0 : index
    %c0_79 = arith.constant 0 : index
    %65 = vector.load %arg8[%c0_78, %c0_79] : memref<256x128xf32, #tpu.memory_space<vmem>>, vector<256x128xf32>
    %66 = arith.addf %65, %64 : vector<256x128xf32>
    %c0_80 = arith.constant 0 : index
    %c0_81 = arith.constant 0 : index
    %67 = vector.load %arg8[%c0_80, %c0_81] : memref<256x128xf32, #tpu.memory_space<vmem>>, vector<256x128xf32>
    tpu.vector_store %arg8[%c0_80, %c0_81], %66 {strides = array<i32>} : memref<256x128xf32, #tpu.memory_space<vmem>>, vector<256x128xf32>,
    %c0_i32_82 = arith.constant 0 : i32
    %68 = arith.cmpi eq, %arg2, %c0_i32_82 : i32
    %69 = arith.extui %68 : i1 to i32
    %c0_i32_83 = arith.constant 0 : i32
    %70 = arith.cmpi ne, %69, %c0_i32_83 : i32
    scf.if %70 {
      %c0_84 = arith.constant 0 : index
      %c0_85 = arith.constant 0 : index
      %71 = vector.load %arg8[%c0_84, %c0_85] : memref<256x128xf32, #tpu.memory_space<vmem>>, vector<256x128xf32>
      %c0_86 = arith.constant 0 : index
      %c0_87 = arith.constant 0 : index
      %72 = vector.load %arg5[%c0_86, %c0_87] : memref<1x128xf32, #tpu.memory_space<vmem>>, vector<1x128xf32>
      %73 = vector.broadcast %72 : vector<1x128xf32> to vector<256x128xf32>
      %74 = arith.mulf %71, %73 : vector<256x128xf32>
      %c0_88 = arith.constant 0 : index
      %c0_89 = arith.constant 0 : index
      %75 = vector.load %arg6[%c0_88, %c0_89] : memref<1x128xf32, #tpu.memory_space<vmem>>, vector<1x128xf32>
      %76 = vector.broadcast %75 : vector<1x128xf32> to vector<256x128xf32>
      %77 = arith.addf %74, %76 : vector<256x128xf32>
      %cst_90 = arith.constant 0.000000e+00 : f32
      %78 = vector.broadcast %cst_90 : f32 to vector<256x128xf32>
      %79 = arith.cmpf ogt, %77, %78 : vector<256x128xf32>
      %cst_91 = arith.constant 1.000000e-01 : f32
      %80 = vector.broadcast %cst_91 : f32 to vector<256x128xf32>
      %81 = arith.mulf %80, %77 : vector<256x128xf32>
      %82 = arith.select %79, %77, %81 : vector<256x128xi1>, vector<256x128xf32>
      %83 = arith.truncf %82 : vector<256x128xf32> to vector<256x128xbf16>
      %c0_92 = arith.constant 0 : index
      %c0_93 = arith.constant 0 : index
      %c0_94 = arith.constant 0 : index
      %84 = vector.load %arg7[%c0_92, %c0_93, %c0_94] : memref<1x256x128xbf16, #tpu.memory_space<vmem>>, vector<1x256x128xbf16>
      %85 = vector.shape_cast %84 : vector<1x256x128xbf16> to vector<256x128xbf16>
      %86 = vector.shape_cast %83 : vector<256x128xbf16> to vector<1x256x128xbf16>
      tpu.vector_store %arg7[%c0_92, %c0_93, %c0_94], %86 {strides = array<i32>} : memref<1x256x128xbf16, #tpu.memory_space<vmem>>, vector<1x256x128xbf16>,
    } else {
    }
    return
  }
  func.func @transform_0(%arg0: i32, %arg1: i32, %arg2: i32) -> (i32, i32, i32, i32) {
    %c0_i32 = arith.constant 0 : i32
    %c0_i32_0 = arith.constant 0 : i32
    %c0_i32_1 = arith.constant 0 : i32
    return %arg0, %c0_i32, %c0_i32_0, %arg2 : i32, i32, i32, i32
  }
  func.func @transform_1(%arg0: i32, %arg1: i32, %arg2: i32) -> (i32, i32, i32, i32) {
    %c0_i32 = arith.constant 0 : i32
    %c0_i32_0 = arith.constant 0 : i32
    %c0_i32_1 = arith.constant 0 : i32
    return %c0_i32, %c0_i32_0, %arg2, %arg1 : i32, i32, i32, i32
  }
  func.func @transform_2(%arg0: i32, %arg1: i32, %arg2: i32) -> (i32, i32) {
    %c0_i32 = arith.constant 0 : i32
    %c0_i32_0 = arith.constant 0 : i32
    return %c0_i32, %arg1 : i32, i32
  }
  func.func @transform_3(%arg0: i32, %arg1: i32, %arg2: i32) -> (i32, i32) {
    %c0_i32 = arith.constant 0 : i32
    %c0_i32_0 = arith.constant 0 : i32
    return %c0_i32, %arg1 : i32, i32
  }
  func.func @transform_4(%arg0: i32, %arg1: i32, %arg2: i32) -> (i32, i32, i32) {
    %c0_i32 = arith.constant 0 : i32
    %c0_i32_0 = arith.constant 0 : i32
    return %arg0, %c0_i32, %arg1 : i32, i32, i32
  }
}

</mosaic_0001>

<llo_original>
// kernel: conv_block_forward.1
$region0: #{conv_block_forward.1}
  #allocation0 [shape = 'u32[]', space=smem, size = 0x4, offset = 0x4, fixed_abs, tag = 'smem constant byte address 0x4 - core index']
  #allocation1 [shape = 'u32[144,128]{1,0:T(1,128)}', space=vmem, size = 0x12000, scoped, tag = 'internal scratch']
  #allocation2 [shape = 'f32[256,128]{1,0:T(8,128)}', space=vmem, size = 0x20000, scoped, tag = 'scratch operand']
  %s0 = inlined_call_operand.vmem [shape: bf16[2,18,18,4], index: 0, kind: input, shape index: {}]
  %s1 = inlined_call_operand.vmem [shape: bf16[3,3,4,128], index: 1, kind: input, shape index: {}]
  %s2 = inlined_call_operand.vmem [shape: f32[1,128], index: 2, kind: input, shape index: {}]
  %s3 = inlined_call_operand.vmem [shape: f32[1,128], index: 3, kind: input, shape index: {}]
  %s4 = inlined_call_operand.vmem [shape: bf16[2,256,128], index: 4, kind: output, shape index: {}]
  %s5 = sld [smem:[#allocation0]]
  $region57: #{conv_block_forward.1} parent=0
    _
  %s7 = ssub.s32 1, %s5
  %s8 = scalar_select 0, %s7, %s5
  loop: start=0, step=1, limit=4
  $region2: #{conv_block_forward.1} parent=0 // loop_pre_header
    _
  $region3: #{conv_block_forward.1} parent=0 // loop_header
    %s10 = sphi 0, %s14
    %p11 = scmp.ge.s32.totalorder %s10, 4
    %s17 = sphi 0, %s36
    %s18 = sphi 0, %s32
    %s19 = sphi 0, %s28
    %s20 = sphi 0, %s17
    %s21 = sphi 0, %s18
    %s22 = sphi 0, %s19
    %s23 = sphi 0, %s20
    %s24 = sphi 0, %s21
    %s25 = sphi 0, %s22
    %s41 = sphi 0, %s43
    %s44 = sphi 0, %s41
    %s45 = sphi 0, %s44
    %s61 = sphi 0, %s45
    %s69 = sphi 0, %s71
    %s72 = sphi 0, %s69
    %s73 = sphi 0, %s72
    %s89 = sphi 0, %s73
    %s95 = sphi 0, %s97
    %s98 = sphi 0, %s95
    %s99 = sphi 0, %s98
    %s115 = sphi 0, %s99
    %s121 = sphi 0, %s123
    %s124 = sphi 0, %s121
    %s125 = sphi 0, %s124
    %s141 = sphi 0, %s125
    %s149 = sphi 0, %s151
    %s152 = sphi 0, %s149
    %s153 = sphi 0, %s152
    %s169 = sphi 0, %s153
  $region4: #{conv_block_forward.1} parent=0 // loop_header_branch
    %13 = sbr.rel (%p11) target = $region8
  $region5: #{conv_block_forward.1} parent=0 // loop_body
    %s15 = ssub.s32 %s10, 1
    %s16 = ssub.s32 %s10, 2
    %s26 = sadd.s32 1, %s19
    %p27 = scmp.ge.s32.totalorder %s26, 1
    %s28 = scalar_select %p27, 0, %s26
    %s29 = sadd.s32 1, %s18
    %s30 = scalar_select %p27, %s29, %s18
    %p31 = scmp.ge.s32.totalorder %s30, 1
    %s32 = scalar_select %p31, 0, %s30
    %s33 = sadd.s32 1, %s17
    %s34 = scalar_select %p31, %s33, %s17
    %p35 = scmp.ge.s32.totalorder %s34, 2
    %s36 = scalar_select %p35, 0, %s34
    %s37 = ssub.s32 %s17, %s36
    %s38 = ssub.s32 %s19, %s28
    %s39 = sor.u32 %s37, %s38
    %p40 = scmp.eq.s32.totalorder %s39, 0
    %s42 = sadd.s32 %s41, 1
    %s43 = scalar_select %p40, %s41, %s42
    %p46 = pneg %p40
    %p47 = scmp.eq.s32.totalorder %s10, 1
    %p48 = por %p46, %p47
    %p49 = scmp.ne.s32.totalorder %s41, %s44
    %p50 = scmp.eq.s32.totalorder %s10, 0
    %p51 = por %p49, %p50
    %p52 = scmp.ne.s32.totalorder %s41, %s44
    %p53 = scmp.eq.s32.totalorder %s15, 1
    %p54 = por %p52, %p53
    %p55 = scmp.ne.s32.totalorder %s44, %s45
    %p56 = scmp.eq.s32.totalorder %s15, 0
    %p57 = por %p55, %p56
    %p58 = scmp.ne.s32.totalorder %s44, %s45
    %p59 = scmp.eq.s32.totalorder %s16, 1
    %p60 = por %p58, %p59
    %p62 = scmp.ne.s32.totalorder %s45, %s61
    %p63 = scmp.eq.s32.totalorder %s16, 0
    %p64 = por %p62, %p63
    %s65 = ssub.s32 %s19, %s28
    %s66 = ssub.s32 %s18, %s32
    %s67 = sor.u32 %s65, %s66
    %p68 = scmp.eq.s32.totalorder %s67, 0
    %s70 = sadd.s32 %s69, 1
    %s71 = scalar_select %p68, %s69, %s70
    %p74 = pneg %p68
    %p75 = scmp.eq.s32.totalorder %s10, 1
    %p76 = por %p74, %p75
    %p77 = scmp.ne.s32.totalorder %s69, %s72
    %p78 = scmp.eq.s32.totalorder %s10, 0
    %p79 = por %p77, %p78
    %p80 = scmp.ne.s32.totalorder %s69, %s72
    %p81 = scmp.eq.s32.totalorder %s15, 1
    %p82 = por %p80, %p81
    %p83 = scmp.ne.s32.totalorder %s72, %s73
    %p84 = scmp.eq.s32.totalorder %s15, 0
    %p85 = por %p83, %p84
    %p86 = scmp.ne.s32.totalorder %s72, %s73
    %p87 = scmp.eq.s32.totalorder %s16, 1
    %p88 = por %p86, %p87
    %p90 = scmp.ne.s32.totalorder %s73, %s89
    %p91 = scmp.eq.s32.totalorder %s16, 0
    %p92 = por %p90, %p91
    %s93 = ssub.s32 %s18, %s32
    %p94 = scmp.eq.s32.totalorder %s93, 0
    %s96 = sadd.s32 %s95, 1
    %s97 = scalar_select %p94, %s95, %s96
    %p100 = pneg %p94
    %p101 = scmp.eq.s32.totalorder %s10, 1
    %p102 = por %p100, %p101
    %p103 = scmp.ne.s32.totalorder %s95, %s98
    %p104 = scmp.eq.s32.totalorder %s10, 0
    %p105 = por %p103, %p104
    %p106 = scmp.ne.s32.totalorder %s95, %s98
    %p107 = scmp.eq.s32.totalorder %s15, 1
    %p108 = por %p106, %p107
    %p109 = scmp.ne.s32.totalorder %s98, %s99
    %p110 = scmp.eq.s32.totalorder %s15, 0
    %p111 = por %p109, %p110
    %p112 = scmp.ne.s32.totalorder %s98, %s99
    %p113 = scmp.eq.s32.totalorder %s16, 1
    %p114 = por %p112, %p113
    %p116 = scmp.ne.s32.totalorder %s99, %s115
    %p117 = scmp.eq.s32.totalorder %s16, 0
    %p118 = por %p116, %p117
    %s119 = ssub.s32 %s18, %s32
    %p120 = scmp.eq.s32.totalorder %s119, 0
    %s122 = sadd.s32 %s121, 1
    %s123 = scalar_select %p120, %s121, %s122
    %p126 = pneg %p120
    %p127 = scmp.eq.s32.totalorder %s10, 1
    %p128 = por %p126, %p127
    %p129 = scmp.ne.s32.totalorder %s121, %s124
    %p130 = scmp.eq.s32.totalorder %s10, 0
    %p131 = por %p129, %p130
    %p132 = scmp.ne.s32.totalorder %s121, %s124
    %p133 = scmp.eq.s32.totalorder %s15, 1
    %p134 = por %p132, %p133
    %p135 = scmp.ne.s32.totalorder %s124, %s125
    %p136 = scmp.eq.s32.totalorder %s15, 0
    %p137 = por %p135, %p136
    %p138 = scmp.ne.s32.totalorder %s124, %s125
    %p139 = scmp.eq.s32.totalorder %s16, 1
    %p140 = por %p138, %p139
    %p142 = scmp.ne.s32.totalorder %s125, %s141
    %p143 = scmp.eq.s32.totalorder %s16, 0
    %p144 = por %p142, %p143
    %s145 = ssub.s32 %s17, %s36
    %s146 = ssub.s32 %s18, %s32
    %s147 = sor.u32 %s145, %s146
    %p148 = scmp.eq.s32.totalorder %s147, 0
    %s150 = sadd.s32 %s149, 1
    %s151 = scalar_select %p148, %s149, %s150
    %p154 = pneg %p148
    %p155 = scmp.eq.s32.totalorder %s10, 1
    %p156 = por %p154, %p155
    %p157 = scmp.ne.s32.totalorder %s149, %s152
    %p158 = scmp.eq.s32.totalorder %s10, 0
    %p159 = por %p157, %p158
    %p160 = scmp.ne.s32.totalorder %s149, %s152
    %p161 = scmp.eq.s32.totalorder %s15, 1
    %p162 = por %p160, %p161
    %p163 = scmp.ne.s32.totalorder %s152, %s153
    %p164 = scmp.eq.s32.totalorder %s15, 0
    %p165 = por %p163, %p164
    %p166 = scmp.ne.s32.totalorder %s152, %s153
    %p167 = scmp.eq.s32.totalorder %s16, 1
    %p168 = por %p166, %p167
    %p170 = scmp.ne.s32.totalorder %s153, %s169
    %p171 = scmp.eq.s32.totalorder %s16, 0
    %p172 = por %p170, %p171
    %p173 = scmp.le.s32.totalorder 1, %s10
    %p174 = scmp.lt.s32.totalorder %s10, 3
    %p175 = pnand %p173, %p174
    %p176 = pneg %p175
    // Predicated region
    $region9: #{conv_block_forward.1} parent=5 // pred_check
      _
    $region10: #{conv_block_forward.1} parent=5 // pred_check_branch
      %178 = sbr.rel (%p175) target = $region12
    $region11: #{conv_block_forward.1} parent=5 // pred_region
      %s179 = ssub.s32 %s10, 1
      // Predicated region
      $region13: #{conv_block_forward.1} parent=11 // pred_check
        %p180 = pneg %p85
      $region14: #{conv_block_forward.1} parent=11 // pred_check_branch
        %182 = sbr.rel (%p180) target = $region16
      $region15: #{conv_block_forward.1} parent=11 // pred_region
        %p183 = scmp.lt.s32.totalorder %s22, 0
        %s184 = scalar_select %p183, %s22, 0
        %p185 = scmp.lt.s32.totalorder %s21, 0
        %s186 = scalar_select %p185, %s21, 0
        %s187 = sadd.s32 %s186, %s184
        %s188 = smul.addr %s187, 2
        %s189 = scalar_lea.vmem %s1, %s188
      $region16: #{conv_block_forward.1} parent=11 // pred_fallthru
        _
      // Predicated region
      $region17: #{conv_block_forward.1} parent=11 // pred_check
        %p190 = pneg %p111
      $region18: #{conv_block_forward.1} parent=11 // pred_check_branch
        %192 = sbr.rel (%p190) target = $region20
      $region19: #{conv_block_forward.1} parent=11 // pred_region
        %p193 = scmp.lt.s32.totalorder %s21, 0
        %s194 = scalar_select %p193, %s21, 0
        %s195 = scalar_lea.vmem %s2, %s194
      $region20: #{conv_block_forward.1} parent=11 // pred_fallthru
        _
      // Predicated region
      $region21: #{conv_block_forward.1} parent=11 // pred_check
        %p196 = pneg %p137
      $region22: #{conv_block_forward.1} parent=11 // pred_check_branch
        %198 = sbr.rel (%p196) target = $region24
      $region23: #{conv_block_forward.1} parent=11 // pred_region
        %p199 = scmp.lt.s32.totalorder %s21, 0
        %s200 = scalar_select %p199, %s21, 0
        %s201 = scalar_lea.vmem %s3, %s200
      $region24: #{conv_block_forward.1} parent=11 // pred_fallthru
        _
    $region12: #{conv_block_forward.1} parent=5 // pred_fallthru
      _
    %p202 = scmp.lt.s32.totalorder %s10, 2
    // Predicated region
    $region25: #{conv_block_forward.1} parent=5 // pred_check
      %p203 = pneg %p202
    $region26: #{conv_block_forward.1} parent=5 // pred_check_branch
      %205 = sbr.rel (%p203) target = $region28
    $region27: #{conv_block_forward.1} parent=5 // pred_region
      // Predicated region
      $region29: #{conv_block_forward.1} parent=27 // pred_check
        %p206 = pneg %p51
      $region30: #{conv_block_forward.1} parent=27 // pred_check_branch
        %208 = sbr.rel (%p206) target = $region32
      $region31: #{conv_block_forward.1} parent=27 // pred_region
        %p209 = scmp.lt.s32.totalorder %s17, 1
        %s210 = scalar_select %p209, %s17, 1
        %p211 = scmp.lt.s32.totalorder %s19, 0
        %s212 = scalar_select %p211, %s19, 0
        %s213 = smul.addr %s210, 54
        %s214 = sadd.s32 %s212, %s213
        %s215 = smul.addr %s214, 4
        %s216 = scalar_lea.vmem %s0, %s215
      $region32: #{conv_block_forward.1} parent=27 // pred_fallthru
        _
    $region28: #{conv_block_forward.1} parent=5 // pred_fallthru
      _
    %p217 = scmp.le.s32.totalorder 1, %s10
    %p218 = scmp.lt.s32.totalorder %s10, 3
    %p219 = pnand %p217, %p218
    %p220 = pneg %p219
    // Predicated region
    $region33: #{conv_block_forward.1} parent=5 // pred_check
      _
    $region34: #{conv_block_forward.1} parent=5 // pred_check_branch
      %222 = sbr.rel (%p219) target = $region36
    $region35: #{conv_block_forward.1} parent=5 // pred_region
      %s223 = ssub.s32 %s10, 1
      %p224 = scmp.lt.s32.totalorder %s20, 1
      %s225 = scalar_select %p224, %s20, 1
      %p226 = scmp.lt.s32.totalorder %s22, 0
      %s227 = scalar_select %p226, %s22, 0
      %s228 = smul.addr %s225, 54
      %s229 = sadd.s32 %s227, %s228
      %s230 = smul.addr %s229, 4
      %s231 = scalar_lea.vmem %s0, %s230
      %p232 = pneg %p57
      %p233 = pneg %p54
      %p234 = scmp.lt.s32.totalorder %s22, 0
      %s235 = scalar_select %p234, %s22, 0
      %p236 = scmp.lt.s32.totalorder %s21, 0
      %s237 = scalar_select %p236, %s21, 0
      %s238 = sadd.s32 %s237, %s235
      %s239 = smul.addr %s238, 2
      %s240 = scalar_lea.vmem %s1, %s239
      %p241 = pneg %p85
      %p242 = pneg %p82
      %p243 = scmp.lt.s32.totalorder %s21, 0
      %s244 = scalar_select %p243, %s21, 0
      %s245 = scalar_lea.vmem %s2, %s244
      %p246 = pneg %p111
      %p247 = pneg %p108
      %p248 = scmp.lt.s32.totalorder %s21, 0
      %s249 = scalar_select %p248, %s21, 0
      %s250 = scalar_lea.vmem %s3, %s249
      %p251 = pneg %p137
      %p252 = pneg %p134
      %p253 = pneg %p165
      %p254 = pneg %p162
      %p255 = scmp.lt.s32.totalorder %s20, 1
      %s256 = scalar_select %p255, %s20, 1
      %p257 = scmp.lt.s32.totalorder %s21, 0
      %s258 = scalar_select %p257, %s21, 0
      %s259 = smul.addr %s256, 32
      %s260 = sadd.s32 %s258, %s259
      %s261 = smul.addr %s260, 4
      %s262 = scalar_lea.vmem %s4, %s261
      %p263 = scmp.lt.s32.totalorder %s20, 1
      %s264 = scalar_select %p263, %s20, 1
      %p265 = scmp.lt.s32.totalorder %s22, 0
      %s266 = scalar_select %p265, %s22, 0
      %s267 = smul.addr %s264, 54
      %s268 = sadd.s32 %s266, %s267
      %s269 = smul.addr %s268, 4
      %s270 = scalar_lea.vmem %s0, %s269
      %p271 = scmp.lt.s32.totalorder %s22, 0
      %s272 = scalar_select %p271, %s22, 0
      %p273 = scmp.lt.s32.totalorder %s21, 0
      %s274 = scalar_select %p273, %s21, 0
      %s275 = sadd.s32 %s274, %s272
      %s276 = smul.addr %s275, 2
      %s277 = scalar_lea.vmem %s1, %s276
      %p278 = scmp.lt.s32.totalorder %s21, 0
      %s279 = scalar_select %p278, %s21, 0
      %s280 = scalar_lea.vmem %s2, %s279
      %p281 = scmp.lt.s32.totalorder %s21, 0
      %s282 = scalar_select %p281, %s21, 0
      %s283 = scalar_lea.vmem %s3, %s282
      %p284 = scmp.lt.s32.totalorder %s20, 1
      %s285 = scalar_select %p284, %s20, 1
      %p286 = scmp.lt.s32.totalorder %s21, 0
      %s287 = scalar_select %p286, %s21, 0
      %s288 = smul.addr %s285, 32
      %s289 = sadd.s32 %s287, %s288
      %s290 = smul.addr %s289, 4
      %s291 = scalar_lea.vmem %s4, %s290
      %p293 = scmp.eq.s32.totalorder %s22, 0
      // Predicated region
      $region37: #{conv_block_forward.1} parent=35 // pred_check
        %p294 = pneg %p293
      $region38: #{conv_block_forward.1} parent=35 // pred_check_branch
        %296 = sbr.rel (%p294) target = $region40
      $region39: #{conv_block_forward.1} parent=35 // pred_region
        %297 = vst [vmem:[#allocation2] sm:$0xff] 0.0
        %298 = vst [vmem:[#allocation2 + $0x8] sm:$0xff] 0.0
        %299 = vst [vmem:[#allocation2 + $0x10] sm:$0xff] 0.0
        %300 = vst [vmem:[#allocation2 + $0x18] sm:$0xff] 0.0
        %301 = vst [vmem:[#allocation2 + $0x20] sm:$0xff] 0.0
        %302 = vst [vmem:[#allocation2 + $0x28] sm:$0xff] 0.0
        %303 = vst [vmem:[#allocation2 + $0x30] sm:$0xff] 0.0
        %304 = vst [vmem:[#allocation2 + $0x38] sm:$0xff] 0.0
        %305 = vst [vmem:[#allocation2 + $0x40] sm:$0xff] 0.0
        %306 = vst [vmem:[#allocation2 + $0x48] sm:$0xff] 0.0
        %307 = vst [vmem:[#allocation2 + $0x50] sm:$0xff] 0.0
        %308 = vst [vmem:[#allocation2 + $0x58] sm:$0xff] 0.0
        %309 = vst [vmem:[#allocation2 + $0x60] sm:$0xff] 0.0
        %310 = vst [vmem:[#allocation2 + $0x68] sm:$0xff] 0.0
        %311 = vst [vmem:[#allocation2 + $0x70] sm:$0xff] 0.0
        %312 = vst [vmem:[#allocation2 + $0x78] sm:$0xff] 0.0
        %313 = vst [vmem:[#allocation2 + $0x80] sm:$0xff] 0.0
        %314 = vst [vmem:[#allocation2 + $0x88] sm:$0xff] 0.0
        %315 = vst [vmem:[#allocation2 + $0x90] sm:$0xff] 0.0
        %316 = vst [vmem:[#allocation2 + $0x98] sm:$0xff] 0.0
        %317 = vst [vmem:[#allocation2 + $0xa0] sm:$0xff] 0.0
        %318 = vst [vmem:[#allocation2 + $0xa8] sm:$0xff] 0.0
        %319 = vst [vmem:[#allocation2 + $0xb0] sm:$0xff] 0.0
        %320 = vst [vmem:[#allocation2 + $0xb8] sm:$0xff] 0.0
        %321 = vst [vmem:[#allocation2 + $0xc0] sm:$0xff] 0.0
        %322 = vst [vmem:[#allocation2 + $0xc8] sm:$0xff] 0.0
        %323 = vst [vmem:[#allocation2 + $0xd0] sm:$0xff] 0.0
        %324 = vst [vmem:[#allocation2 + $0xd8] sm:$0xff] 0.0
        %325 = vst [vmem:[#allocation2 + $0xe0] sm:$0xff] 0.0
        %326 = vst [vmem:[#allocation2 + $0xe8] sm:$0xff] 0.0
        %327 = vst [vmem:[#allocation2 + $0xf0] sm:$0xff] 0.0
        %328 = vst [vmem:[#allocation2 + $0xf8] sm:$0xff] 0.0
      $region40: #{conv_block_forward.1} parent=35 // pred_fallthru
        _
      %v329 = vld [vmem:[%s270] sm:$0xf]
      %v330 = vld [vmem:[%s270 + $0x4] sm:$0xf]
      %v331 = vld [vmem:[%s270 + $0xc] sm:$0xf]
      %v332 = vld [vmem:[%s270 + $0x10] sm:$0xf]
      %v333 = vld [vmem:[%s270 + $0x18] sm:$0xf]
      %v334 = vld [vmem:[%s270 + $0x1c] sm:$0xf]
      %v335 = vld [vmem:[%s270 + $0x24] sm:$0xf]
      %v336 = vld [vmem:[%s270 + $0x28] sm:$0xf]
      %v337 = vld [vmem:[%s270 + $0x30] sm:$0xf]
      %v338 = vld [vmem:[%s270 + $0x34] sm:$0xf]
      %v339 = vld [vmem:[%s270 + $0x3c] sm:$0xf]
      %v340 = vld [vmem:[%s270 + $0x40] sm:$0xf]
      %v341 = vld [vmem:[%s270 + $0x48] sm:$0xf]
      %v342 = vld [vmem:[%s270 + $0x4c] sm:$0xf]
      %v343 = vld [vmem:[%s270 + $0x54] sm:$0xf]
      %v344 = vld [vmem:[%s270 + $0x58] sm:$0xf]
      %v345 = vld [vmem:[%s270 + $0x60] sm:$0xf]
      %v346 = vld [vmem:[%s270 + $0x64] sm:$0xf]
      %v347 = vld [vmem:[%s270 + $0x6c] sm:$0xf]
      %v348 = vld [vmem:[%s270 + $0x70] sm:$0xf]
      %v349 = vld [vmem:[%s270 + $0x78] sm:$0xf]
      %v350 = vld [vmem:[%s270 + $0x7c] sm:$0xf]
      %v351 = vld [vmem:[%s270 + $0x84] sm:$0xf]
      %v352 = vld [vmem:[%s270 + $0x88] sm:$0xf]
      %v353 = vld [vmem:[%s270 + $0x90] sm:$0xf]
      %v354 = vld [vmem:[%s270 + $0x94] sm:$0xf]
      %v355 = vld [vmem:[%s270 + $0x9c] sm:$0xf]
      %v356 = vld [vmem:[%s270 + $0xa0] sm:$0xf]
      %v357 = vld [vmem:[%s270 + $0xa8] sm:$0xf]
      %v358 = vld [vmem:[%s270 + $0xac] sm:$0xf]
      %v359 = vld [vmem:[%s270 + $0xb4] sm:$0xf]
      %v360 = vld [vmem:[%s270 + $0xb8] sm:$0xf]
      %v361 = vld [vmem:[%s277] sm:$0x3]
      %v362 = vld [vmem:[%s270 + $0x8] sm:$0x1]
      %v363 = vld [vmem:[%s270 + $0x14] sm:$0x1]
      %v364 = vld [vmem:[%s270 + $0x20] sm:$0x1]
      %v365 = vld [vmem:[%s270 + $0x2c] sm:$0x1]
      %v366 = vld [vmem:[%s270 + $0x38] sm:$0x1]
      %v367 = vld [vmem:[%s270 + $0x44] sm:$0x1]
      %v368 = vld [vmem:[%s270 + $0x50] sm:$0x1]
      %v369 = vld [vmem:[%s270 + $0x5c] sm:$0x1]
      %v370 = vld [vmem:[%s270 + $0x68] sm:$0x1]
      %v371 = vld [vmem:[%s270 + $0x74] sm:$0x1]
      %v372 = vld [vmem:[%s270 + $0x80] sm:$0x1]
      %v373 = vld [vmem:[%s270 + $0x8c] sm:$0x1]
      %v374 = vld [vmem:[%s270 + $0x98] sm:$0x1]
      %v375 = vld [vmem:[%s270 + $0xa4] sm:$0x1]
      %v376 = vld [vmem:[%s270 + $0xb0] sm:$0x1]
      %v377 = vld [vmem:[%s270 + $0xbc] sm:$0x1]
      %vm378 = vsmask.f32 3328
      %vm379 = vsmask.f32 7440
      %vm380 = vmor %vm378, %vm379
      %v382 = vshrl.u32 %v329, 16
      %v384 = vrot.slane %v382, 4
      %v385 = vshll.u32 %v329, 16
      %v387 = vrot.slane %v385, 5
      %v388 = vor.u32 %v384, %v387
      %v389 = vrot.slane %v388, 4
      %v391 = vshll.u32 %v330, 16
      %v393 = vrot.slane %v391, 5
      %v394 = vsel %vm380, %v389, %v393
      %v395 = vshrl.u32 %v330, 16
      %v397 = vrot.slane %v395, 4
      %v398 = vor.u32 %v397, %v393
      %v399 = vrot.slane %v398, 4
      %v401 = vshll.u32 %v362, 16
      %v403 = vrot.slane %v401, 5
      %v404 = vsel %vm380, %v399, %v403
      %v406 = vshrl.u32 %v331, 16
      %v408 = vrot.slane %v406, 4
      %v409 = vshll.u32 %v331, 16
      %v411 = vrot.slane %v409, 5
      %v412 = vor.u32 %v408, %v411
      %v413 = vrot.slane %v412, 4
      %v415 = vshll.u32 %v332, 16
      %v417 = vrot.slane %v415, 5
      %v418 = vsel %vm380, %v413, %v417
      %v419 = vshrl.u32 %v332, 16
      %v421 = vrot.slane %v419, 4
      %v422 = vor.u32 %v421, %v417
      %v423 = vrot.slane %v422, 4
      %v425 = vshll.u32 %v363, 16
      %v427 = vrot.slane %v425, 5
      %v428 = vsel %vm380, %v423, %v427
      %v430 = vshrl.u32 %v333, 16
      %v432 = vrot.slane %v430, 4
      %v433 = vshll.u32 %v333, 16
      %v435 = vrot.slane %v433, 5
      %v436 = vor.u32 %v432, %v435
      %v437 = vrot.slane %v436, 4
      %v439 = vshll.u32 %v334, 16
      %v441 = vrot.slane %v439, 5
      %v442 = vsel %vm380, %v437, %v441
      %v443 = vshrl.u32 %v334, 16
      %v445 = vrot.slane %v443, 4
      %v446 = vor.u32 %v445, %v441
      %v447 = vrot.slane %v446, 4
      %v449 = vshll.u32 %v364, 16
      %v451 = vrot.slane %v449, 5
      %v452 = vsel %vm380, %v447, %v451
      %v454 = vshrl.u32 %v335, 16
      %v456 = vrot.slane %v454, 4
      %v457 = vshll.u32 %v335, 16
      %v459 = vrot.slane %v457, 5
      %v460 = vor.u32 %v456, %v459
      %v461 = vrot.slane %v460, 4
      %v463 = vshll.u32 %v336, 16
      %v465 = vrot.slane %v463, 5
      %v466 = vsel %vm380, %v461, %v465
      %v467 = vshrl.u32 %v336, 16
      %v469 = vrot.slane %v467, 4
      %v470 = vor.u32 %v469, %v465
      %v471 = vrot.slane %v470, 4
      %v473 = vshll.u32 %v365, 16
      %v475 = vrot.slane %v473, 5
      %v476 = vsel %vm380, %v471, %v475
      %v478 = vshrl.u32 %v337, 16
      %v480 = vrot.slane %v478, 4
      %v481 = vshll.u32 %v337, 16
      %v483 = vrot.slane %v481, 5
      %v484 = vor.u32 %v480, %v483
      %v485 = vrot.slane %v484, 4
      %v487 = vshll.u32 %v338, 16
      %v489 = vrot.slane %v487, 5
      %v490 = vsel %vm380, %v485, %v489
      %v491 = vshrl.u32 %v338, 16
      %v493 = vrot.slane %v491, 4
      %v494 = vor.u32 %v493, %v489
      %v495 = vrot.slane %v494, 4
      %v497 = vshll.u32 %v366, 16
      %v499 = vrot.slane %v497, 5
      %v500 = vsel %vm380, %v495, %v499
      %v502 = vshrl.u32 %v339, 16
      %v504 = vrot.slane %v502, 4
      %v505 = vshll.u32 %v339, 16
      %v507 = vrot.slane %v505, 5
      %v508 = vor.u32 %v504, %v507
      %v509 = vrot.slane %v508, 4
      %v511 = vshll.u32 %v340, 16
      %v513 = vrot.slane %v511, 5
      %v514 = vsel %vm380, %v509, %v513
      %v515 = vshrl.u32 %v340, 16
      %v517 = vrot.slane %v515, 4
      %v518 = vor.u32 %v517, %v513
      %v519 = vrot.slane %v518, 4
      %v521 = vshll.u32 %v367, 16
      %v523 = vrot.slane %v521, 5
      %v524 = vsel %vm380, %v519, %v523
      %v526 = vshrl.u32 %v341, 16
      %v528 = vrot.slane %v526, 4
      %v529 = vshll.u32 %v341, 16
      %v531 = vrot.slane %v529, 5
      %v532 = vor.u32 %v528, %v531
      %v533 = vrot.slane %v532, 4
      %v535 = vshll.u32 %v342, 16
      %v537 = vrot.slane %v535, 5
      %v538 = vsel %vm380, %v533, %v537
      %v539 = vshrl.u32 %v342, 16
      %v541 = vrot.slane %v539, 4
      %v542 = vor.u32 %v541, %v537
      %v543 = vrot.slane %v542, 4
      %v545 = vshll.u32 %v368, 16
      %v547 = vrot.slane %v545, 5
      %v548 = vsel %vm380, %v543, %v547
      %v550 = vshrl.u32 %v343, 16
      %v552 = vrot.slane %v550, 4
      %v553 = vshll.u32 %v343, 16
      %v555 = vrot.slane %v553, 5
      %v556 = vor.u32 %v552, %v555
      %v557 = vrot.slane %v556, 4
      %v559 = vshll.u32 %v344, 16
      %v561 = vrot.slane %v559, 5
      %v562 = vsel %vm380, %v557, %v561
      %v563 = vshrl.u32 %v344, 16
      %v565 = vrot.slane %v563, 4
      %v566 = vor.u32 %v565, %v561
      %v567 = vrot.slane %v566, 4
      %v569 = vshll.u32 %v369, 16
      %v571 = vrot.slane %v569, 5
      %v572 = vsel %vm380, %v567, %v571
      %v574 = vshrl.u32 %v345, 16
      %v576 = vrot.slane %v574, 4
      %v577 = vshll.u32 %v345, 16
      %v579 = vrot.slane %v577, 5
      %v580 = vor.u32 %v576, %v579
      %v581 = vrot.slane %v580, 4
      %v583 = vshll.u32 %v346, 16
      %v585 = vrot.slane %v583, 5
      %v586 = vsel %vm380, %v581, %v585
      %v587 = vshrl.u32 %v346, 16
      %v589 = vrot.slane %v587, 4
      %v590 = vor.u32 %v589, %v585
      %v591 = vrot.slane %v590, 4
      %v593 = vshll.u32 %v370, 16
      %v595 = vrot.slane %v593, 5
      %v596 = vsel %vm380, %v591, %v595
      %v598 = vshrl.u32 %v347, 16
      %v600 = vrot.slane %v598, 4
      %v601 = vshll.u32 %v347, 16
      %v603 = vrot.slane %v601, 5
      %v604 = vor.u32 %v600, %v603
      %v605 = vrot.slane %v604, 4
      %v607 = vshll.u32 %v348, 16
      %v609 = vrot.slane %v607, 5
      %v610 = vsel %vm380, %v605, %v609
      %v611 = vshrl.u32 %v348, 16
      %v613 = vrot.slane %v611, 4
      %v614 = vor.u32 %v613, %v609
      %v615 = vrot.slane %v614, 4
      %v617 = vshll.u32 %v371, 16
      %v619 = vrot.slane %v617, 5
      %v620 = vsel %vm380, %v615, %v619
      %v622 = vshrl.u32 %v349, 16
      %v624 = vrot.slane %v622, 4
      %v625 = vshll.u32 %v349, 16
      %v627 = vrot.slane %v625, 5
      %v628 = vor.u32 %v624, %v627
      %v629 = vrot.slane %v628, 4
      %v631 = vshll.u32 %v350, 16
      %v633 = vrot.slane %v631, 5
      %v634 = vsel %vm380, %v629, %v633
      %v635 = vshrl.u32 %v350, 16
      %v637 = vrot.slane %v635, 4
      %v638 = vor.u32 %v637, %v633
      %v639 = vrot.slane %v638, 4
      %v641 = vshll.u32 %v372, 16
      %v643 = vrot.slane %v641, 5
      %v644 = vsel %vm380, %v639, %v643
      %v646 = vshrl.u32 %v351, 16
      %v648 = vrot.slane %v646, 4
      %v649 = vshll.u32 %v351, 16
      %v651 = vrot.slane %v649, 5
      %v652 = vor.u32 %v648, %v651
      %v653 = vrot.slane %v652, 4
      %v655 = vshll.u32 %v352, 16
      %v657 = vrot.slane %v655, 5
      %v658 = vsel %vm380, %v653, %v657
      %v659 = vshrl.u32 %v352, 16
      %v661 = vrot.slane %v659, 4
      %v662 = vor.u32 %v661, %v657
      %v663 = vrot.slane %v662, 4
      %v665 = vshll.u32 %v373, 16
      %v667 = vrot.slane %v665, 5
      %v668 = vsel %vm380, %v663, %v667
      %v670 = vshrl.u32 %v353, 16
      %v672 = vrot.slane %v670, 4
      %v673 = vshll.u32 %v353, 16
      %v675 = vrot.slane %v673, 5
      %v676 = vor.u32 %v672, %v675
      %v677 = vrot.slane %v676, 4
      %v679 = vshll.u32 %v354, 16
      %v681 = vrot.slane %v679, 5
      %v682 = vsel %vm380, %v677, %v681
      %v683 = vshrl.u32 %v354, 16
      %v685 = vrot.slane %v683, 4
      %v686 = vor.u32 %v685, %v681
      %v687 = vrot.slane %v686, 4
      %v689 = vshll.u32 %v374, 16
      %v691 = vrot.slane %v689, 5
      %v692 = vsel %vm380, %v687, %v691
      %v694 = vshrl.u32 %v355, 16
      %v696 = vrot.slane %v694, 4
      %v697 = vshll.u32 %v355, 16
      %v699 = vrot.slane %v697, 5
      %v700 = vor.u32 %v696, %v699
      %v701 = vrot.slane %v700, 4
      %v703 = vshll.u32 %v356, 16
      %v705 = vrot.slane %v703, 5
      %v706 = vsel %vm380, %v701, %v705
      %v707 = vshrl.u32 %v356, 16
      %v709 = vrot.slane %v707, 4
      %v710 = vor.u32 %v709, %v705
      %v711 = vrot.slane %v710, 4
      %v713 = vshll.u32 %v375, 16
      %v715 = vrot.slane %v713, 5
      %v716 = vsel %vm380, %v711, %v715
      %v718 = vshrl.u32 %v357, 16
      %v720 = vrot.slane %v718, 4
      %v721 = vshll.u32 %v357, 16
      %v723 = vrot.slane %v721, 5
      %v724 = vor.u32 %v720, %v723
      %v725 = vrot.slane %v724, 4
      %v727 = vshll.u32 %v358, 16
      %v729 = vrot.slane %v727, 5
      %v730 = vsel %vm380, %v725, %v729
      %v731 = vshrl.u32 %v358, 16
      %v733 = vrot.slane %v731, 4
      %v734 = vor.u32 %v733, %v729
      %v735 = vrot.slane %v734, 4
      %v737 = vshll.u32 %v376, 16
      %v739 = vrot.slane %v737, 5
      %v740 = vsel %vm380, %v735, %v739
      %v742 = vshrl.u32 %v359, 16
      %v744 = vrot.slane %v742, 4
      %v745 = vshll.u32 %v359, 16
      %v747 = vrot.slane %v745, 5
      %v748 = vor.u32 %v744, %v747
      %v749 = vrot.slane %v748, 4
      %v751 = vshll.u32 %v360, 16
      %v753 = vrot.slane %v751, 5
      %v754 = vsel %vm380, %v749, %v753
      %v755 = vshrl.u32 %v360, 16
      %v757 = vrot.slane %v755, 4
      %v758 = vor.u32 %v757, %v753
      %v759 = vrot.slane %v758, 4
      %v761 = vshll.u32 %v377, 16
      %v763 = vrot.slane %v761, 5
      %v764 = vsel %vm380, %v759, %v763
      %s765 = scalar_lea.vmem %s277, 2
      %v766 = vld [vmem:[%s765] sm:$0x3]
      %v767 = vunpack.c.l.b16 %v394
      %v768 = vunpack.c.l.b16 %v404
      %v769 = vunpack.c.l.b16 %v418
      %v770 = vunpack.c.l.b16 %v428
      %v771 = vunpack.c.l.b16 %v442
      %v772 = vunpack.c.l.b16 %v452
      %v773 = vunpack.c.l.b16 %v466
      %v774 = vunpack.c.l.b16 %v476
      %v775 = vunpack.c.l.b16 %v490
      %v776 = vunpack.c.l.b16 %v500
      %v777 = vunpack.c.l.b16 %v514
      %v778 = vunpack.c.l.b16 %v524
      %v779 = vunpack.c.l.b16 %v538
      %v780 = vunpack.c.l.b16 %v548
      %v781 = vunpack.c.l.b16 %v562
      %v782 = vunpack.c.l.b16 %v572
      %v783 = vunpack.c.l.b16 %v586
      %v784 = vunpack.c.l.b16 %v596
      %v785 = vunpack.c.l.b16 %v610
      %v786 = vunpack.c.l.b16 %v620
      %v787 = vunpack.c.l.b16 %v634
      %v788 = vunpack.c.l.b16 %v644
      %v789 = vunpack.c.l.b16 %v658
      %v790 = vunpack.c.l.b16 %v668
      %v791 = vunpack.c.l.b16 %v682
      %v792 = vunpack.c.l.b16 %v692
      %v793 = vunpack.c.l.b16 %v706
      %v794 = vunpack.c.l.b16 %v716
      %v795 = vunpack.c.l.b16 %v730
      %v796 = vunpack.c.l.b16 %v740
      %v797 = vunpack.c.l.b16 %v754
      %v798 = vunpack.c.l.b16 %v764
      %v799 = vpack.c.b16 %v768, %v767
      %v800 = vpack.c.b16 %v770, %v769
      %v801 = vpack.c.b16 %v772, %v771
      %v802 = vpack.c.b16 %v774, %v773
      %v803 = vpack.c.b16 %v776, %v775
      %v804 = vpack.c.b16 %v778, %v777
      %v805 = vpack.c.b16 %v780, %v779
      %v806 = vpack.c.b16 %v782, %v781
      %v807 = vpack.c.b16 %v784, %v783
      %v808 = vpack.c.b16 %v786, %v785
      %v809 = vpack.c.b16 %v788, %v787
      %v810 = vpack.c.b16 %v790, %v789
      %v811 = vpack.c.b16 %v792, %v791
      %v812 = vpack.c.b16 %v794, %v793
      %v813 = vpack.c.b16 %v796, %v795
      %v814 = vpack.c.b16 %v798, %v797
      %vm815 = vcmask 31744
      %v817 = vsel %vm815, %v799, 0
      %v820 = vsel %vm815, %v800, 0
      %v823 = vsel %vm815, %v801, 0
      %v826 = vsel %vm815, %v802, 0
      %v829 = vsel %vm815, %v803, 0
      %v832 = vsel %vm815, %v804, 0
      %v835 = vsel %vm815, %v805, 0
      %v838 = vsel %vm815, %v806, 0
      %v841 = vsel %vm815, %v807, 0
      %v844 = vsel %vm815, %v808, 0
      %v847 = vsel %vm815, %v809, 0
      %v850 = vsel %vm815, %v810, 0
      %v853 = vsel %vm815, %v811, 0
      %v856 = vsel %vm815, %v812, 0
      %v859 = vsel %vm815, %v813, 0
      %v862 = vsel %vm815, %v814, 0
      %vm864 = vcmask 1041408
      %v866 = vsel %vm864, %v766, 0
      %868 = vmatprep.subr.bf16.mxu0 0
      %869 = vmatpush1.bf16.msra.mxu0 %v866
      %870 = vmatprep.subr.bf16.mxu0 0
      %871 = vmatpush1.bf16.msra.mxu0 0
      %872 = vmatprep.subr.bf16.mxu0 0
      %873 = vmatpush1.bf16.msra.mxu0 0
      %874 = vmatprep.subr.bf16.mxu0 0
      %875 = vmatpush1.bf16.msra.mxu0 0
      %876 = vmatprep.subr.bf16.mxu0 0
      %877 = vmatpush1.bf16.msra.mxu0 0
      %878 = vmatprep.subr.bf16.mxu0 0
      %879 = vmatpush1.bf16.msra.mxu0 0
      %880 = vmatprep.subr.bf16.mxu0 0
      %881 = vmatpush1.bf16.msra.mxu0 0
      %882 = vmatprep.subr.bf16.mxu0 0
      %883 = vmatpush1.bf16.msra.mxu0 0
      %884 = vmatprep.subr.bf16.mxu0 0
      %885 = vmatpush1.bf16.msra.mxu0 0
      %886 = vmatprep.subr.bf16.mxu0 0
      %887 = vmatpush1.bf16.msra.mxu0 0
      %888 = vmatprep.subr.bf16.mxu0 0
      %889 = vmatpush1.bf16.msra.mxu0 0
      %890 = vmatprep.subr.bf16.mxu0 0
      %891 = vmatpush1.bf16.msra.mxu0 0
      %892 = vmatprep.subr.bf16.mxu0 0
      %893 = vmatpush1.bf16.msra.mxu0 0
      %894 = vmatprep.subr.bf16.mxu0 0
      %895 = vmatpush1.bf16.msra.mxu0 0
      %896 = vmatprep.subr.bf16.mxu0 0
      %897 = vmatpush1.bf16.msra.mxu0 0
      %898 = vmatprep.subr.bf16.mxu0 0
      %899 = vmatpush1.bf16.msra.mxu0 0
      %900 = vmatprep.mubr.bf16.mxu0 0
      %901 = vmatmul.mubr.bf16.gmra.mrb[0].mxu0 %v817
      %v902 = vpop.f32.mrb[0].mxu0
      %v903 = vadd.f32 0.0, %v902
      %v904 = vpop.f32.mrb[0].mxu0
      %v905 = vpop.f32.mrb[0].mxu0
      %v906 = vadd.f32 0.0, %v905
      %v907 = vpop.f32.mrb[0].mxu0
      %908 = vmatprep.mubr.bf16.mxu0 0
      %909 = vmatmul.mubr.bf16.gmra.mrb[0].mxu0 %v820
      %v910 = vpop.f32.mrb[0].mxu0
      %v911 = vadd.f32 0.0, %v910
      %v912 = vpop.f32.mrb[0].mxu0
      %v913 = vpop.f32.mrb[0].mxu0
      %v914 = vadd.f32 0.0, %v913
      %v915 = vpop.f32.mrb[0].mxu0
      %916 = vmatprep.mubr.bf16.mxu0 0
      %917 = vmatmul.mubr.bf16.gmra.mrb[0].mxu0 %v823
      %v918 = vpop.f32.mrb[0].mxu0
      %v919 = vadd.f32 0.0, %v918
      %v920 = vpop.f32.mrb[0].mxu0
      %v921 = vpop.f32.mrb[0].mxu0
      %v922 = vadd.f32 0.0, %v921
      %v923 = vpop.f32.mrb[0].mxu0
      %924 = vmatprep.mubr.bf16.mxu0 0
      %925 = vmatmul.mubr.bf16.gmra.mrb[0].mxu0 %v826
      %v926 = vpop.f32.mrb[0].mxu0
      %v927 = vadd.f32 0.0, %v926
      %v928 = vpop.f32.mrb[0].mxu0
      %v929 = vpop.f32.mrb[0].mxu0
      %v930 = vadd.f32 0.0, %v929
      %v931 = vpop.f32.mrb[0].mxu0
      %932 = vmatprep.mubr.bf16.mxu0 0
      %933 = vmatmul.mubr.bf16.gmra.mrb[0].mxu0 %v829
      %v934 = vpop.f32.mrb[0].mxu0
      %v935 = vadd.f32 0.0, %v934
      %v936 = vpop.f32.mrb[0].mxu0
      %v937 = vpop.f32.mrb[0].mxu0
      %v938 = vadd.f32 0.0, %v937
      %v939 = vpop.f32.mrb[0].mxu0
      %940 = vmatprep.mubr.bf16.mxu0 0
      %941 = vmatmul.mubr.bf16.gmra.mrb[0].mxu0 %v832
      %v942 = vpop.f32.mrb[0].mxu0
      %v943 = vadd.f32 0.0, %v942
      %v944 = vpop.f32.mrb[0].mxu0
      %v945 = vpop.f32.mrb[0].mxu0
      %v946 = vadd.f32 0.0, %v945
      %v947 = vpop.f32.mrb[0].mxu0
      %948 = vmatprep.mubr.bf16.mxu0 0
      %949 = vmatmul.mubr.bf16.gmra.mrb[0].mxu0 %v835
      %v950 = vpop.f32.mrb[0].mxu0
      %v951 = vadd.f32 0.0, %v950
      %v952 = vpop.f32.mrb[0].mxu0
      %v953 = vpop.f32.mrb[0].mxu0
      %v954 = vadd.f32 0.0, %v953
      %v955 = vpop.f32.mrb[0].mxu0
      %956 = vmatprep.mubr.bf16.mxu0 0
      %957 = vmatmul.mubr.bf16.gmra.mrb[0].mxu0 %v838
      %v958 = vpop.f32.mrb[0].mxu0
      %v959 = vadd.f32 0.0, %v958
      %v960 = vpop.f32.mrb[0].mxu0
      %v961 = vpop.f32.mrb[0].mxu0
      %v962 = vadd.f32 0.0, %v961
      %v963 = vpop.f32.mrb[0].mxu0
      %964 = vmatprep.mubr.bf16.mxu0 0
      %965 = vmatmul.mubr.bf16.gmra.mrb[0].mxu0 %v841
      %v966 = vpop.f32.mrb[0].mxu0
      %v967 = vadd.f32 0.0, %v966
      %v968 = vpop.f32.mrb[0].mxu0
      %v969 = vpop.f32.mrb[0].mxu0
      %v970 = vadd.f32 0.0, %v969
      %v971 = vpop.f32.mrb[0].mxu0
      %972 = vmatprep.mubr.bf16.mxu0 0
      %973 = vmatmul.mubr.bf16.gmra.mrb[0].mxu0 %v844
      %v974 = vpop.f32.mrb[0].mxu0
      %v975 = vadd.f32 0.0, %v974
      %v976 = vpop.f32.mrb[0].mxu0
      %v977 = vpop.f32.mrb[0].mxu0
      %v978 = vadd.f32 0.0, %v977
      %v979 = vpop.f32.mrb[0].mxu0
      %980 = vmatprep.mubr.bf16.mxu0 0
      %981 = vmatmul.mubr.bf16.gmra.mrb[0].mxu0 %v847
      %v982 = vpop.f32.mrb[0].mxu0
      %v983 = vadd.f32 0.0, %v982
      %v984 = vpop.f32.mrb[0].mxu0
      %v985 = vpop.f32.mrb[0].mxu0
      %v986 = vadd.f32 0.0, %v985
      %v987 = vpop.f32.mrb[0].mxu0
      %988 = vmatprep.mubr.bf16.mxu0 0
      %989 = vmatmul.mubr.bf16.gmra.mrb[0].mxu0 %v850
      %v990 = vpop.f32.mrb[0].mxu0
      %v991 = vadd.f32 0.0, %v990
      %v992 = vpop.f32.mrb[0].mxu0
      %v993 = vpop.f32.mrb[0].mxu0
      %v994 = vadd.f32 0.0, %v993
      %v995 = vpop.f32.mrb[0].mxu0
      %996 = vmatprep.mubr.bf16.mxu0 0
      %997 = vmatmul.mubr.bf16.gmra.mrb[0].mxu0 %v853
      %v998 = vpop.f32.mrb[0].mxu0
      %v999 = vadd.f32 0.0, %v998
      %v1000 = vpop.f32.mrb[0].mxu0
      %v1001 = vpop.f32.mrb[0].mxu0
      %v1002 = vadd.f32 0.0, %v1001
      %v1003 = vpop.f32.mrb[0].mxu0
      %1004 = vmatprep.mubr.bf16.mxu0 0
      %1005 = vmatmul.mubr.bf16.gmra.mrb[0].mxu0 %v856
      %v1006 = vpop.f32.mrb[0].mxu0
      %v1007 = vadd.f32 0.0, %v1006
      %v1008 = vpop.f32.mrb[0].mxu0
      %v1009 = vpop.f32.mrb[0].mxu0
      %v1010 = vadd.f32 0.0, %v1009
      %v1011 = vpop.f32.mrb[0].mxu0
      %1012 = vmatprep.mubr.bf16.mxu0 0
      %1013 = vmatmul.mubr.bf16.gmra.mrb[0].mxu0 %v859
      %v1014 = vpop.f32.mrb[0].mxu0
      %v1015 = vadd.f32 0.0, %v1014
      %v1016 = vpop.f32.mrb[0].mxu0
      %v1017 = vpop.f32.mrb[0].mxu0
      %v1018 = vadd.f32 0.0, %v1017
      %v1019 = vpop.f32.mrb[0].mxu0
      %1020 = vmatprep.mubr.bf16.mxu0 0
      %1021 = vmatmul.mubr.bf16.gmra.mrb[0].mxu0 %v862
      %v1022 = vpop.f32.mrb[0].mxu0
      %v1023 = vadd.f32 0.0, %v1022
      %v1024 = vpop.f32.mrb[0].mxu0
      %v1025 = vpop.f32.mrb[0].mxu0
      %v1026 = vadd.f32 0.0, %v1025
      %v1027 = vpop.f32.mrb[0].mxu0
      %1028 = vdwg.mxu0
      %v1061 = vunpack.c.l.b16 %v329
      %v1062 = vunpack.c.l.b16 %v330
      %v1063 = vunpack.c.l.b16 %v331
      %v1064 = vunpack.c.l.b16 %v332
      %v1065 = vunpack.c.l.b16 %v333
      %v1066 = vunpack.c.l.b16 %v334
      %v1067 = vunpack.c.l.b16 %v335
      %v1068 = vunpack.c.l.b16 %v336
      %v1069 = vunpack.c.l.b16 %v337
      %v1070 = vunpack.c.l.b16 %v338
      %v1071 = vunpack.c.l.b16 %v339
      %v1072 = vunpack.c.l.b16 %v340
      %v1073 = vunpack.c.l.b16 %v341
      %v1074 = vunpack.c.l.b16 %v342
      %v1075 = vunpack.c.l.b16 %v343
      %v1076 = vunpack.c.l.b16 %v344
      %v1077 = vunpack.c.l.b16 %v345
      %v1078 = vunpack.c.l.b16 %v346
      %v1079 = vunpack.c.l.b16 %v347
      %v1080 = vunpack.c.l.b16 %v348
      %v1081 = vunpack.c.l.b16 %v349
      %v1082 = vunpack.c.l.b16 %v350
      %v1083 = vunpack.c.l.b16 %v351
      %v1084 = vunpack.c.l.b16 %v352
      %v1085 = vunpack.c.l.b16 %v353
      %v1086 = vunpack.c.l.b16 %v354
      %v1087 = vunpack.c.l.b16 %v355
      %v1088 = vunpack.c.l.b16 %v356
      %v1089 = vunpack.c.l.b16 %v357
      %v1090 = vunpack.c.l.b16 %v358
      %v1091 = vunpack.c.l.b16 %v359
      %v1092 = vunpack.c.l.b16 %v360
      %v1093 = vpack.c.b16 %v1062, %v1061
      %v1094 = vpack.c.b16 %v1064, %v1063
      %v1095 = vpack.c.b16 %v1066, %v1065
      %v1096 = vpack.c.b16 %v1068, %v1067
      %v1097 = vpack.c.b16 %v1070, %v1069
      %v1098 = vpack.c.b16 %v1072, %v1071
      %v1099 = vpack.c.b16 %v1074, %v1073
      %v1100 = vpack.c.b16 %v1076, %v1075
      %v1101 = vpack.c.b16 %v1078, %v1077
      %v1102 = vpack.c.b16 %v1080, %v1079
      %v1103 = vpack.c.b16 %v1082, %v1081
      %v1104 = vpack.c.b16 %v1084, %v1083
      %v1105 = vpack.c.b16 %v1086, %v1085
      %v1106 = vpack.c.b16 %v1088, %v1087
      %v1107 = vpack.c.b16 %v1090, %v1089
      %v1108 = vpack.c.b16 %v1092, %v1091
      %v1110 = vsel %vm815, %v1093, 0
      %v1113 = vsel %vm815, %v1094, 0
      %v1116 = vsel %vm815, %v1095, 0
      %v1119 = vsel %vm815, %v1096, 0
      %v1122 = vsel %vm815, %v1097, 0
      %v1125 = vsel %vm815, %v1098, 0
      %v1128 = vsel %vm815, %v1099, 0
      %v1131 = vsel %vm815, %v1100, 0
      %v1134 = vsel %vm815, %v1101, 0
      %v1137 = vsel %vm815, %v1102, 0
      %v1140 = vsel %vm815, %v1103, 0
      %v1143 = vsel %vm815, %v1104, 0
      %v1146 = vsel %vm815, %v1105, 0
      %v1149 = vsel %vm815, %v1106, 0
      %v1152 = vsel %vm815, %v1107, 0
      %v1155 = vsel %vm815, %v1108, 0
      %v1158 = vsel %vm864, %v361, 0
      %1160 = vmatprep.subr.bf16.mxu0 0
      %1161 = vmatpush1.bf16.msra.mxu0 %v1158
      %1162 = vmatprep.subr.bf16.mxu0 0
      %1163 = vmatpush1.bf16.msra.mxu0 0
      %1164 = vmatprep.subr.bf16.mxu0 0
      %1165 = vmatpush1.bf16.msra.mxu0 0
      %1166 = vmatprep.subr.bf16.mxu0 0
      %1167 = vmatpush1.bf16.msra.mxu0 0
      %1168 = vmatprep.subr.bf16.mxu0 0
      %1169 = vmatpush1.bf16.msra.mxu0 0
      %1170 = vmatprep.subr.bf16.mxu0 0
      %1171 = vmatpush1.bf16.msra.mxu0 0
      %1172 = vmatprep.subr.bf16.mxu0 0
      %1173 = vmatpush1.bf16.msra.mxu0 0
      %1174 = vmatprep.subr.bf16.mxu0 0
      %1175 = vmatpush1.bf16.msra.mxu0 0
      %1176 = vmatprep.subr.bf16.mxu0 0
      %1177 = vmatpush1.bf16.msra.mxu0 0
      %1178 = vmatprep.subr.bf16.mxu0 0
      %1179 = vmatpush1.bf16.msra.mxu0 0
      %1180 = vmatprep.subr.bf16.mxu0 0
      %1181 = vmatpush1.bf16.msra.mxu0 0
      %1182 = vmatprep.subr.bf16.mxu0 0
      %1183 = vmatpush1.bf16.msra.mxu0 0
      %1184 = vmatprep.subr.bf16.mxu0 0
      %1185 = vmatpush1.bf16.msra.mxu0 0
      %1186 = vmatprep.subr.bf16.mxu0 0
      %1187 = vmatpush1.bf16.msra.mxu0 0
      %1188 = vmatprep.subr.bf16.mxu0 0
      %1189 = vmatpush1.bf16.msra.mxu0 0
      %1190 = vmatprep.subr.bf16.mxu0 0
      %1191 = vmatpush1.bf16.msra.mxu0 0
      %1192 = vmatprep.mubr.bf16.mxu0 0
      %1193 = vmatmul.mubr.bf16.gmra.mrb[0].mxu0 %v1110
      %v1194 = vpop.f32.mrb[0].mxu0
      %v1195 = vadd.f32 %v903, %v1194
      %v1196 = vpop.f32.mrb[0].mxu0
      %v1197 = vpop.f32.mrb[0].mxu0
      %v1198 = vadd.f32 %v906, %v1197
      %v1199 = vpop.f32.mrb[0].mxu0
      %1200 = vmatprep.mubr.bf16.mxu0 0
      %1201 = vmatmul.mubr.bf16.gmra.mrb[0].mxu0 %v1113
      %v1202 = vpop.f32.mrb[0].mxu0
      %v1203 = vadd.f32 %v911, %v1202
      %v1204 = vpop.f32.mrb[0].mxu0
      %v1205 = vpop.f32.mrb[0].mxu0
      %v1206 = vadd.f32 %v914, %v1205
      %v1207 = vpop.f32.mrb[0].mxu0
      %1208 = vmatprep.mubr.bf16.mxu0 0
      %1209 = vmatmul.mubr.bf16.gmra.mrb[0].mxu0 %v1116
      %v1210 = vpop.f32.mrb[0].mxu0
      %v1211 = vadd.f32 %v919, %v1210
      %v1212 = vpop.f32.mrb[0].mxu0
      %v1213 = vpop.f32.mrb[0].mxu0
      %v1214 = vadd.f32 %v922, %v1213
      %v1215 = vpop.f32.mrb[0].mxu0
      %1216 = vmatprep.mubr.bf16.mxu0 0
      %1217 = vmatmul.mubr.bf16.gmra.mrb[0].mxu0 %v1119
      %v1218 = vpop.f32.mrb[0].mxu0
      %v1219 = vadd.f32 %v927, %v1218
      %v1220 = vpop.f32.mrb[0].mxu0
      %v1221 = vpop.f32.mrb[0].mxu0
      %v1222 = vadd.f32 %v930, %v1221
      %v1223 = vpop.f32.mrb[0].mxu0
      %1224 = vmatprep.mubr.bf16.mxu0 0
      %1225 = vmatmul.mubr.bf16.gmra.mrb[0].mxu0 %v1122
      %v1226 = vpop.f32.mrb[0].mxu0
      %v1227 = vadd.f32 %v935, %v1226
      %v1228 = vpop.f32.mrb[0].mxu0
      %v1229 = vpop.f32.mrb[0].mxu0
      %v1230 = vadd.f32 %v938, %v1229
      %v1231 = vpop.f32.mrb[0].mxu0
      %1232 = vmatprep.mubr.bf16.mxu0 0
      %1233 = vmatmul.mubr.bf16.gmra.mrb[0].mxu0 %v1125
      %v1234 = vpop.f32.mrb[0].mxu0
      %v1235 = vadd.f32 %v943, %v1234
      %v1236 = vpop.f32.mrb[0].mxu0
      %v1237 = vpop.f32.mrb[0].mxu0
      %v1238 = vadd.f32 %v946, %v1237
      %v1239 = vpop.f32.mrb[0].mxu0
      %1240 = vmatprep.mubr.bf16.mxu0 0
      %1241 = vmatmul.mubr.bf16.gmra.mrb[0].mxu0 %v1128
      %v1242 = vpop.f32.mrb[0].mxu0
      %v1243 = vadd.f32 %v951, %v1242
      %v1244 = vpop.f32.mrb[0].mxu0
      %v1245 = vpop.f32.mrb[0].mxu0
      %v1246 = vadd.f32 %v954, %v1245
      %v1247 = vpop.f32.mrb[0].mxu0
      %1248 = vmatprep.mubr.bf16.mxu0 0
      %1249 = vmatmul.mubr.bf16.gmra.mrb[0].mxu0 %v1131
      %v1250 = vpop.f32.mrb[0].mxu0
      %v1251 = vadd.f32 %v959, %v1250
      %v1252 = vpop.f32.mrb[0].mxu0
      %v1253 = vpop.f32.mrb[0].mxu0
      %v1254 = vadd.f32 %v962, %v1253
      %v1255 = vpop.f32.mrb[0].mxu0
      %1256 = vmatprep.mubr.bf16.mxu0 0
      %1257 = vmatmul.mubr.bf16.gmra.mrb[0].mxu0 %v1134
      %v1258 = vpop.f32.mrb[0].mxu0
      %v1259 = vadd.f32 %v967, %v1258
      %v1260 = vpop.f32.mrb[0].mxu0
      %v1261 = vpop.f32.mrb[0].mxu0
      %v1262 = vadd.f32 %v970, %v1261
      %v1263 = vpop.f32.mrb[0].mxu0
      %1264 = vmatprep.mubr.bf16.mxu0 0
      %1265 = vmatmul.mubr.bf16.gmra.mrb[0].mxu0 %v1137
      %v1266 = vpop.f32.mrb[0].mxu0
      %v1267 = vadd.f32 %v975, %v1266
      %v1268 = vpop.f32.mrb[0].mxu0
      %v1269 = vpop.f32.mrb[0].mxu0
      %v1270 = vadd.f32 %v978, %v1269
      %v1271 = vpop.f32.mrb[0].mxu0
      %1272 = vmatprep.mubr.bf16.mxu0 0
      %1273 = vmatmul.mubr.bf16.gmra.mrb[0].mxu0 %v1140
      %v1274 = vpop.f32.mrb[0].mxu0
      %v1275 = vadd.f32 %v983, %v1274
      %v1276 = vpop.f32.mrb[0].mxu0
      %v1277 = vpop.f32.mrb[0].mxu0
      %v1278 = vadd.f32 %v986, %v1277
      %v1279 = vpop.f32.mrb[0].mxu0
      %1280 = vmatprep.mubr.bf16.mxu0 0
      %1281 = vmatmul.mubr.bf16.gmra.mrb[0].mxu0 %v1143
      %v1282 = vpop.f32.mrb[0].mxu0
      %v1283 = vadd.f32 %v991, %v1282
      %v1284 = vpop.f32.mrb[0].mxu0
      %v1285 = vpop.f32.mrb[0].mxu0
      %v1286 = vadd.f32 %v994, %v1285
      %v1287 = vpop.f32.mrb[0].mxu0
      %1288 = vmatprep.mubr.bf16.mxu0 0
      %1289 = vmatmul.mubr.bf16.gmra.mrb[0].mxu0 %v1146
      %v1290 = vpop.f32.mrb[0].mxu0
      %v1291 = vadd.f32 %v999, %v1290
      %v1292 = vpop.f32.mrb[0].mxu0
      %v1293 = vpop.f32.mrb[0].mxu0
      %v1294 = vadd.f32 %v1002, %v1293
      %v1295 = vpop.f32.mrb[0].mxu0
      %1296 = vmatprep.mubr.bf16.mxu0 0
      %1297 = vmatmul.mubr.bf16.gmra.mrb[0].mxu0 %v1149
      %v1298 = vpop.f32.mrb[0].mxu0
      %v1299 = vadd.f32 %v1007, %v1298
      %v1300 = vpop.f32.mrb[0].mxu0
      %v1301 = vpop.f32.mrb[0].mxu0
      %v1302 = vadd.f32 %v1010, %v1301
      %v1303 = vpop.f32.mrb[0].mxu0
      %1304 = vmatprep.mubr.bf16.mxu0 0
      %1305 = vmatmul.mubr.bf16.gmra.mrb[0].mxu0 %v1152
      %v1306 = vpop.f32.mrb[0].mxu0
      %v1307 = vadd.f32 %v1015, %v1306
      %v1308 = vpop.f32.mrb[0].mxu0
      %v1309 = vpop.f32.mrb[0].mxu0
      %v1310 = vadd.f32 %v1018, %v1309
      %v1311 = vpop.f32.mrb[0].mxu0
      %1312 = vmatprep.mubr.bf16.mxu0 0
      %1313 = vmatmul.mubr.bf16.gmra.mrb[0].mxu0 %v1155
      %v1314 = vpop.f32.mrb[0].mxu0
      %v1315 = vadd.f32 %v1023, %v1314
      %v1316 = vpop.f32.mrb[0].mxu0
      %v1317 = vpop.f32.mrb[0].mxu0
      %v1318 = vadd.f32 %v1026, %v1317
      %v1319 = vpop.f32.mrb[0].mxu0
      %1320 = vdwg.mxu0
      %v1321 = vld [vmem:[%s270] sm:$0xe]
      %v1322 = vld [vmem:[%s270 + $0xc] sm:$0xe]
      %v1323 = vld [vmem:[%s270 + $0x18] sm:$0xe]
      %v1324 = vld [vmem:[%s270 + $0x24] sm:$0xe]
      %v1325 = vld [vmem:[%s270 + $0x30] sm:$0xe]
      %v1326 = vld [vmem:[%s270 + $0x3c] sm:$0xe]
      %v1327 = vld [vmem:[%s270 + $0x48] sm:$0xe]
      %v1328 = vld [vmem:[%s270 + $0x54] sm:$0xe]
      %v1329 = vld [vmem:[%s270 + $0x60] sm:$0xe]
      %v1330 = vld [vmem:[%s270 + $0x6c] sm:$0xe]
      %v1331 = vld [vmem:[%s270 + $0x78] sm:$0xe]
      %v1332 = vld [vmem:[%s270 + $0x84] sm:$0xe]
      %v1333 = vld [vmem:[%s270 + $0x90] sm:$0xe]
      %v1334 = vld [vmem:[%s270 + $0x9c] sm:$0xe]
      %v1335 = vld [vmem:[%s270 + $0xa8] sm:$0xe]
      %v1336 = vld [vmem:[%s270 + $0xb4] sm:$0xe]
      %vm1369 = vcmask 1042432
      %vm1370 = vcmask 1046532
      %vm1371 = vmor %vm1369, %vm1370
      %v1372 = vrot.slane %v1321, 5
      %v1373 = vrot.slane %v1372, 4
      %v1374 = vrot.slane %v330, 5
      %v1375 = vsel %vm1371, %v1373, %v1374
      %v1376 = vrot.slane %v1374, 4
      %v1377 = vrot.slane %v362, 5
      %v1378 = vsel %vm1371, %v1376, %v1377
      %v1379 = vrot.slane %v1322, 5
      %v1380 = vrot.slane %v1379, 4
      %v1381 = vrot.slane %v332, 5
      %v1382 = vsel %vm1371, %v1380, %v1381
      %v1383 = vrot.slane %v1381, 4
      %v1384 = vrot.slane %v363, 5
      %v1385 = vsel %vm1371, %v1383, %v1384
      %v1386 = vrot.slane %v1323, 5
      %v1387 = vrot.slane %v1386, 4
      %v1388 = vrot.slane %v334, 5
      %v1389 = vsel %vm1371, %v1387, %v1388
      %v1390 = vrot.slane %v1388, 4
      %v1391 = vrot.slane %v364, 5
      %v1392 = vsel %vm1371, %v1390, %v1391
      %v1393 = vrot.slane %v1324, 5
      %v1394 = vrot.slane %v1393, 4
      %v1395 = vrot.slane %v336, 5
      %v1396 = vsel %vm1371, %v1394, %v1395
      %v1397 = vrot.slane %v1395, 4
      %v1398 = vrot.slane %v365, 5
      %v1399 = vsel %vm1371, %v1397, %v1398
      %v1400 = vrot.slane %v1325, 5
      %v1401 = vrot.slane %v1400, 4
      %v1402 = vrot.slane %v338, 5
      %v1403 = vsel %vm1371, %v1401, %v1402
      %v1404 = vrot.slane %v1402, 4
      %v1405 = vrot.slane %v366, 5
      %v1406 = vsel %vm1371, %v1404, %v1405
      %v1407 = vrot.slane %v1326, 5
      %v1408 = vrot.slane %v1407, 4
      %v1409 = vrot.slane %v340, 5
      %v1410 = vsel %vm1371, %v1408, %v1409
      %v1411 = vrot.slane %v1409, 4
      %v1412 = vrot.slane %v367, 5
      %v1413 = vsel %vm1371, %v1411, %v1412
      %v1414 = vrot.slane %v1327, 5
      %v1415 = vrot.slane %v1414, 4
      %v1416 = vrot.slane %v342, 5
      %v1417 = vsel %vm1371, %v1415, %v1416
      %v1418 = vrot.slane %v1416, 4
      %v1419 = vrot.slane %v368, 5
      %v1420 = vsel %vm1371, %v1418, %v1419
      %v1421 = vrot.slane %v1328, 5
      %v1422 = vrot.slane %v1421, 4
      %v1423 = vrot.slane %v344, 5
      %v1424 = vsel %vm1371, %v1422, %v1423
      %v1425 = vrot.slane %v1423, 4
      %v1426 = vrot.slane %v369, 5
      %v1427 = vsel %vm1371, %v1425, %v1426
      %v1428 = vrot.slane %v1329, 5
      %v1429 = vrot.slane %v1428, 4
      %v1430 = vrot.slane %v346, 5
      %v1431 = vsel %vm1371, %v1429, %v1430
      %v1432 = vrot.slane %v1430, 4
      %v1433 = vrot.slane %v370, 5
      %v1434 = vsel %vm1371, %v1432, %v1433
      %v1435 = vrot.slane %v1330, 5
      %v1436 = vrot.slane %v1435, 4
      %v1437 = vrot.slane %v348, 5
      %v1438 = vsel %vm1371, %v1436, %v1437
      %v1439 = vrot.slane %v1437, 4
      %v1440 = vrot.slane %v371, 5
      %v1441 = vsel %vm1371, %v1439, %v1440
      %v1442 = vrot.slane %v1331, 5
      %v1443 = vrot.slane %v1442, 4
      %v1444 = vrot.slane %v350, 5
      %v1445 = vsel %vm1371, %v1443, %v1444
      %v1446 = vrot.slane %v1444, 4
      %v1447 = vrot.slane %v372, 5
      %v1448 = vsel %vm1371, %v1446, %v1447
      %v1449 = vrot.slane %v1332, 5
      %v1450 = vrot.slane %v1449, 4
      %v1451 = vrot.slane %v352, 5
      %v1452 = vsel %vm1371, %v1450, %v1451
      %v1453 = vrot.slane %v1451, 4
      %v1454 = vrot.slane %v373, 5
      %v1455 = vsel %vm1371, %v1453, %v1454
      %v1456 = vrot.slane %v1333, 5
      %v1457 = vrot.slane %v1456, 4
      %v1458 = vrot.slane %v354, 5
      %v1459 = vsel %vm1371, %v1457, %v1458
      %v1460 = vrot.slane %v1458, 4
      %v1461 = vrot.slane %v374, 5
      %v1462 = vsel %vm1371, %v1460, %v1461
      %v1463 = vrot.slane %v1334, 5
      %v1464 = vrot.slane %v1463, 4
      %v1465 = vrot.slane %v356, 5
      %v1466 = vsel %vm1371, %v1464, %v1465
      %v1467 = vrot.slane %v1465, 4
      %v1468 = vrot.slane %v375, 5
      %v1469 = vsel %vm1371, %v1467, %v1468
      %v1470 = vrot.slane %v1335, 5
      %v1471 = vrot.slane %v1470, 4
      %v1472 = vrot.slane %v358, 5
      %v1473 = vsel %vm1371, %v1471, %v1472
      %v1474 = vrot.slane %v1472, 4
      %v1475 = vrot.slane %v376, 5
      %v1476 = vsel %vm1371, %v1474, %v1475
      %v1477 = vrot.slane %v1336, 5
      %v1478 = vrot.slane %v1477, 4
      %v1479 = vrot.slane %v360, 5
      %v1480 = vsel %vm1371, %v1478, %v1479
      %v1481 = vrot.slane %v1479, 4
      %v1482 = vrot.slane %v377, 5
      %v1483 = vsel %vm1371, %v1481, %v1482
      %s1484 = scalar_lea.vmem %s277, 4
      %v1485 = vld [vmem:[%s1484] sm:$0x3]
      %v1486 = vunpack.c.l.b16 %v1375
      %v1487 = vunpack.c.l.b16 %v1378
      %v1488 = vunpack.c.l.b16 %v1382
      %v1489 = vunpack.c.l.b16 %v1385
      %v1490 = vunpack.c.l.b16 %v1389
      %v1491 = vunpack.c.l.b16 %v1392
      %v1492 = vunpack.c.l.b16 %v1396
      %v1493 = vunpack.c.l.b16 %v1399
      %v1494 = vunpack.c.l.b16 %v1403
      %v1495 = vunpack.c.l.b16 %v1406
      %v1496 = vunpack.c.l.b16 %v1410
      %v1497 = vunpack.c.l.b16 %v1413
      %v1498 = vunpack.c.l.b16 %v1417
      %v1499 = vunpack.c.l.b16 %v1420
      %v1500 = vunpack.c.l.b16 %v1424
      %v1501 = vunpack.c.l.b16 %v1427
      %v1502 = vunpack.c.l.b16 %v1431
      %v1503 = vunpack.c.l.b16 %v1434
      %v1504 = vunpack.c.l.b16 %v1438
      %v1505 = vunpack.c.l.b16 %v1441
      %v1506 = vunpack.c.l.b16 %v1445
      %v1507 = vunpack.c.l.b16 %v1448
      %v1508 = vunpack.c.l.b16 %v1452
      %v1509 = vunpack.c.l.b16 %v1455
      %v1510 = vunpack.c.l.b16 %v1459
      %v1511 = vunpack.c.l.b16 %v1462
      %v1512 = vunpack.c.l.b16 %v1466
      %v1513 = vunpack.c.l.b16 %v1469
      %v1514 = vunpack.c.l.b16 %v1473
      %v1515 = vunpack.c.l.b16 %v1476
      %v1516 = vunpack.c.l.b16 %v1480
      %v1517 = vunpack.c.l.b16 %v1483
      %v1518 = vpack.c.b16 %v1487, %v1486
      %v1519 = vpack.c.b16 %v1489, %v1488
      %v1520 = vpack.c.b16 %v1491, %v1490
      %v1521 = vpack.c.b16 %v1493, %v1492
      %v1522 = vpack.c.b16 %v1495, %v1494
      %v1523 = vpack.c.b16 %v1497, %v1496
      %v1524 = vpack.c.b16 %v1499, %v1498
      %v1525 = vpack.c.b16 %v1501, %v1500
      %v1526 = vpack.c.b16 %v1503, %v1502
      %v1527 = vpack.c.b16 %v1505, %v1504
      %v1528 = vpack.c.b16 %v1507, %v1506
      %v1529 = vpack.c.b16 %v1509, %v1508
      %v1530 = vpack.c.b16 %v1511, %v1510
      %v1531 = vpack.c.b16 %v1513, %v1512
      %v1532 = vpack.c.b16 %v1515, %v1514
      %v1533 = vpack.c.b16 %v1517, %v1516
      %v1535 = vsel %vm815, %v1518, 0
      %v1538 = vsel %vm815, %v1519, 0
      %v1541 = vsel %vm815, %v1520, 0
      %v1544 = vsel %vm815, %v1521, 0
      %v1547 = vsel %vm815, %v1522, 0
      %v1550 = vsel %vm815, %v1523, 0
      %v1553 = vsel %vm815, %v1524, 0
      %v1556 = vsel %vm815, %v1525, 0
      %v1559 = vsel %vm815, %v1526, 0
      %v1562 = vsel %vm815, %v1527, 0
      %v1565 = vsel %vm815, %v1528, 0
      %v1568 = vsel %vm815, %v1529, 0
      %v1571 = vsel %vm815, %v1530, 0
      %v1574 = vsel %vm815, %v1531, 0
      %v1577 = vsel %vm815, %v1532, 0
      %v1580 = vsel %vm815, %v1533, 0
      %v1583 = vsel %vm864, %v1485, 0
      %1585 = vmatprep.subr.bf16.mxu0 0
      %1586 = vmatpush1.bf16.msra.mxu0 %v1583
      %1587 = vmatprep.subr.bf16.mxu0 0
      %1588 = vmatpush1.bf16.msra.mxu0 0
      %1589 = vmatprep.subr.bf16.mxu0 0
      %1590 = vmatpush1.bf16.msra.mxu0 0
      %1591 = vmatprep.subr.bf16.mxu0 0
      %1592 = vmatpush1.bf16.msra.mxu0 0
      %1593 = vmatprep.subr.bf16.mxu0 0
      %1594 = vmatpush1.bf16.msra.mxu0 0
      %1595 = vmatprep.subr.bf16.mxu0 0
      %1596 = vmatpush1.bf16.msra.mxu0 0
      %1597 = vmatprep.subr.bf16.mxu0 0
      %1598 = vmatpush1.bf16.msra.mxu0 0
      %1599 = vmatprep.subr.bf16.mxu0 0
      %1600 = vmatpush1.bf16.msra.mxu0 0
      %1601 = vmatprep.subr.bf16.mxu0 0
      %1602 = vmatpush1.bf16.msra.mxu0 0
      %1603 = vmatprep.subr.bf16.mxu0 0
      %1604 = vmatpush1.bf16.msra.mxu0 0
      %1605 = vmatprep.subr.bf16.mxu0 0
      %1606 = vmatpush1.bf16.msra.mxu0 0
      %1607 = vmatprep.subr.bf16.mxu0 0
      %1608 = vmatpush1.bf16.msra.mxu0 0
      %1609 = vmatprep.subr.bf16.mxu0 0
      %1610 = vmatpush1.bf16.msra.mxu0 0
      %1611 = vmatprep.subr.bf16.mxu0 0
      %1612 = vmatpush1.bf16.msra.mxu0 0
      %1613 = vmatprep.subr.bf16.mxu0 0
      %1614 = vmatpush1.bf16.msra.mxu0 0
      %1615 = vmatprep.subr.bf16.mxu0 0
      %1616 = vmatpush1.bf16.msra.mxu0 0
      %1617 = vmatprep.mubr.bf16.mxu0 0
      %1618 = vmatmul.mubr.bf16.gmra.mrb[0].mxu0 %v1535
      %v1619 = vpop.f32.mrb[0].mxu0
      %v1620 = vadd.f32 0.0, %v1619
      %v1621 = vpop.f32.mrb[0].mxu0
      %v1622 = vpop.f32.mrb[0].mxu0
      %v1623 = vadd.f32 0.0, %v1622
      %v1624 = vpop.f32.mrb[0].mxu0
      %1625 = vmatprep.mubr.bf16.mxu0 0
      %1626 = vmatmul.mubr.bf16.gmra.mrb[0].mxu0 %v1538
      %v1627 = vpop.f32.mrb[0].mxu0
      %v1628 = vadd.f32 0.0, %v1627
      %v1629 = vpop.f32.mrb[0].mxu0
      %v1630 = vpop.f32.mrb[0].mxu0
      %v1631 = vadd.f32 0.0, %v1630
      %v1632 = vpop.f32.mrb[0].mxu0
      %1633 = vmatprep.mubr.bf16.mxu0 0
      %1634 = vmatmul.mubr.bf16.gmra.mrb[0].mxu0 %v1541
      %v1635 = vpop.f32.mrb[0].mxu0
      %v1636 = vadd.f32 0.0, %v1635
      %v1637 = vpop.f32.mrb[0].mxu0
      %v1638 = vpop.f32.mrb[0].mxu0
      %v1639 = vadd.f32 0.0, %v1638
      %v1640 = vpop.f32.mrb[0].mxu0
      %1641 = vmatprep.mubr.bf16.mxu0 0
      %1642 = vmatmul.mubr.bf16.gmra.mrb[0].mxu0 %v1544
      %v1643 = vpop.f32.mrb[0].mxu0
      %v1644 = vadd.f32 0.0, %v1643
      %v1645 = vpop.f32.mrb[0].mxu0
      %v1646 = vpop.f32.mrb[0].mxu0
      %v1647 = vadd.f32 0.0, %v1646
      %v1648 = vpop.f32.mrb[0].mxu0
      %1649 = vmatprep.mubr.bf16.mxu0 0
      %1650 = vmatmul.mubr.bf16.gmra.mrb[0].mxu0 %v1547
      %v1651 = vpop.f32.mrb[0].mxu0
      %v1652 = vadd.f32 0.0, %v1651
      %v1653 = vpop.f32.mrb[0].mxu0
      %v1654 = vpop.f32.mrb[0].mxu0
      %v1655 = vadd.f32 0.0, %v1654
      %v1656 = vpop.f32.mrb[0].mxu0
      %1657 = vmatprep.mubr.bf16.mxu0 0
      %1658 = vmatmul.mubr.bf16.gmra.mrb[0].mxu0 %v1550
      %v1659 = vpop.f32.mrb[0].mxu0
      %v1660 = vadd.f32 0.0, %v1659
      %v1661 = vpop.f32.mrb[0].mxu0
      %v1662 = vpop.f32.mrb[0].mxu0
      %v1663 = vadd.f32 0.0, %v1662
      %v1664 = vpop.f32.mrb[0].mxu0
      %1665 = vmatprep.mubr.bf16.mxu0 0
      %1666 = vmatmul.mubr.bf16.gmra.mrb[0].mxu0 %v1553
      %v1667 = vpop.f32.mrb[0].mxu0
      %v1668 = vadd.f32 0.0, %v1667
      %v1669 = vpop.f32.mrb[0].mxu0
      %v1670 = vpop.f32.mrb[0].mxu0
      %v1671 = vadd.f32 0.0, %v1670
      %v1672 = vpop.f32.mrb[0].mxu0
      %1673 = vmatprep.mubr.bf16.mxu0 0
      %1674 = vmatmul.mubr.bf16.gmra.mrb[0].mxu0 %v1556
      %v1675 = vpop.f32.mrb[0].mxu0
      %v1676 = vadd.f32 0.0, %v1675
      %v1677 = vpop.f32.mrb[0].mxu0
      %v1678 = vpop.f32.mrb[0].mxu0
      %v1679 = vadd.f32 0.0, %v1678
      %v1680 = vpop.f32.mrb[0].mxu0
      %1681 = vmatprep.mubr.bf16.mxu0 0
      %1682 = vmatmul.mubr.bf16.gmra.mrb[0].mxu0 %v1559
      %v1683 = vpop.f32.mrb[0].mxu0
      %v1684 = vadd.f32 0.0, %v1683
      %v1685 = vpop.f32.mrb[0].mxu0
      %v1686 = vpop.f32.mrb[0].mxu0
      %v1687 = vadd.f32 0.0, %v1686
      %v1688 = vpop.f32.mrb[0].mxu0
      %1689 = vmatprep.mubr.bf16.mxu0 0
      %1690 = vmatmul.mubr.bf16.gmra.mrb[0].mxu0 %v1562
      %v1691 = vpop.f32.mrb[0].mxu0
      %v1692 = vadd.f32 0.0, %v1691
      %v1693 = vpop.f32.mrb[0].mxu0
      %v1694 = vpop.f32.mrb[0].mxu0
      %v1695 = vadd.f32 0.0, %v1694
      %v1696 = vpop.f32.mrb[0].mxu0
      %1697 = vmatprep.mubr.bf16.mxu0 0
      %1698 = vmatmul.mubr.bf16.gmra.mrb[0].mxu0 %v1565
      %v1699 = vpop.f32.mrb[0].mxu0
      %v1700 = vadd.f32 0.0, %v1699
      %v1701 = vpop.f32.mrb[0].mxu0
      %v1702 = vpop.f32.mrb[0].mxu0
      %v1703 = vadd.f32 0.0, %v1702
      %v1704 = vpop.f32.mrb[0].mxu0
      %1705 = vmatprep.mubr.bf16.mxu0 0
      %1706 = vmatmul.mubr.bf16.gmra.mrb[0].mxu0 %v1568
      %v1707 = vpop.f32.mrb[0].mxu0
      %v1708 = vadd.f32 0.0, %v1707
      %v1709 = vpop.f32.mrb[0].mxu0
      %v1710 = vpop.f32.mrb[0].mxu0
      %v1711 = vadd.f32 0.0, %v1710
      %v1712 = vpop.f32.mrb[0].mxu0
      %1713 = vmatprep.mubr.bf16.mxu0 0
      %1714 = vmatmul.mubr.bf16.gmra.mrb[0].mxu0 %v1571
      %v1715 = vpop.f32.mrb[0].mxu0
      %v1716 = vadd.f32 0.0, %v1715
      %v1717 = vpop.f32.mrb[0].mxu0
      %v1718 = vpop.f32.mrb[0].mxu0
      %v1719 = vadd.f32 0.0, %v1718
      %v1720 = vpop.f32.mrb[0].mxu0
      %1721 = vmatprep.mubr.bf16.mxu0 0
      %1722 = vmatmul.mubr.bf16.gmra.mrb[0].mxu0 %v1574
      %v1723 = vpop.f32.mrb[0].mxu0
      %v1724 = vadd.f32 0.0, %v1723
      %v1725 = vpop.f32.mrb[0].mxu0
      %v1726 = vpop.f32.mrb[0].mxu0
      %v1727 = vadd.f32 0.0, %v1726
      %v1728 = vpop.f32.mrb[0].mxu0
      %1729 = vmatprep.mubr.bf16.mxu0 0
      %1730 = vmatmul.mubr.bf16.gmra.mrb[0].mxu0 %v1577
      %v1731 = vpop.f32.mrb[0].mxu0
      %v1732 = vadd.f32 0.0, %v1731
      %v1733 = vpop.f32.mrb[0].mxu0
      %v1734 = vpop.f32.mrb[0].mxu0
      %v1735 = vadd.f32 0.0, %v1734
      %v1736 = vpop.f32.mrb[0].mxu0
      %1737 = vmatprep.mubr.bf16.mxu0 0
      %1738 = vmatmul.mubr.bf16.gmra.mrb[0].mxu0 %v1580
      %v1739 = vpop.f32.mrb[0].mxu0
      %v1740 = vadd.f32 0.0, %v1739
      %v1741 = vpop.f32.mrb[0].mxu0
      %v1742 = vpop.f32.mrb[0].mxu0
      %v1743 = vadd.f32 0.0, %v1742
      %v1744 = vpop.f32.mrb[0].mxu0
      %1745 = vdwg.mxu0
      %v1746 = vadd.f32 %v1195, %v1620
      %v1747 = vadd.f32 %v1198, %v1623
      %v1748 = vadd.f32 %v1203, %v1628
      %v1749 = vadd.f32 %v1206, %v1631
      %v1750 = vadd.f32 %v1211, %v1636
      %v1751 = vadd.f32 %v1214, %v1639
      %v1752 = vadd.f32 %v1219, %v1644
      %v1753 = vadd.f32 %v1222, %v1647
      %v1754 = vadd.f32 %v1227, %v1652
      %v1755 = vadd.f32 %v1230, %v1655
      %v1756 = vadd.f32 %v1235, %v1660
      %v1757 = vadd.f32 %v1238, %v1663
      %v1758 = vadd.f32 %v1243, %v1668
      %v1759 = vadd.f32 %v1246, %v1671
      %v1760 = vadd.f32 %v1251, %v1676
      %v1761 = vadd.f32 %v1254, %v1679
      %v1762 = vadd.f32 %v1259, %v1684
      %v1763 = vadd.f32 %v1262, %v1687
      %v1764 = vadd.f32 %v1267, %v1692
      %v1765 = vadd.f32 %v1270, %v1695
      %v1766 = vadd.f32 %v1275, %v1700
      %v1767 = vadd.f32 %v1278, %v1703
      %v1768 = vadd.f32 %v1283, %v1708
      %v1769 = vadd.f32 %v1286, %v1711
      %v1770 = vadd.f32 %v1291, %v1716
      %v1771 = vadd.f32 %v1294, %v1719
      %v1772 = vadd.f32 %v1299, %v1724
      %v1773 = vadd.f32 %v1302, %v1727
      %v1774 = vadd.f32 %v1307, %v1732
      %v1775 = vadd.f32 %v1310, %v1735
      %v1776 = vadd.f32 %v1315, %v1740
      %v1777 = vadd.f32 %v1318, %v1743
      %s1778 = scalar_lea.vmem %s270, 12
      %v1779 = vld [vmem:[%s1778] sm:$0xf]
      %v1780 = vld [vmem:[%s1778 + $0x4] sm:$0xf]
      %v1781 = vld [vmem:[%s1778 + $0xc] sm:$0xf]
      %v1782 = vld [vmem:[%s1778 + $0x10] sm:$0xf]
      %v1783 = vld [vmem:[%s1778 + $0x18] sm:$0xf]
      %v1784 = vld [vmem:[%s1778 + $0x1c] sm:$0xf]
      %v1785 = vld [vmem:[%s1778 + $0x24] sm:$0xf]
      %v1786 = vld [vmem:[%s1778 + $0x28] sm:$0xf]
      %v1787 = vld [vmem:[%s1778 + $0x30] sm:$0xf]
      %v1788 = vld [vmem:[%s1778 + $0x34] sm:$0xf]
      %v1789 = vld [vmem:[%s1778 + $0x3c] sm:$0xf]
      %v1790 = vld [vmem:[%s1778 + $0x40] sm:$0xf]
      %v1791 = vld [vmem:[%s1778 + $0x48] sm:$0xf]
      %v1792 = vld [vmem:[%s1778 + $0x4c] sm:$0xf]
      %v1793 = vld [vmem:[%s1778 + $0x54] sm:$0xf]
      %v1794 = vld [vmem:[%s1778 + $0x58] sm:$0xf]
      %v1795 = vld [vmem:[%s1778 + $0x60] sm:$0xf]
      %v1796 = vld [vmem:[%s1778 + $0x64] sm:$0xf]
      %v1797 = vld [vmem:[%s1778 + $0x6c] sm:$0xf]
      %v1798 = vld [vmem:[%s1778 + $0x70] sm:$0xf]
      %v1799 = vld [vmem:[%s1778 + $0x78] sm:$0xf]
      %v1800 = vld [vmem:[%s1778 + $0x7c] sm:$0xf]
      %v1801 = vld [vmem:[%s1778 + $0x84] sm:$0xf]
      %v1802 = vld [vmem:[%s1778 + $0x88] sm:$0xf]
      %v1803 = vld [vmem:[%s1778 + $0x90] sm:$0xf]
      %v1804 = vld [vmem:[%s1778 + $0x94] sm:$0xf]
      %v1805 = vld [vmem:[%s1778 + $0x9c] sm:$0xf]
      %v1806 = vld [vmem:[%s1778 + $0xa0] sm:$0xf]
      %v1807 = vld [vmem:[%s1778 + $0xa8] sm:$0xf]
      %v1808 = vld [vmem:[%s1778 + $0xac] sm:$0xf]
      %v1809 = vld [vmem:[%s1778 + $0xb4] sm:$0xf]
      %v1810 = vld [vmem:[%s1778 + $0xb8] sm:$0xf]
      %s1811 = scalar_lea.vmem %s277, 6
      %v1812 = vld [vmem:[%s1811] sm:$0x3]
      %v1845 = vunpack.c.l.b16 %v1779
      %v1846 = vunpack.c.l.b16 %v1780
      %v1847 = vunpack.c.l.b16 %v1781
      %v1848 = vunpack.c.l.b16 %v1782
      %v1849 = vunpack.c.l.b16 %v1783
      %v1850 = vunpack.c.l.b16 %v1784
      %v1851 = vunpack.c.l.b16 %v1785
      %v1852 = vunpack.c.l.b16 %v1786
      %v1853 = vunpack.c.l.b16 %v1787
      %v1854 = vunpack.c.l.b16 %v1788
      %v1855 = vunpack.c.l.b16 %v1789
      %v1856 = vunpack.c.l.b16 %v1790
      %v1857 = vunpack.c.l.b16 %v1791
      %v1858 = vunpack.c.l.b16 %v1792
      %v1859 = vunpack.c.l.b16 %v1793
      %v1860 = vunpack.c.l.b16 %v1794
      %v1861 = vunpack.c.l.b16 %v1795
      %v1862 = vunpack.c.l.b16 %v1796
      %v1863 = vunpack.c.l.b16 %v1797
      %v1864 = vunpack.c.l.b16 %v1798
      %v1865 = vunpack.c.l.b16 %v1799
      %v1866 = vunpack.c.l.b16 %v1800
      %v1867 = vunpack.c.l.b16 %v1801
      %v1868 = vunpack.c.l.b16 %v1802
      %v1869 = vunpack.c.l.b16 %v1803
      %v1870 = vunpack.c.l.b16 %v1804
      %v1871 = vunpack.c.l.b16 %v1805
      %v1872 = vunpack.c.l.b16 %v1806
      %v1873 = vunpack.c.l.b16 %v1807
      %v1874 = vunpack.c.l.b16 %v1808
      %v1875 = vunpack.c.l.b16 %v1809
      %v1876 = vunpack.c.l.b16 %v1810
      %v1877 = vpack.c.b16 %v1846, %v1845
      %v1878 = vpack.c.b16 %v1848, %v1847
      %v1879 = vpack.c.b16 %v1850, %v1849
      %v1880 = vpack.c.b16 %v1852, %v1851
      %v1881 = vpack.c.b16 %v1854, %v1853
      %v1882 = vpack.c.b16 %v1856, %v1855
      %v1883 = vpack.c.b16 %v1858, %v1857
      %v1884 = vpack.c.b16 %v1860, %v1859
      %v1885 = vpack.c.b16 %v1862, %v1861
      %v1886 = vpack.c.b16 %v1864, %v1863
      %v1887 = vpack.c.b16 %v1866, %v1865
      %v1888 = vpack.c.b16 %v1868, %v1867
      %v1889 = vpack.c.b16 %v1870, %v1869
      %v1890 = vpack.c.b16 %v1872, %v1871
      %v1891 = vpack.c.b16 %v1874, %v1873
      %v1892 = vpack.c.b16 %v1876, %v1875
      %v1894 = vsel %vm815, %v1877, 0
      %v1897 = vsel %vm815, %v1878, 0
      %v1900 = vsel %vm815, %v1879, 0
      %v1903 = vsel %vm815, %v1880, 0
      %v1906 = vsel %vm815, %v1881, 0
      %v1909 = vsel %vm815, %v1882, 0
      %v1912 = vsel %vm815, %v1883, 0
      %v1915 = vsel %vm815, %v1884, 0
      %v1918 = vsel %vm815, %v1885, 0
      %v1921 = vsel %vm815, %v1886, 0
      %v1924 = vsel %vm815, %v1887, 0
      %v1927 = vsel %vm815, %v1888, 0
      %v1930 = vsel %vm815, %v1889, 0
      %v1933 = vsel %vm815, %v1890, 0
      %v1936 = vsel %vm815, %v1891, 0
      %v1939 = vsel %vm815, %v1892, 0
      %v1942 = vsel %vm864, %v1812, 0
      %1944 = vmatprep.subr.bf16.mxu0 0
      %1945 = vmatpush1.bf16.msra.mxu0 %v1942
      %1946 = vmatprep.subr.bf16.mxu0 0
      %1947 = vmatpush1.bf16.msra.mxu0 0
      %1948 = vmatprep.subr.bf16.mxu0 0
      %1949 = vmatpush1.bf16.msra.mxu0 0
      %1950 = vmatprep.subr.bf16.mxu0 0
      %1951 = vmatpush1.bf16.msra.mxu0 0
      %1952 = vmatprep.subr.bf16.mxu0 0
      %1953 = vmatpush1.bf16.msra.mxu0 0
      %1954 = vmatprep.subr.bf16.mxu0 0
      %1955 = vmatpush1.bf16.msra.mxu0 0
      %1956 = vmatprep.subr.bf16.mxu0 0
      %1957 = vmatpush1.bf16.msra.mxu0 0
      %1958 = vmatprep.subr.bf16.mxu0 0
      %1959 = vmatpush1.bf16.msra.mxu0 0
      %1960 = vmatprep.subr.bf16.mxu0 0
      %1961 = vmatpush1.bf16.msra.mxu0 0
      %1962 = vmatprep.subr.bf16.mxu0 0
      %1963 = vmatpush1.bf16.msra.mxu0 0
      %1964 = vmatprep.subr.bf16.mxu0 0
      %1965 = vmatpush1.bf16.msra.mxu0 0
      %1966 = vmatprep.subr.bf16.mxu0 0
      %1967 = vmatpush1.bf16.msra.mxu0 0
      %1968 = vmatprep.subr.bf16.mxu0 0
      %1969 = vmatpush1.bf16.msra.mxu0 0
      %1970 = vmatprep.subr.bf16.mxu0 0
      %1971 = vmatpush1.bf16.msra.mxu0 0
      %1972 = vmatprep.subr.bf16.mxu0 0
      %1973 = vmatpush1.bf16.msra.mxu0 0
      %1974 = vmatprep.subr.bf16.mxu0 0
      %1975 = vmatpush1.bf16.msra.mxu0 0
      %1976 = vmatprep.mubr.bf16.mxu0 0
      %1977 = vmatmul.mubr.bf16.gmra.mrb[0].mxu0 %v1894
      %v1978 = vpop.f32.mrb[0].mxu0
      %v1979 = vadd.f32 0.0, %v1978
      %v1980 = vpop.f32.mrb[0].mxu0
      %v1981 = vpop.f32.mrb[0].mxu0
      %v1982 = vadd.f32 0.0, %v1981
      %v1983 = vpop.f32.mrb[0].mxu0
      %1984 = vmatprep.mubr.bf16.mxu0 0
      %1985 = vmatmul.mubr.bf16.gmra.mrb[0].mxu0 %v1897
      %v1986 = vpop.f32.mrb[0].mxu0
      %v1987 = vadd.f32 0.0, %v1986
      %v1988 = vpop.f32.mrb[0].mxu0
      %v1989 = vpop.f32.mrb[0].mxu0
      %v1990 = vadd.f32 0.0, %v1989
      %v1991 = vpop.f32.mrb[0].mxu0
      %1992 = vmatprep.mubr.bf16.mxu0 0
      %1993 = vmatmul.mubr.bf16.gmra.mrb[0].mxu0 %v1900
      %v1994 = vpop.f32.mrb[0].mxu0
      %v1995 = vadd.f32 0.0, %v1994
      %v1996 = vpop.f32.mrb[0].mxu0
      %v1997 = vpop.f32.mrb[0].mxu0
      %v1998 = vadd.f32 0.0, %v1997
      %v1999 = vpop.f32.mrb[0].mxu0
      %2000 = vmatprep.mubr.bf16.mxu0 0
      %2001 = vmatmul.mubr.bf16.gmra.mrb[0].mxu0 %v1903
      %v2002 = vpop.f32.mrb[0].mxu0
      %v2003 = vadd.f32 0.0, %v2002
      %v2004 = vpop.f32.mrb[0].mxu0
      %v2005 = vpop.f32.mrb[0].mxu0
      %v2006 = vadd.f32 0.0, %v2005
      %v2007 = vpop.f32.mrb[0].mxu0
      %2008 = vmatprep.mubr.bf16.mxu0 0
      %2009 = vmatmul.mubr.bf16.gmra.mrb[0].mxu0 %v1906
      %v2010 = vpop.f32.mrb[0].mxu0
      %v2011 = vadd.f32 0.0, %v2010
      %v2012 = vpop.f32.mrb[0].mxu0
      %v2013 = vpop.f32.mrb[0].mxu0
      %v2014 = vadd.f32 0.0, %v2013
      %v2015 = vpop.f32.mrb[0].mxu0
      %2016 = vmatprep.mubr.bf16.mxu0 0
      %2017 = vmatmul.mubr.bf16.gmra.mrb[0].mxu0 %v1909
      %v2018 = vpop.f32.mrb[0].mxu0
      %v2019 = vadd.f32 0.0, %v2018
      %v2020 = vpop.f32.mrb[0].mxu0
      %v2021 = vpop.f32.mrb[0].mxu0
      %v2022 = vadd.f32 0.0, %v2021
      %v2023 = vpop.f32.mrb[0].mxu0
      %2024 = vmatprep.mubr.bf16.mxu0 0
      %2025 = vmatmul.mubr.bf16.gmra.mrb[0].mxu0 %v1912
      %v2026 = vpop.f32.mrb[0].mxu0
      %v2027 = vadd.f32 0.0, %v2026
      %v2028 = vpop.f32.mrb[0].mxu0
      %v2029 = vpop.f32.mrb[0].mxu0
      %v2030 = vadd.f32 0.0, %v2029
      %v2031 = vpop.f32.mrb[0].mxu0
      %2032 = vmatprep.mubr.bf16.mxu0 0
      %2033 = vmatmul.mubr.bf16.gmra.mrb[0].mxu0 %v1915
      %v2034 = vpop.f32.mrb[0].mxu0
      %v2035 = vadd.f32 0.0, %v2034
      %v2036 = vpop.f32.mrb[0].mxu0
      %v2037 = vpop.f32.mrb[0].mxu0
      %v2038 = vadd.f32 0.0, %v2037
      %v2039 = vpop.f32.mrb[0].mxu0
      %2040 = vmatprep.mubr.bf16.mxu0 0
      %2041 = vmatmul.mubr.bf16.gmra.mrb[0].mxu0 %v1918
      %v2042 = vpop.f32.mrb[0].mxu0
      %v2043 = vadd.f32 0.0, %v2042
      %v2044 = vpop.f32.mrb[0].mxu0
      %v2045 = vpop.f32.mrb[0].mxu0
      %v2046 = vadd.f32 0.0, %v2045
      %v2047 = vpop.f32.mrb[0].mxu0
      %2048 = vmatprep.mubr.bf16.mxu0 0
      %2049 = vmatmul.mubr.bf16.gmra.mrb[0].mxu0 %v1921
      %v2050 = vpop.f32.mrb[0].mxu0
      %v2051 = vadd.f32 0.0, %v2050
      %v2052 = vpop.f32.mrb[0].mxu0
      %v2053 = vpop.f32.mrb[0].mxu0
      %v2054 = vadd.f32 0.0, %v2053
      %v2055 = vpop.f32.mrb[0].mxu0
      %2056 = vmatprep.mubr.bf16.mxu0 0
      %2057 = vmatmul.mubr.bf16.gmra.mrb[0].mxu0 %v1924
      %v2058 = vpop.f32.mrb[0].mxu0
      %v2059 = vadd.f32 0.0, %v2058
      %v2060 = vpop.f32.mrb[0].mxu0
      %v2061 = vpop.f32.mrb[0].mxu0
      %v2062 = vadd.f32 0.0, %v2061
      %v2063 = vpop.f32.mrb[0].mxu0
      %2064 = vmatprep.mubr.bf16.mxu0 0
      %2065 = vmatmul.mubr.bf16.gmra.mrb[0].mxu0 %v1927
      %v2066 = vpop.f32.mrb[0].mxu0
      %v2067 = vadd.f32 0.0, %v2066
      %v2068 = vpop.f32.mrb[0].mxu0
      %v2069 = vpop.f32.mrb[0].mxu0
      %v2070 = vadd.f32 0.0, %v2069
      %v2071 = vpop.f32.mrb[0].mxu0
      %2072 = vmatprep.mubr.bf16.mxu0 0
      %2073 = vmatmul.mubr.bf16.gmra.mrb[0].mxu0 %v1930
      %v2074 = vpop.f32.mrb[0].mxu0
      %v2075 = vadd.f32 0.0, %v2074
      %v2076 = vpop.f32.mrb[0].mxu0
      %v2077 = vpop.f32.mrb[0].mxu0
      %v2078 = vadd.f32 0.0, %v2077
      %v2079 = vpop.f32.mrb[0].mxu0
      %2080 = vmatprep.mubr.bf16.mxu0 0
      %2081 = vmatmul.mubr.bf16.gmra.mrb[0].mxu0 %v1933
      %v2082 = vpop.f32.mrb[0].mxu0
      %v2083 = vadd.f32 0.0, %v2082
      %v2084 = vpop.f32.mrb[0].mxu0
      %v2085 = vpop.f32.mrb[0].mxu0
      %v2086 = vadd.f32 0.0, %v2085
      %v2087 = vpop.f32.mrb[0].mxu0
      %2088 = vmatprep.mubr.bf16.mxu0 0
      %2089 = vmatmul.mubr.bf16.gmra.mrb[0].mxu0 %v1936
      %v2090 = vpop.f32.mrb[0].mxu0
      %v2091 = vadd.f32 0.0, %v2090
      %v2092 = vpop.f32.mrb[0].mxu0
      %v2093 = vpop.f32.mrb[0].mxu0
      %v2094 = vadd.f32 0.0, %v2093
      %v2095 = vpop.f32.mrb[0].mxu0
      %2096 = vmatprep.mubr.bf16.mxu0 0
      %2097 = vmatmul.mubr.bf16.gmra.mrb[0].mxu0 %v1939
      %v2098 = vpop.f32.mrb[0].mxu0
      %v2099 = vadd.f32 0.0, %v2098
      %v2100 = vpop.f32.mrb[0].mxu0
      %v2101 = vpop.f32.mrb[0].mxu0
      %v2102 = vadd.f32 0.0, %v2101
      %v2103 = vpop.f32.mrb[0].mxu0
      %2104 = vdwg.mxu0
      %v2105 = vadd.f32 %v1746, %v1979
      %v2106 = vadd.f32 %v1747, %v1982
      %v2107 = vadd.f32 %v1748, %v1987
      %v2108 = vadd.f32 %v1749, %v1990
      %v2109 = vadd.f32 %v1750, %v1995
      %v2110 = vadd.f32 %v1751, %v1998
      %v2111 = vadd.f32 %v1752, %v2003
      %v2112 = vadd.f32 %v1753, %v2006
      %v2113 = vadd.f32 %v1754, %v2011
      %v2114 = vadd.f32 %v1755, %v2014
      %v2115 = vadd.f32 %v1756, %v2019
      %v2116 = vadd.f32 %v1757, %v2022
      %v2117 = vadd.f32 %v1758, %v2027
      %v2118 = vadd.f32 %v1759, %v2030
      %v2119 = vadd.f32 %v1760, %v2035
      %v2120 = vadd.f32 %v1761, %v2038
      %v2121 = vadd.f32 %v1762, %v2043
      %v2122 = vadd.f32 %v1763, %v2046
      %v2123 = vadd.f32 %v1764, %v2051
      %v2124 = vadd.f32 %v1765, %v2054
      %v2125 = vadd.f32 %v1766, %v2059
      %v2126 = vadd.f32 %v1767, %v2062
      %v2127 = vadd.f32 %v1768, %v2067
      %v2128 = vadd.f32 %v1769, %v2070
      %v2129 = vadd.f32 %v1770, %v2075
      %v2130 = vadd.f32 %v1771, %v2078
      %v2131 = vadd.f32 %v1772, %v2083
      %v2132 = vadd.f32 %v1773, %v2086
      %v2133 = vadd.f32 %v1774, %v2091
      %v2134 = vadd.f32 %v1775, %v2094
      %v2135 = vadd.f32 %v1776, %v2099
      %v2136 = vadd.f32 %v1777, %v2102
      %v2137 = vld [vmem:[%s1778] sm:$0xf]
      %v2138 = vld [vmem:[%s1778 + $0x4] sm:$0xf]
      %v2139 = vld [vmem:[%s1778 + $0x8] sm:$0x1]
      %v2140 = vld [vmem:[%s1778 + $0xc] sm:$0xf]
      %v2141 = vld [vmem:[%s1778 + $0x10] sm:$0xf]
      %v2142 = vld [vmem:[%s1778 + $0x14] sm:$0x1]
      %v2143 = vld [vmem:[%s1778 + $0x18] sm:$0xf]
      %v2144 = vld [vmem:[%s1778 + $0x1c] sm:$0xf]
      %v2145 = vld [vmem:[%s1778 + $0x20] sm:$0x1]
      %v2146 = vld [vmem:[%s1778 + $0x24] sm:$0xf]
      %v2147 = vld [vmem:[%s1778 + $0x28] sm:$0xf]
      %v2148 = vld [vmem:[%s1778 + $0x2c] sm:$0x1]
      %v2149 = vld [vmem:[%s1778 + $0x30] sm:$0xf]
      %v2150 = vld [vmem:[%s1778 + $0x34] sm:$0xf]
      %v2151 = vld [vmem:[%s1778 + $0x38] sm:$0x1]
      %v2152 = vld [vmem:[%s1778 + $0x3c] sm:$0xf]
      %v2153 = vld [vmem:[%s1778 + $0x40] sm:$0xf]
      %v2154 = vld [vmem:[%s1778 + $0x44] sm:$0x1]
      %v2155 = vld [vmem:[%s1778 + $0x48] sm:$0xf]
      %v2156 = vld [vmem:[%s1778 + $0x4c] sm:$0xf]
      %v2157 = vld [vmem:[%s1778 + $0x50] sm:$0x1]
      %v2158 = vld [vmem:[%s1778 + $0x54] sm:$0xf]
      %v2159 = vld [vmem:[%s1778 + $0x58] sm:$0xf]
      %v2160 = vld [vmem:[%s1778 + $0x5c] sm:$0x1]
      %v2161 = vld [vmem:[%s1778 + $0x60] sm:$0xf]
      %v2162 = vld [vmem:[%s1778 + $0x64] sm:$0xf]
      %v2163 = vld [vmem:[%s1778 + $0x68] sm:$0x1]
      %v2164 = vld [vmem:[%s1778 + $0x6c] sm:$0xf]
      %v2165 = vld [vmem:[%s1778 + $0x70] sm:$0xf]
      %v2166 = vld [vmem:[%s1778 + $0x74] sm:$0x1]
      %v2167 = vld [vmem:[%s1778 + $0x78] sm:$0xf]
      %v2168 = vld [vmem:[%s1778 + $0x7c] sm:$0xf]
      %v2169 = vld [vmem:[%s1778 + $0x80] sm:$0x1]
      %v2170 = vld [vmem:[%s1778 + $0x84] sm:$0xf]
      %v2171 = vld [vmem:[%s1778 + $0x88] sm:$0xf]
      %v2172 = vld [vmem:[%s1778 + $0x8c] sm:$0x1]
      %v2173 = vld [vmem:[%s1778 + $0x90] sm:$0xf]
      %v2174 = vld [vmem:[%s1778 + $0x94] sm:$0xf]
      %v2175 = vld [vmem:[%s1778 + $0x98] sm:$0x1]
      %v2176 = vld [vmem:[%s1778 + $0x9c] sm:$0xf]
      %v2177 = vld [vmem:[%s1778 + $0xa0] sm:$0xf]
      %v2178 = vld [vmem:[%s1778 + $0xa4] sm:$0x1]
      %v2179 = vld [vmem:[%s1778 + $0xa8] sm:$0xf]
      %v2180 = vld [vmem:[%s1778 + $0xac] sm:$0xf]
      %v2181 = vld [vmem:[%s1778 + $0xb0] sm:$0x1]
      %v2182 = vld [vmem:[%s1778 + $0xb4] sm:$0xf]
      %v2183 = vld [vmem:[%s1778 + $0xb8] sm:$0xf]
      %v2184 = vld [vmem:[%s1778 + $0xbc] sm:$0x1]
      %v2186 = vshrl.u32 %v2137, 16
      %v2188 = vrot.slane %v2186, 4
      %v2189 = vshll.u32 %v2137, 16
      %v2191 = vrot.slane %v2189, 5
      %v2192 = vor.u32 %v2188, %v2191
      %v2193 = vrot.slane %v2192, 4
      %v2195 = vshll.u32 %v2138, 16
      %v2197 = vrot.slane %v2195, 5
      %v2198 = vsel %vm380, %v2193, %v2197
      %v2199 = vshrl.u32 %v2138, 16
      %v2201 = vrot.slane %v2199, 4
      %v2202 = vor.u32 %v2201, %v2197
      %v2203 = vrot.slane %v2202, 4
      %v2205 = vshll.u32 %v2139, 16
      %v2207 = vrot.slane %v2205, 5
      %v2208 = vsel %vm380, %v2203, %v2207
      %v2210 = vshrl.u32 %v2140, 16
      %v2212 = vrot.slane %v2210, 4
      %v2213 = vshll.u32 %v2140, 16
      %v2215 = vrot.slane %v2213, 5
      %v2216 = vor.u32 %v2212, %v2215
      %v2217 = vrot.slane %v2216, 4
      %v2219 = vshll.u32 %v2141, 16
      %v2221 = vrot.slane %v2219, 5
      %v2222 = vsel %vm380, %v2217, %v2221
      %v2223 = vshrl.u32 %v2141, 16
      %v2225 = vrot.slane %v2223, 4
      %v2226 = vor.u32 %v2225, %v2221
      %v2227 = vrot.slane %v2226, 4
      %v2229 = vshll.u32 %v2142, 16
      %v2231 = vrot.slane %v2229, 5
      %v2232 = vsel %vm380, %v2227, %v2231
      %v2234 = vshrl.u32 %v2143, 16
      %v2236 = vrot.slane %v2234, 4
      %v2237 = vshll.u32 %v2143, 16
      %v2239 = vrot.slane %v2237, 5
      %v2240 = vor.u32 %v2236, %v2239
      %v2241 = vrot.slane %v2240, 4
      %v2243 = vshll.u32 %v2144, 16
      %v2245 = vrot.slane %v2243, 5
      %v2246 = vsel %vm380, %v2241, %v2245
      %v2247 = vshrl.u32 %v2144, 16
      %v2249 = vrot.slane %v2247, 4
      %v2250 = vor.u32 %v2249, %v2245
      %v2251 = vrot.slane %v2250, 4
      %v2253 = vshll.u32 %v2145, 16
      %v2255 = vrot.slane %v2253, 5
      %v2256 = vsel %vm380, %v2251, %v2255
      %v2258 = vshrl.u32 %v2146, 16
      %v2260 = vrot.slane %v2258, 4
      %v2261 = vshll.u32 %v2146, 16
      %v2263 = vrot.slane %v2261, 5
      %v2264 = vor.u32 %v2260, %v2263
      %v2265 = vrot.slane %v2264, 4
      %v2267 = vshll.u32 %v2147, 16
      %v2269 = vrot.slane %v2267, 5
      %v2270 = vsel %vm380, %v2265, %v2269
      %v2271 = vshrl.u32 %v2147, 16
      %v2273 = vrot.slane %v2271, 4
      %v2274 = vor.u32 %v2273, %v2269
      %v2275 = vrot.slane %v2274, 4
      %v2277 = vshll.u32 %v2148, 16
      %v2279 = vrot.slane %v2277, 5
      %v2280 = vsel %vm380, %v2275, %v2279
      %v2282 = vshrl.u32 %v2149, 16
      %v2284 = vrot.slane %v2282, 4
      %v2285 = vshll.u32 %v2149, 16
      %v2287 = vrot.slane %v2285, 5
      %v2288 = vor.u32 %v2284, %v2287
      %v2289 = vrot.slane %v2288, 4
      %v2291 = vshll.u32 %v2150, 16
      %v2293 = vrot.slane %v2291, 5
      %v2294 = vsel %vm380, %v2289, %v2293
      %v2295 = vshrl.u32 %v2150, 16
      %v2297 = vrot.slane %v2295, 4
      %v2298 = vor.u32 %v2297, %v2293
      %v2299 = vrot.slane %v2298, 4
      %v2301 = vshll.u32 %v2151, 16
      %v2303 = vrot.slane %v2301, 5
      %v2304 = vsel %vm380, %v2299, %v2303
      %v2306 = vshrl.u32 %v2152, 16
      %v2308 = vrot.slane %v2306, 4
      %v2309 = vshll.u32 %v2152, 16
      %v2311 = vrot.slane %v2309, 5
      %v2312 = vor.u32 %v2308, %v2311
      %v2313 = vrot.slane %v2312, 4
      %v2315 = vshll.u32 %v2153, 16
      %v2317 = vrot.slane %v2315, 5
      %v2318 = vsel %vm380, %v2313, %v2317
      %v2319 = vshrl.u32 %v2153, 16
      %v2321 = vrot.slane %v2319, 4
      %v2322 = vor.u32 %v2321, %v2317
      %v2323 = vrot.slane %v2322, 4
      %v2325 = vshll.u32 %v2154, 16
      %v2327 = vrot.slane %v2325, 5
      %v2328 = vsel %vm380, %v2323, %v2327
      %v2330 = vshrl.u32 %v2155, 16
      %v2332 = vrot.slane %v2330, 4
      %v2333 = vshll.u32 %v2155, 16
      %v2335 = vrot.slane %v2333, 5
      %v2336 = vor.u32 %v2332, %v2335
      %v2337 = vrot.slane %v2336, 4
      %v2339 = vshll.u32 %v2156, 16
      %v2341 = vrot.slane %v2339, 5
      %v2342 = vsel %vm380, %v2337, %v2341
      %v2343 = vshrl.u32 %v2156, 16
      %v2345 = vrot.slane %v2343, 4
      %v2346 = vor.u32 %v2345, %v2341
      %v2347 = vrot.slane %v2346, 4
      %v2349 = vshll.u32 %v2157, 16
      %v2351 = vrot.slane %v2349, 5
      %v2352 = vsel %vm380, %v2347, %v2351
      %v2354 = vshrl.u32 %v2158, 16
      %v2356 = vrot.slane %v2354, 4
      %v2357 = vshll.u32 %v2158, 16
      %v2359 = vrot.slane %v2357, 5
      %v2360 = vor.u32 %v2356, %v2359
      %v2361 = vrot.slane %v2360, 4
      %v2363 = vshll.u32 %v2159, 16
      %v2365 = vrot.slane %v2363, 5
      %v2366 = vsel %vm380, %v2361, %v2365
      %v2367 = vshrl.u32 %v2159, 16
      %v2369 = vrot.slane %v2367, 4
      %v2370 = vor.u32 %v2369, %v2365
      %v2371 = vrot.slane %v2370, 4
      %v2373 = vshll.u32 %v2160, 16
      %v2375 = vrot.slane %v2373, 5
      %v2376 = vsel %vm380, %v2371, %v2375
      %v2378 = vshrl.u32 %v2161, 16
      %v2380 = vrot.slane %v2378, 4
      %v2381 = vshll.u32 %v2161, 16
      %v2383 = vrot.slane %v2381, 5
      %v2384 = vor.u32 %v2380, %v2383
      %v2385 = vrot.slane %v2384, 4
      %v2387 = vshll.u32 %v2162, 16
      %v2389 = vrot.slane %v2387, 5
      %v2390 = vsel %vm380, %v2385, %v2389
      %v2391 = vshrl.u32 %v2162, 16
      %v2393 = vrot.slane %v2391, 4
      %v2394 = vor.u32 %v2393, %v2389
      %v2395 = vrot.slane %v2394, 4
      %v2397 = vshll.u32 %v2163, 16
      %v2399 = vrot.slane %v2397, 5
      %v2400 = vsel %vm380, %v2395, %v2399
      %v2402 = vshrl.u32 %v2164, 16
      %v2404 = vrot.slane %v2402, 4
      %v2405 = vshll.u32 %v2164, 16
      %v2407 = vrot.slane %v2405, 5
      %v2408 = vor.u32 %v2404, %v2407
      %v2409 = vrot.slane %v2408, 4
      %v2411 = vshll.u32 %v2165, 16
      %v2413 = vrot.slane %v2411, 5
      %v2414 = vsel %vm380, %v2409, %v2413
      %v2415 = vshrl.u32 %v2165, 16
      %v2417 = vrot.slane %v2415, 4
      %v2418 = vor.u32 %v2417, %v2413
      %v2419 = vrot.slane %v2418, 4
      %v2421 = vshll.u32 %v2166, 16
      %v2423 = vrot.slane %v2421, 5
      %v2424 = vsel %vm380, %v2419, %v2423
      %v2426 = vshrl.u32 %v2167, 16
      %v2428 = vrot.slane %v2426, 4
      %v2429 = vshll.u32 %v2167, 16
      %v2431 = vrot.slane %v2429, 5
      %v2432 = vor.u32 %v2428, %v2431
      %v2433 = vrot.slane %v2432, 4
      %v2435 = vshll.u32 %v2168, 16
      %v2437 = vrot.slane %v2435, 5
      %v2438 = vsel %vm380, %v2433, %v2437
      %v2439 = vshrl.u32 %v2168, 16
      %v2441 = vrot.slane %v2439, 4
      %v2442 = vor.u32 %v2441, %v2437
      %v2443 = vrot.slane %v2442, 4
      %v2445 = vshll.u32 %v2169, 16
      %v2447 = vrot.slane %v2445, 5
      %v2448 = vsel %vm380, %v2443, %v2447
      %v2450 = vshrl.u32 %v2170, 16
      %v2452 = vrot.slane %v2450, 4
      %v2453 = vshll.u32 %v2170, 16
      %v2455 = vrot.slane %v2453, 5
      %v2456 = vor.u32 %v2452, %v2455
      %v2457 = vrot.slane %v2456, 4
      %v2459 = vshll.u32 %v2171, 16
      %v2461 = vrot.slane %v2459, 5
      %v2462 = vsel %vm380, %v2457, %v2461
      %v2463 = vshrl.u32 %v2171, 16
      %v2465 = vrot.slane %v2463, 4
      %v2466 = vor.u32 %v2465, %v2461
      %v2467 = vrot.slane %v2466, 4
      %v2469 = vshll.u32 %v2172, 16
      %v2471 = vrot.slane %v2469, 5
      %v2472 = vsel %vm380, %v2467, %v2471
      %v2474 = vshrl.u32 %v2173, 16
      %v2476 = vrot.slane %v2474, 4
      %v2477 = vshll.u32 %v2173, 16
      %v2479 = vrot.slane %v2477, 5
      %v2480 = vor.u32 %v2476, %v2479
      %v2481 = vrot.slane %v2480, 4
      %v2483 = vshll.u32 %v2174, 16
      %v2485 = vrot.slane %v2483, 5
      %v2486 = vsel %vm380, %v2481, %v2485
      %v2487 = vshrl.u32 %v2174, 16
      %v2489 = vrot.slane %v2487, 4
      %v2490 = vor.u32 %v2489, %v2485
      %v2491 = vrot.slane %v2490, 4
      %v2493 = vshll.u32 %v2175, 16
      %v2495 = vrot.slane %v2493, 5
      %v2496 = vsel %vm380, %v2491, %v2495
      %v2498 = vshrl.u32 %v2176, 16
      %v2500 = vrot.slane %v2498, 4
      %v2501 = vshll.u32 %v2176, 16
      %v2503 = vrot.slane %v2501, 5
      %v2504 = vor.u32 %v2500, %v2503
      %v2505 = vrot.slane %v2504, 4
      %v2507 = vshll.u32 %v2177, 16
      %v2509 = vrot.slane %v2507, 5
      %v2510 = vsel %vm380, %v2505, %v2509
      %v2511 = vshrl.u32 %v2177, 16
      %v2513 = vrot.slane %v2511, 4
      %v2514 = vor.u32 %v2513, %v2509
      %v2515 = vrot.slane %v2514, 4
      %v2517 = vshll.u32 %v2178, 16
      %v2519 = vrot.slane %v2517, 5
      %v2520 = vsel %vm380, %v2515, %v2519
      %v2522 = vshrl.u32 %v2179, 16
      %v2524 = vrot.slane %v2522, 4
      %v2525 = vshll.u32 %v2179, 16
      %v2527 = vrot.slane %v2525, 5
      %v2528 = vor.u32 %v2524, %v2527
      %v2529 = vrot.slane %v2528, 4
      %v2531 = vshll.u32 %v2180, 16
      %v2533 = vrot.slane %v2531, 5
      %v2534 = vsel %vm380, %v2529, %v2533
      %v2535 = vshrl.u32 %v2180, 16
      %v2537 = vrot.slane %v2535, 4
      %v2538 = vor.u32 %v2537, %v2533
      %v2539 = vrot.slane %v2538, 4
      %v2541 = vshll.u32 %v2181, 16
      %v2543 = vrot.slane %v2541, 5
      %v2544 = vsel %vm380, %v2539, %v2543
      %v2546 = vshrl.u32 %v2182, 16
      %v2548 = vrot.slane %v2546, 4
      %v2549 = vshll.u32 %v2182, 16
      %v2551 = vrot.slane %v2549, 5
      %v2552 = vor.u32 %v2548, %v2551
      %v2553 = vrot.slane %v2552, 4
      %v2555 = vshll.u32 %v2183, 16
      %v2557 = vrot.slane %v2555, 5
      %v2558 = vsel %vm380, %v2553, %v2557
      %v2559 = vshrl.u32 %v2183, 16
      %v2561 = vrot.slane %v2559, 4
      %v2562 = vor.u32 %v2561, %v2557
      %v2563 = vrot.slane %v2562, 4
      %v2565 = vshll.u32 %v2184, 16
      %v2567 = vrot.slane %v2565, 5
      %v2568 = vsel %vm380, %v2563, %v2567
      %s2569 = scalar_lea.vmem %s277, 8
      %v2570 = vld [vmem:[%s2569] sm:$0x3]
      %v2571 = vunpack.c.l.b16 %v2198
      %v2572 = vunpack.c.l.b16 %v2208
      %v2573 = vunpack.c.l.b16 %v2222
      %v2574 = vunpack.c.l.b16 %v2232
      %v2575 = vunpack.c.l.b16 %v2246
      %v2576 = vunpack.c.l.b16 %v2256
      %v2577 = vunpack.c.l.b16 %v2270
      %v2578 = vunpack.c.l.b16 %v2280
      %v2579 = vunpack.c.l.b16 %v2294
      %v2580 = vunpack.c.l.b16 %v2304
      %v2581 = vunpack.c.l.b16 %v2318
      %v2582 = vunpack.c.l.b16 %v2328
      %v2583 = vunpack.c.l.b16 %v2342
      %v2584 = vunpack.c.l.b16 %v2352
      %v2585 = vunpack.c.l.b16 %v2366
      %v2586 = vunpack.c.l.b16 %v2376
      %v2587 = vunpack.c.l.b16 %v2390
      %v2588 = vunpack.c.l.b16 %v2400
      %v2589 = vunpack.c.l.b16 %v2414
      %v2590 = vunpack.c.l.b16 %v2424
      %v2591 = vunpack.c.l.b16 %v2438
      %v2592 = vunpack.c.l.b16 %v2448
      %v2593 = vunpack.c.l.b16 %v2462
      %v2594 = vunpack.c.l.b16 %v2472
      %v2595 = vunpack.c.l.b16 %v2486
      %v2596 = vunpack.c.l.b16 %v2496
      %v2597 = vunpack.c.l.b16 %v2510
      %v2598 = vunpack.c.l.b16 %v2520
      %v2599 = vunpack.c.l.b16 %v2534
      %v2600 = vunpack.c.l.b16 %v2544
      %v2601 = vunpack.c.l.b16 %v2558
      %v2602 = vunpack.c.l.b16 %v2568
      %v2603 = vpack.c.b16 %v2572, %v2571
      %v2604 = vpack.c.b16 %v2574, %v2573
      %v2605 = vpack.c.b16 %v2576, %v2575
      %v2606 = vpack.c.b16 %v2578, %v2577
      %v2607 = vpack.c.b16 %v2580, %v2579
      %v2608 = vpack.c.b16 %v2582, %v2581
      %v2609 = vpack.c.b16 %v2584, %v2583
      %v2610 = vpack.c.b16 %v2586, %v2585
      %v2611 = vpack.c.b16 %v2588, %v2587
      %v2612 = vpack.c.b16 %v2590, %v2589
      %v2613 = vpack.c.b16 %v2592, %v2591
      %v2614 = vpack.c.b16 %v2594, %v2593
      %v2615 = vpack.c.b16 %v2596, %v2595
      %v2616 = vpack.c.b16 %v2598, %v2597
      %v2617 = vpack.c.b16 %v2600, %v2599
      %v2618 = vpack.c.b16 %v2602, %v2601
      %v2620 = vsel %vm815, %v2603, 0
      %v2623 = vsel %vm815, %v2604, 0
      %v2626 = vsel %vm815, %v2605, 0
      %v2629 = vsel %vm815, %v2606, 0
      %v2632 = vsel %vm815, %v2607, 0
      %v2635 = vsel %vm815, %v2608, 0
      %v2638 = vsel %vm815, %v2609, 0
      %v2641 = vsel %vm815, %v2610, 0
      %v2644 = vsel %vm815, %v2611, 0
      %v2647 = vsel %vm815, %v2612, 0
      %v2650 = vsel %vm815, %v2613, 0
      %v2653 = vsel %vm815, %v2614, 0
      %v2656 = vsel %vm815, %v2615, 0
      %v2659 = vsel %vm815, %v2616, 0
      %v2662 = vsel %vm815, %v2617, 0
      %v2665 = vsel %vm815, %v2618, 0
      %v2668 = vsel %vm864, %v2570, 0
      %2670 = vmatprep.subr.bf16.mxu0 0
      %2671 = vmatpush1.bf16.msra.mxu0 %v2668
      %2672 = vmatprep.subr.bf16.mxu0 0
      %2673 = vmatpush1.bf16.msra.mxu0 0
      %2674 = vmatprep.subr.bf16.mxu0 0
      %2675 = vmatpush1.bf16.msra.mxu0 0
      %2676 = vmatprep.subr.bf16.mxu0 0
      %2677 = vmatpush1.bf16.msra.mxu0 0
      %2678 = vmatprep.subr.bf16.mxu0 0
      %2679 = vmatpush1.bf16.msra.mxu0 0
      %2680 = vmatprep.subr.bf16.mxu0 0
      %2681 = vmatpush1.bf16.msra.mxu0 0
      %2682 = vmatprep.subr.bf16.mxu0 0
      %2683 = vmatpush1.bf16.msra.mxu0 0
      %2684 = vmatprep.subr.bf16.mxu0 0
      %2685 = vmatpush1.bf16.msra.mxu0 0
      %2686 = vmatprep.subr.bf16.mxu0 0
      %2687 = vmatpush1.bf16.msra.mxu0 0
      %2688 = vmatprep.subr.bf16.mxu0 0
      %2689 = vmatpush1.bf16.msra.mxu0 0
      %2690 = vmatprep.subr.bf16.mxu0 0
      %2691 = vmatpush1.bf16.msra.mxu0 0
      %2692 = vmatprep.subr.bf16.mxu0 0
      %2693 = vmatpush1.bf16.msra.mxu0 0
      %2694 = vmatprep.subr.bf16.mxu0 0
      %2695 = vmatpush1.bf16.msra.mxu0 0
      %2696 = vmatprep.subr.bf16.mxu0 0
      %2697 = vmatpush1.bf16.msra.mxu0 0
      %2698 = vmatprep.subr.bf16.mxu0 0
      %2699 = vmatpush1.bf16.msra.mxu0 0
      %2700 = vmatprep.subr.bf16.mxu0 0
      %2701 = vmatpush1.bf16.msra.mxu0 0
      %2702 = vmatprep.mubr.bf16.mxu0 0
      %2703 = vmatmul.mubr.bf16.gmra.mrb[0].mxu0 %v2620
      %v2704 = vpop.f32.mrb[0].mxu0
      %v2705 = vadd.f32 0.0, %v2704
      %v2706 = vpop.f32.mrb[0].mxu0
      %v2707 = vpop.f32.mrb[0].mxu0
      %v2708 = vadd.f32 0.0, %v2707
      %v2709 = vpop.f32.mrb[0].mxu0
      %2710 = vmatprep.mubr.bf16.mxu0 0
      %2711 = vmatmul.mubr.bf16.gmra.mrb[0].mxu0 %v2623
      %v2712 = vpop.f32.mrb[0].mxu0
      %v2713 = vadd.f32 0.0, %v2712
      %v2714 = vpop.f32.mrb[0].mxu0
      %v2715 = vpop.f32.mrb[0].mxu0
      %v2716 = vadd.f32 0.0, %v2715
      %v2717 = vpop.f32.mrb[0].mxu0
      %2718 = vmatprep.mubr.bf16.mxu0 0
      %2719 = vmatmul.mubr.bf16.gmra.mrb[0].mxu0 %v2626
      %v2720 = vpop.f32.mrb[0].mxu0
      %v2721 = vadd.f32 0.0, %v2720
      %v2722 = vpop.f32.mrb[0].mxu0
      %v2723 = vpop.f32.mrb[0].mxu0
      %v2724 = vadd.f32 0.0, %v2723
      %v2725 = vpop.f32.mrb[0].mxu0
      %2726 = vmatprep.mubr.bf16.mxu0 0
      %2727 = vmatmul.mubr.bf16.gmra.mrb[0].mxu0 %v2629
      %v2728 = vpop.f32.mrb[0].mxu0
      %v2729 = vadd.f32 0.0, %v2728
      %v2730 = vpop.f32.mrb[0].mxu0
      %v2731 = vpop.f32.mrb[0].mxu0
      %v2732 = vadd.f32 0.0, %v2731
      %v2733 = vpop.f32.mrb[0].mxu0
      %2734 = vmatprep.mubr.bf16.mxu0 0
      %2735 = vmatmul.mubr.bf16.gmra.mrb[0].mxu0 %v2632
      %v2736 = vpop.f32.mrb[0].mxu0
      %v2737 = vadd.f32 0.0, %v2736
      %v2738 = vpop.f32.mrb[0].mxu0
      %v2739 = vpop.f32.mrb[0].mxu0
      %v2740 = vadd.f32 0.0, %v2739
      %v2741 = vpop.f32.mrb[0].mxu0
      %2742 = vmatprep.mubr.bf16.mxu0 0
      %2743 = vmatmul.mubr.bf16.gmra.mrb[0].mxu0 %v2635
      %v2744 = vpop.f32.mrb[0].mxu0
      %v2745 = vadd.f32 0.0, %v2744
      %v2746 = vpop.f32.mrb[0].mxu0
      %v2747 = vpop.f32.mrb[0].mxu0
      %v2748 = vadd.f32 0.0, %v2747
      %v2749 = vpop.f32.mrb[0].mxu0
      %2750 = vmatprep.mubr.bf16.mxu0 0
      %2751 = vmatmul.mubr.bf16.gmra.mrb[0].mxu0 %v2638
      %v2752 = vpop.f32.mrb[0].mxu0
      %v2753 = vadd.f32 0.0, %v2752
      %v2754 = vpop.f32.mrb[0].mxu0
      %v2755 = vpop.f32.mrb[0].mxu0
      %v2756 = vadd.f32 0.0, %v2755
      %v2757 = vpop.f32.mrb[0].mxu0
      %2758 = vmatprep.mubr.bf16.mxu0 0
      %2759 = vmatmul.mubr.bf16.gmra.mrb[0].mxu0 %v2641
      %v2760 = vpop.f32.mrb[0].mxu0
      %v2761 = vadd.f32 0.0, %v2760
      %v2762 = vpop.f32.mrb[0].mxu0
      %v2763 = vpop.f32.mrb[0].mxu0
      %v2764 = vadd.f32 0.0, %v2763
      %v2765 = vpop.f32.mrb[0].mxu0
      %2766 = vmatprep.mubr.bf16.mxu0 0
      %2767 = vmatmul.mubr.bf16.gmra.mrb[0].mxu0 %v2644
      %v2768 = vpop.f32.mrb[0].mxu0
      %v2769 = vadd.f32 0.0, %v2768
      %v2770 = vpop.f32.mrb[0].mxu0
      %v2771 = vpop.f32.mrb[0].mxu0
      %v2772 = vadd.f32 0.0, %v2771
      %v2773 = vpop.f32.mrb[0].mxu0
      %2774 = vmatprep.mubr.bf16.mxu0 0
      %2775 = vmatmul.mubr.bf16.gmra.mrb[0].mxu0 %v2647
      %v2776 = vpop.f32.mrb[0].mxu0
      %v2777 = vadd.f32 0.0, %v2776
      %v2778 = vpop.f32.mrb[0].mxu0
      %v2779 = vpop.f32.mrb[0].mxu0
      %v2780 = vadd.f32 0.0, %v2779
      %v2781 = vpop.f32.mrb[0].mxu0
      %2782 = vmatprep.mubr.bf16.mxu0 0
      %2783 = vmatmul.mubr.bf16.gmra.mrb[0].mxu0 %v2650
      %v2784 = vpop.f32.mrb[0].mxu0
      %v2785 = vadd.f32 0.0, %v2784
      %v2786 = vpop.f32.mrb[0].mxu0
      %v2787 = vpop.f32.mrb[0].mxu0
      %v2788 = vadd.f32 0.0, %v2787
      %v2789 = vpop.f32.mrb[0].mxu0
      %2790 = vmatprep.mubr.bf16.mxu0 0
      %2791 = vmatmul.mubr.bf16.gmra.mrb[0].mxu0 %v2653
      %v2792 = vpop.f32.mrb[0].mxu0
      %v2793 = vadd.f32 0.0, %v2792
      %v2794 = vpop.f32.mrb[0].mxu0
      %v2795 = vpop.f32.mrb[0].mxu0
      %v2796 = vadd.f32 0.0, %v2795
      %v2797 = vpop.f32.mrb[0].mxu0
      %2798 = vmatprep.mubr.bf16.mxu0 0
      %2799 = vmatmul.mubr.bf16.gmra.mrb[0].mxu0 %v2656
      %v2800 = vpop.f32.mrb[0].mxu0
      %v2801 = vadd.f32 0.0, %v2800
      %v2802 = vpop.f32.mrb[0].mxu0
      %v2803 = vpop.f32.mrb[0].mxu0
      %v2804 = vadd.f32 0.0, %v2803
      %v2805 = vpop.f32.mrb[0].mxu0
      %2806 = vmatprep.mubr.bf16.mxu0 0
      %2807 = vmatmul.mubr.bf16.gmra.mrb[0].mxu0 %v2659
      %v2808 = vpop.f32.mrb[0].mxu0
      %v2809 = vadd.f32 0.0, %v2808
      %v2810 = vpop.f32.mrb[0].mxu0
      %v2811 = vpop.f32.mrb[0].mxu0
      %v2812 = vadd.f32 0.0, %v2811
      %v2813 = vpop.f32.mrb[0].mxu0
      %2814 = vmatprep.mubr.bf16.mxu0 0
      %2815 = vmatmul.mubr.bf16.gmra.mrb[0].mxu0 %v2662
      %v2816 = vpop.f32.mrb[0].mxu0
      %v2817 = vadd.f32 0.0, %v2816
      %v2818 = vpop.f32.mrb[0].mxu0
      %v2819 = vpop.f32.mrb[0].mxu0
      %v2820 = vadd.f32 0.0, %v2819
      %v2821 = vpop.f32.mrb[0].mxu0
      %2822 = vmatprep.mubr.bf16.mxu0 0
      %2823 = vmatmul.mubr.bf16.gmra.mrb[0].mxu0 %v2665
      %v2824 = vpop.f32.mrb[0].mxu0
      %v2825 = vadd.f32 0.0, %v2824
      %v2826 = vpop.f32.mrb[0].mxu0
      %v2827 = vpop.f32.mrb[0].mxu0
      %v2828 = vadd.f32 0.0, %v2827
      %v2829 = vpop.f32.mrb[0].mxu0
      %2830 = vdwg.mxu0
      %v2831 = vadd.f32 %v2105, %v2705
      %v2832 = vadd.f32 %v2106, %v2708
      %v2833 = vadd.f32 %v2107, %v2713
      %v2834 = vadd.f32 %v2108, %v2716
      %v2835 = vadd.f32 %v2109, %v2721
      %v2836 = vadd.f32 %v2110, %v2724
      %v2837 = vadd.f32 %v2111, %v2729
      %v2838 = vadd.f32 %v2112, %v2732
      %v2839 = vadd.f32 %v2113, %v2737
      %v2840 = vadd.f32 %v2114, %v2740
      %v2841 = vadd.f32 %v2115, %v2745
      %v2842 = vadd.f32 %v2116, %v2748
      %v2843 = vadd.f32 %v2117, %v2753
      %v2844 = vadd.f32 %v2118, %v2756
      %v2845 = vadd.f32 %v2119, %v2761
      %v2846 = vadd.f32 %v2120, %v2764
      %v2847 = vadd.f32 %v2121, %v2769
      %v2848 = vadd.f32 %v2122, %v2772
      %v2849 = vadd.f32 %v2123, %v2777
      %v2850 = vadd.f32 %v2124, %v2780
      %v2851 = vadd.f32 %v2125, %v2785
      %v2852 = vadd.f32 %v2126, %v2788
      %v2853 = vadd.f32 %v2127, %v2793
      %v2854 = vadd.f32 %v2128, %v2796
      %v2855 = vadd.f32 %v2129, %v2801
      %v2856 = vadd.f32 %v2130, %v2804
      %v2857 = vadd.f32 %v2131, %v2809
      %v2858 = vadd.f32 %v2132, %v2812
      %v2859 = vadd.f32 %v2133, %v2817
      %v2860 = vadd.f32 %v2134, %v2820
      %v2861 = vadd.f32 %v2135, %v2825
      %v2862 = vadd.f32 %v2136, %v2828
      %v2863 = vld [vmem:[%s1778] sm:$0xe]
      %v2864 = vld [vmem:[%s1778 + $0xc] sm:$0xe]
      %v2865 = vld [vmem:[%s1778 + $0x18] sm:$0xe]
      %v2866 = vld [vmem:[%s1778 + $0x24] sm:$0xe]
      %v2867 = vld [vmem:[%s1778 + $0x30] sm:$0xe]
      %v2868 = vld [vmem:[%s1778 + $0x3c] sm:$0xe]
      %v2869 = vld [vmem:[%s1778 + $0x48] sm:$0xe]
      %v2870 = vld [vmem:[%s1778 + $0x54] sm:$0xe]
      %v2871 = vld [vmem:[%s1778 + $0x60] sm:$0xe]
      %v2872 = vld [vmem:[%s1778 + $0x6c] sm:$0xe]
      %v2873 = vld [vmem:[%s1778 + $0x78] sm:$0xe]
      %v2874 = vld [vmem:[%s1778 + $0x84] sm:$0xe]
      %v2875 = vld [vmem:[%s1778 + $0x90] sm:$0xe]
      %v2876 = vld [vmem:[%s1778 + $0x9c] sm:$0xe]
      %v2877 = vld [vmem:[%s1778 + $0xa8] sm:$0xe]
      %v2878 = vld [vmem:[%s1778 + $0xb4] sm:$0xe]
      %v2927 = vrot.slane %v2863, 5
      %v2928 = vrot.slane %v2927, 4
      %v2929 = vrot.slane %v2138, 5
      %v2930 = vsel %vm1371, %v2928, %v2929
      %v2931 = vrot.slane %v2929, 4
      %v2932 = vrot.slane %v2139, 5
      %v2933 = vsel %vm1371, %v2931, %v2932
      %v2934 = vrot.slane %v2864, 5
      %v2935 = vrot.slane %v2934, 4
      %v2936 = vrot.slane %v2141, 5
      %v2937 = vsel %vm1371, %v2935, %v2936
      %v2938 = vrot.slane %v2936, 4
      %v2939 = vrot.slane %v2142, 5
      %v2940 = vsel %vm1371, %v2938, %v2939
      %v2941 = vrot.slane %v2865, 5
      %v2942 = vrot.slane %v2941, 4
      %v2943 = vrot.slane %v2144, 5
      %v2944 = vsel %vm1371, %v2942, %v2943
      %v2945 = vrot.slane %v2943, 4
      %v2946 = vrot.slane %v2145, 5
      %v2947 = vsel %vm1371, %v2945, %v2946
      %v2948 = vrot.slane %v2866, 5
      %v2949 = vrot.slane %v2948, 4
      %v2950 = vrot.slane %v2147, 5
      %v2951 = vsel %vm1371, %v2949, %v2950
      %v2952 = vrot.slane %v2950, 4
      %v2953 = vrot.slane %v2148, 5
      %v2954 = vsel %vm1371, %v2952, %v2953
      %v2955 = vrot.slane %v2867, 5
      %v2956 = vrot.slane %v2955, 4
      %v2957 = vrot.slane %v2150, 5
      %v2958 = vsel %vm1371, %v2956, %v2957
      %v2959 = vrot.slane %v2957, 4
      %v2960 = vrot.slane %v2151, 5
      %v2961 = vsel %vm1371, %v2959, %v2960
      %v2962 = vrot.slane %v2868, 5
      %v2963 = vrot.slane %v2962, 4
      %v2964 = vrot.slane %v2153, 5
      %v2965 = vsel %vm1371, %v2963, %v2964
      %v2966 = vrot.slane %v2964, 4
      %v2967 = vrot.slane %v2154, 5
      %v2968 = vsel %vm1371, %v2966, %v2967
      %v2969 = vrot.slane %v2869, 5
      %v2970 = vrot.slane %v2969, 4
      %v2971 = vrot.slane %v2156, 5
      %v2972 = vsel %vm1371, %v2970, %v2971
      %v2973 = vrot.slane %v2971, 4
      %v2974 = vrot.slane %v2157, 5
      %v2975 = vsel %vm1371, %v2973, %v2974
      %v2976 = vrot.slane %v2870, 5
      %v2977 = vrot.slane %v2976, 4
      %v2978 = vrot.slane %v2159, 5
      %v2979 = vsel %vm1371, %v2977, %v2978
      %v2980 = vrot.slane %v2978, 4
      %v2981 = vrot.slane %v2160, 5
      %v2982 = vsel %vm1371, %v2980, %v2981
      %v2983 = vrot.slane %v2871, 5
      %v2984 = vrot.slane %v2983, 4
      %v2985 = vrot.slane %v2162, 5
      %v2986 = vsel %vm1371, %v2984, %v2985
      %v2987 = vrot.slane %v2985, 4
      %v2988 = vrot.slane %v2163, 5
      %v2989 = vsel %vm1371, %v2987, %v2988
      %v2990 = vrot.slane %v2872, 5
      %v2991 = vrot.slane %v2990, 4
      %v2992 = vrot.slane %v2165, 5
      %v2993 = vsel %vm1371, %v2991, %v2992
      %v2994 = vrot.slane %v2992, 4
      %v2995 = vrot.slane %v2166, 5
      %v2996 = vsel %vm1371, %v2994, %v2995
      %v2997 = vrot.slane %v2873, 5
      %v2998 = vrot.slane %v2997, 4
      %v2999 = vrot.slane %v2168, 5
      %v3000 = vsel %vm1371, %v2998, %v2999
      %v3001 = vrot.slane %v2999, 4
      %v3002 = vrot.slane %v2169, 5
      %v3003 = vsel %vm1371, %v3001, %v3002
      %v3004 = vrot.slane %v2874, 5
      %v3005 = vrot.slane %v3004, 4
      %v3006 = vrot.slane %v2171, 5
      %v3007 = vsel %vm1371, %v3005, %v3006
      %v3008 = vrot.slane %v3006, 4
      %v3009 = vrot.slane %v2172, 5
      %v3010 = vsel %vm1371, %v3008, %v3009
      %v3011 = vrot.slane %v2875, 5
      %v3012 = vrot.slane %v3011, 4
      %v3013 = vrot.slane %v2174, 5
      %v3014 = vsel %vm1371, %v3012, %v3013
      %v3015 = vrot.slane %v3013, 4
      %v3016 = vrot.slane %v2175, 5
      %v3017 = vsel %vm1371, %v3015, %v3016
      %v3018 = vrot.slane %v2876, 5
      %v3019 = vrot.slane %v3018, 4
      %v3020 = vrot.slane %v2177, 5
      %v3021 = vsel %vm1371, %v3019, %v3020
      %v3022 = vrot.slane %v3020, 4
      %v3023 = vrot.slane %v2178, 5
      %v3024 = vsel %vm1371, %v3022, %v3023
      %v3025 = vrot.slane %v2877, 5
      %v3026 = vrot.slane %v3025, 4
      %v3027 = vrot.slane %v2180, 5
      %v3028 = vsel %vm1371, %v3026, %v3027
      %v3029 = vrot.slane %v3027, 4
      %v3030 = vrot.slane %v2181, 5
      %v3031 = vsel %vm1371, %v3029, %v3030
      %v3032 = vrot.slane %v2878, 5
      %v3033 = vrot.slane %v3032, 4
      %v3034 = vrot.slane %v2183, 5
      %v3035 = vsel %vm1371, %v3033, %v3034
      %v3036 = vrot.slane %v3034, 4
      %v3037 = vrot.slane %v2184, 5
      %v3038 = vsel %vm1371, %v3036, %v3037
      %s3039 = scalar_lea.vmem %s277, 10
      %v3040 = vld [vmem:[%s3039] sm:$0x3]
      %v3041 = vunpack.c.l.b16 %v2930
      %v3042 = vunpack.c.l.b16 %v2933
      %v3043 = vunpack.c.l.b16 %v2937
      %v3044 = vunpack.c.l.b16 %v2940
      %v3045 = vunpack.c.l.b16 %v2944
      %v3046 = vunpack.c.l.b16 %v2947
      %v3047 = vunpack.c.l.b16 %v2951
      %v3048 = vunpack.c.l.b16 %v2954
      %v3049 = vunpack.c.l.b16 %v2958
      %v3050 = vunpack.c.l.b16 %v2961
      %v3051 = vunpack.c.l.b16 %v2965
      %v3052 = vunpack.c.l.b16 %v2968
      %v3053 = vunpack.c.l.b16 %v2972
      %v3054 = vunpack.c.l.b16 %v2975
      %v3055 = vunpack.c.l.b16 %v2979
      %v3056 = vunpack.c.l.b16 %v2982
      %v3057 = vunpack.c.l.b16 %v2986
      %v3058 = vunpack.c.l.b16 %v2989
      %v3059 = vunpack.c.l.b16 %v2993
      %v3060 = vunpack.c.l.b16 %v2996
      %v3061 = vunpack.c.l.b16 %v3000
      %v3062 = vunpack.c.l.b16 %v3003
      %v3063 = vunpack.c.l.b16 %v3007
      %v3064 = vunpack.c.l.b16 %v3010
      %v3065 = vunpack.c.l.b16 %v3014
      %v3066 = vunpack.c.l.b16 %v3017
      %v3067 = vunpack.c.l.b16 %v3021
      %v3068 = vunpack.c.l.b16 %v3024
      %v3069 = vunpack.c.l.b16 %v3028
      %v3070 = vunpack.c.l.b16 %v3031
      %v3071 = vunpack.c.l.b16 %v3035
      %v3072 = vunpack.c.l.b16 %v3038
      %v3073 = vpack.c.b16 %v3042, %v3041
      %v3074 = vpack.c.b16 %v3044, %v3043
      %v3075 = vpack.c.b16 %v3046, %v3045
      %v3076 = vpack.c.b16 %v3048, %v3047
      %v3077 = vpack.c.b16 %v3050, %v3049
      %v3078 = vpack.c.b16 %v3052, %v3051
      %v3079 = vpack.c.b16 %v3054, %v3053
      %v3080 = vpack.c.b16 %v3056, %v3055
      %v3081 = vpack.c.b16 %v3058, %v3057
      %v3082 = vpack.c.b16 %v3060, %v3059
      %v3083 = vpack.c.b16 %v3062, %v3061
      %v3084 = vpack.c.b16 %v3064, %v3063
      %v3085 = vpack.c.b16 %v3066, %v3065
      %v3086 = vpack.c.b16 %v3068, %v3067
      %v3087 = vpack.c.b16 %v3070, %v3069
      %v3088 = vpack.c.b16 %v3072, %v3071
      %v3090 = vsel %vm815, %v3073, 0
      %v3093 = vsel %vm815, %v3074, 0
      %v3096 = vsel %vm815, %v3075, 0
      %v3099 = vsel %vm815, %v3076, 0
      %v3102 = vsel %vm815, %v3077, 0
      %v3105 = vsel %vm815, %v3078, 0
      %v3108 = vsel %vm815, %v3079, 0
      %v3111 = vsel %vm815, %v3080, 0
      %v3114 = vsel %vm815, %v3081, 0
      %v3117 = vsel %vm815, %v3082, 0
      %v3120 = vsel %vm815, %v3083, 0
      %v3123 = vsel %vm815, %v3084, 0
      %v3126 = vsel %vm815, %v3085, 0
      %v3129 = vsel %vm815, %v3086, 0
      %v3132 = vsel %vm815, %v3087, 0
      %v3135 = vsel %vm815, %v3088, 0
      %v3138 = vsel %vm864, %v3040, 0
      %3140 = vmatprep.subr.bf16.mxu0 0
      %3141 = vmatpush1.bf16.msra.mxu0 %v3138
      %3142 = vmatprep.subr.bf16.mxu0 0
      %3143 = vmatpush1.bf16.msra.mxu0 0
      %3144 = vmatprep.subr.bf16.mxu0 0
      %3145 = vmatpush1.bf16.msra.mxu0 0
      %3146 = vmatprep.subr.bf16.mxu0 0
      %3147 = vmatpush1.bf16.msra.mxu0 0
      %3148 = vmatprep.subr.bf16.mxu0 0
      %3149 = vmatpush1.bf16.msra.mxu0 0
      %3150 = vmatprep.subr.bf16.mxu0 0
      %3151 = vmatpush1.bf16.msra.mxu0 0
      %3152 = vmatprep.subr.bf16.mxu0 0
      %3153 = vmatpush1.bf16.msra.mxu0 0
      %3154 = vmatprep.subr.bf16.mxu0 0
      %3155 = vmatpush1.bf16.msra.mxu0 0
      %3156 = vmatprep.subr.bf16.mxu0 0
      %3157 = vmatpush1.bf16.msra.mxu0 0
      %3158 = vmatprep.subr.bf16.mxu0 0
      %3159 = vmatpush1.bf16.msra.mxu0 0
      %3160 = vmatprep.subr.bf16.mxu0 0
      %3161 = vmatpush1.bf16.msra.mxu0 0
      %3162 = vmatprep.subr.bf16.mxu0 0
      %3163 = vmatpush1.bf16.msra.mxu0 0
      %3164 = vmatprep.subr.bf16.mxu0 0
      %3165 = vmatpush1.bf16.msra.mxu0 0
      %3166 = vmatprep.subr.bf16.mxu0 0
      %3167 = vmatpush1.bf16.msra.mxu0 0
      %3168 = vmatprep.subr.bf16.mxu0 0
      %3169 = vmatpush1.bf16.msra.mxu0 0
      %3170 = vmatprep.subr.bf16.mxu0 0
      %3171 = vmatpush1.bf16.msra.mxu0 0
      %3172 = vmatprep.mubr.bf16.mxu0 0
      %3173 = vmatmul.mubr.bf16.gmra.mrb[0].mxu0 %v3090
      %v3174 = vpop.f32.mrb[0].mxu0
      %v3175 = vadd.f32 0.0, %v3174
      %v3176 = vpop.f32.mrb[0].mxu0
      %v3177 = vpop.f32.mrb[0].mxu0
      %v3178 = vadd.f32 0.0, %v3177
      %v3179 = vpop.f32.mrb[0].mxu0
      %3180 = vmatprep.mubr.bf16.mxu0 0
      %3181 = vmatmul.mubr.bf16.gmra.mrb[0].mxu0 %v3093
      %v3182 = vpop.f32.mrb[0].mxu0
      %v3183 = vadd.f32 0.0, %v3182
      %v3184 = vpop.f32.mrb[0].mxu0
      %v3185 = vpop.f32.mrb[0].mxu0
      %v3186 = vadd.f32 0.0, %v3185
      %v3187 = vpop.f32.mrb[0].mxu0
      %3188 = vmatprep.mubr.bf16.mxu0 0
      %3189 = vmatmul.mubr.bf16.gmra.mrb[0].mxu0 %v3096
      %v3190 = vpop.f32.mrb[0].mxu0
      %v3191 = vadd.f32 0.0, %v3190
      %v3192 = vpop.f32.mrb[0].mxu0
      %v3193 = vpop.f32.mrb[0].mxu0
      %v3194 = vadd.f32 0.0, %v3193
      %v3195 = vpop.f32.mrb[0].mxu0
      %3196 = vmatprep.mubr.bf16.mxu0 0
      %3197 = vmatmul.mubr.bf16.gmra.mrb[0].mxu0 %v3099
      %v3198 = vpop.f32.mrb[0].mxu0
      %v3199 = vadd.f32 0.0, %v3198
      %v3200 = vpop.f32.mrb[0].mxu0
      %v3201 = vpop.f32.mrb[0].mxu0
      %v3202 = vadd.f32 0.0, %v3201
      %v3203 = vpop.f32.mrb[0].mxu0
      %3204 = vmatprep.mubr.bf16.mxu0 0
      %3205 = vmatmul.mubr.bf16.gmra.mrb[0].mxu0 %v3102
      %v3206 = vpop.f32.mrb[0].mxu0
      %v3207 = vadd.f32 0.0, %v3206
      %v3208 = vpop.f32.mrb[0].mxu0
      %v3209 = vpop.f32.mrb[0].mxu0
      %v3210 = vadd.f32 0.0, %v3209
      %v3211 = vpop.f32.mrb[0].mxu0
      %3212 = vmatprep.mubr.bf16.mxu0 0
      %3213 = vmatmul.mubr.bf16.gmra.mrb[0].mxu0 %v3105
      %v3214 = vpop.f32.mrb[0].mxu0
      %v3215 = vadd.f32 0.0, %v3214
      %v3216 = vpop.f32.mrb[0].mxu0
      %v3217 = vpop.f32.mrb[0].mxu0
      %v3218 = vadd.f32 0.0, %v3217
      %v3219 = vpop.f32.mrb[0].mxu0
      %3220 = vmatprep.mubr.bf16.mxu0 0
      %3221 = vmatmul.mubr.bf16.gmra.mrb[0].mxu0 %v3108
      %v3222 = vpop.f32.mrb[0].mxu0
      %v3223 = vadd.f32 0.0, %v3222
      %v3224 = vpop.f32.mrb[0].mxu0
      %v3225 = vpop.f32.mrb[0].mxu0
      %v3226 = vadd.f32 0.0, %v3225
      %v3227 = vpop.f32.mrb[0].mxu0
      %3228 = vmatprep.mubr.bf16.mxu0 0
      %3229 = vmatmul.mubr.bf16.gmra.mrb[0].mxu0 %v3111
      %v3230 = vpop.f32.mrb[0].mxu0
      %v3231 = vadd.f32 0.0, %v3230
      %v3232 = vpop.f32.mrb[0].mxu0
      %v3233 = vpop.f32.mrb[0].mxu0
      %v3234 = vadd.f32 0.0, %v3233
      %v3235 = vpop.f32.mrb[0].mxu0
      %3236 = vmatprep.mubr.bf16.mxu0 0
      %3237 = vmatmul.mubr.bf16.gmra.mrb[0].mxu0 %v3114
      %v3238 = vpop.f32.mrb[0].mxu0
      %v3239 = vadd.f32 0.0, %v3238
      %v3240 = vpop.f32.mrb[0].mxu0
      %v3241 = vpop.f32.mrb[0].mxu0
      %v3242 = vadd.f32 0.0, %v3241
      %v3243 = vpop.f32.mrb[0].mxu0
      %3244 = vmatprep.mubr.bf16.mxu0 0
      %3245 = vmatmul.mubr.bf16.gmra.mrb[0].mxu0 %v3117
      %v3246 = vpop.f32.mrb[0].mxu0
      %v3247 = vadd.f32 0.0, %v3246
      %v3248 = vpop.f32.mrb[0].mxu0
      %v3249 = vpop.f32.mrb[0].mxu0
      %v3250 = vadd.f32 0.0, %v3249
      %v3251 = vpop.f32.mrb[0].mxu0
      %3252 = vmatprep.mubr.bf16.mxu0 0
      %3253 = vmatmul.mubr.bf16.gmra.mrb[0].mxu0 %v3120
      %v3254 = vpop.f32.mrb[0].mxu0
      %v3255 = vadd.f32 0.0, %v3254
      %v3256 = vpop.f32.mrb[0].mxu0
      %v3257 = vpop.f32.mrb[0].mxu0
      %v3258 = vadd.f32 0.0, %v3257
      %v3259 = vpop.f32.mrb[0].mxu0
      %3260 = vmatprep.mubr.bf16.mxu0 0
      %3261 = vmatmul.mubr.bf16.gmra.mrb[0].mxu0 %v3123
      %v3262 = vpop.f32.mrb[0].mxu0
      %v3263 = vadd.f32 0.0, %v3262
      %v3264 = vpop.f32.mrb[0].mxu0
      %v3265 = vpop.f32.mrb[0].mxu0
      %v3266 = vadd.f32 0.0, %v3265
      %v3267 = vpop.f32.mrb[0].mxu0
      %3268 = vmatprep.mubr.bf16.mxu0 0
      %3269 = vmatmul.mubr.bf16.gmra.mrb[0].mxu0 %v3126
      %v3270 = vpop.f32.mrb[0].mxu0
      %v3271 = vadd.f32 0.0, %v3270
      %v3272 = vpop.f32.mrb[0].mxu0
      %v3273 = vpop.f32.mrb[0].mxu0
      %v3274 = vadd.f32 0.0, %v3273
      %v3275 = vpop.f32.mrb[0].mxu0
      %3276 = vmatprep.mubr.bf16.mxu0 0
      %3277 = vmatmul.mubr.bf16.gmra.mrb[0].mxu0 %v3129
      %v3278 = vpop.f32.mrb[0].mxu0
      %v3279 = vadd.f32 0.0, %v3278
      %v3280 = vpop.f32.mrb[0].mxu0
      %v3281 = vpop.f32.mrb[0].mxu0
      %v3282 = vadd.f32 0.0, %v3281
      %v3283 = vpop.f32.mrb[0].mxu0
      %3284 = vmatprep.mubr.bf16.mxu0 0
      %3285 = vmatmul.mubr.bf16.gmra.mrb[0].mxu0 %v3132
      %v3286 = vpop.f32.mrb[0].mxu0
      %v3287 = vadd.f32 0.0, %v3286
      %v3288 = vpop.f32.mrb[0].mxu0
      %v3289 = vpop.f32.mrb[0].mxu0
      %v3290 = vadd.f32 0.0, %v3289
      %v3291 = vpop.f32.mrb[0].mxu0
      %3292 = vmatprep.mubr.bf16.mxu0 0
      %3293 = vmatmul.mubr.bf16.gmra.mrb[0].mxu0 %v3135
      %v3294 = vpop.f32.mrb[0].mxu0
      %v3295 = vadd.f32 0.0, %v3294
      %v3296 = vpop.f32.mrb[0].mxu0
      %v3297 = vpop.f32.mrb[0].mxu0
      %v3298 = vadd.f32 0.0, %v3297
      %v3299 = vpop.f32.mrb[0].mxu0
      %3300 = vdwg.mxu0
      %v3301 = vadd.f32 %v2831, %v3175
      %v3302 = vadd.f32 %v2832, %v3178
      %v3303 = vadd.f32 %v2833, %v3183
      %v3304 = vadd.f32 %v2834, %v3186
      %v3305 = vadd.f32 %v2835, %v3191
      %v3306 = vadd.f32 %v2836, %v3194
      %v3307 = vadd.f32 %v2837, %v3199
      %v3308 = vadd.f32 %v2838, %v3202
      %v3309 = vadd.f32 %v2839, %v3207
      %v3310 = vadd.f32 %v2840, %v3210
      %v3311 = vadd.f32 %v2841, %v3215
      %v3312 = vadd.f32 %v2842, %v3218
      %v3313 = vadd.f32 %v2843, %v3223
      %v3314 = vadd.f32 %v2844, %v3226
      %v3315 = vadd.f32 %v2845, %v3231
      %v3316 = vadd.f32 %v2846, %v3234
      %v3317 = vadd.f32 %v2847, %v3239
      %v3318 = vadd.f32 %v2848, %v3242
      %v3319 = vadd.f32 %v2849, %v3247
      %v3320 = vadd.f32 %v2850, %v3250
      %v3321 = vadd.f32 %v2851, %v3255
      %v3322 = vadd.f32 %v2852, %v3258
      %v3323 = vadd.f32 %v2853, %v3263
      %v3324 = vadd.f32 %v2854, %v3266
      %v3325 = vadd.f32 %v2855, %v3271
      %v3326 = vadd.f32 %v2856, %v3274
      %v3327 = vadd.f32 %v2857, %v3279
      %v3328 = vadd.f32 %v2858, %v3282
      %v3329 = vadd.f32 %v2859, %v3287
      %v3330 = vadd.f32 %v2860, %v3290
      %v3331 = vadd.f32 %v2861, %v3295
      %v3332 = vadd.f32 %v2862, %v3298
      %s3333 = scalar_lea.vmem %s270, 24
      %v3334 = vld [vmem:[%s3333] sm:$0xf]
      %v3335 = vld [vmem:[%s3333 + $0x4] sm:$0xf]
      %v3336 = vld [vmem:[%s3333 + $0xc] sm:$0xf]
      %v3337 = vld [vmem:[%s3333 + $0x10] sm:$0xf]
      %v3338 = vld [vmem:[%s3333 + $0x18] sm:$0xf]
      %v3339 = vld [vmem:[%s3333 + $0x1c] sm:$0xf]
      %v3340 = vld [vmem:[%s3333 + $0x24] sm:$0xf]
      %v3341 = vld [vmem:[%s3333 + $0x28] sm:$0xf]
      %v3342 = vld [vmem:[%s3333 + $0x30] sm:$0xf]
      %v3343 = vld [vmem:[%s3333 + $0x34] sm:$0xf]
      %v3344 = vld [vmem:[%s3333 + $0x3c] sm:$0xf]
      %v3345 = vld [vmem:[%s3333 + $0x40] sm:$0xf]
      %v3346 = vld [vmem:[%s3333 + $0x48] sm:$0xf]
      %v3347 = vld [vmem:[%s3333 + $0x4c] sm:$0xf]
      %v3348 = vld [vmem:[%s3333 + $0x54] sm:$0xf]
      %v3349 = vld [vmem:[%s3333 + $0x58] sm:$0xf]
      %v3350 = vld [vmem:[%s3333 + $0x60] sm:$0xf]
      %v3351 = vld [vmem:[%s3333 + $0x64] sm:$0xf]
      %v3352 = vld [vmem:[%s3333 + $0x6c] sm:$0xf]
      %v3353 = vld [vmem:[%s3333 + $0x70] sm:$0xf]
      %v3354 = vld [vmem:[%s3333 + $0x78] sm:$0xf]
      %v3355 = vld [vmem:[%s3333 + $0x7c] sm:$0xf]
      %v3356 = vld [vmem:[%s3333 + $0x84] sm:$0xf]
      %v3357 = vld [vmem:[%s3333 + $0x88] sm:$0xf]
      %v3358 = vld [vmem:[%s3333 + $0x90] sm:$0xf]
      %v3359 = vld [vmem:[%s3333 + $0x94] sm:$0xf]
      %v3360 = vld [vmem:[%s3333 + $0x9c] sm:$0xf]
      %v3361 = vld [vmem:[%s3333 + $0xa0] sm:$0xf]
      %v3362 = vld [vmem:[%s3333 + $0xa8] sm:$0xf]
      %v3363 = vld [vmem:[%s3333 + $0xac] sm:$0xf]
      %v3364 = vld [vmem:[%s3333 + $0xb4] sm:$0xf]
      %v3365 = vld [vmem:[%s3333 + $0xb8] sm:$0xf]
      %s3366 = scalar_lea.vmem %s277, 12
      %v3367 = vld [vmem:[%s3366] sm:$0x3]
      %v3400 = vunpack.c.l.b16 %v3334
      %v3401 = vunpack.c.l.b16 %v3335
      %v3402 = vunpack.c.l.b16 %v3336
      %v3403 = vunpack.c.l.b16 %v3337
      %v3404 = vunpack.c.l.b16 %v3338
      %v3405 = vunpack.c.l.b16 %v3339
      %v3406 = vunpack.c.l.b16 %v3340
      %v3407 = vunpack.c.l.b16 %v3341
      %v3408 = vunpack.c.l.b16 %v3342
      %v3409 = vunpack.c.l.b16 %v3343
      %v3410 = vunpack.c.l.b16 %v3344
      %v3411 = vunpack.c.l.b16 %v3345
      %v3412 = vunpack.c.l.b16 %v3346
      %v3413 = vunpack.c.l.b16 %v3347
      %v3414 = vunpack.c.l.b16 %v3348
      %v3415 = vunpack.c.l.b16 %v3349
      %v3416 = vunpack.c.l.b16 %v3350
      %v3417 = vunpack.c.l.b16 %v3351
      %v3418 = vunpack.c.l.b16 %v3352
      %v3419 = vunpack.c.l.b16 %v3353
      %v3420 = vunpack.c.l.b16 %v3354
      %v3421 = vunpack.c.l.b16 %v3355
      %v3422 = vunpack.c.l.b16 %v3356
      %v3423 = vunpack.c.l.b16 %v3357
      %v3424 = vunpack.c.l.b16 %v3358
      %v3425 = vunpack.c.l.b16 %v3359
      %v3426 = vunpack.c.l.b16 %v3360
      %v3427 = vunpack.c.l.b16 %v3361
      %v3428 = vunpack.c.l.b16 %v3362
      %v3429 = vunpack.c.l.b16 %v3363
      %v3430 = vunpack.c.l.b16 %v3364
      %v3431 = vunpack.c.l.b16 %v3365
      %v3432 = vpack.c.b16 %v3401, %v3400
      %v3433 = vpack.c.b16 %v3403, %v3402
      %v3434 = vpack.c.b16 %v3405, %v3404
      %v3435 = vpack.c.b16 %v3407, %v3406
      %v3436 = vpack.c.b16 %v3409, %v3408
      %v3437 = vpack.c.b16 %v3411, %v3410
      %v3438 = vpack.c.b16 %v3413, %v3412
      %v3439 = vpack.c.b16 %v3415, %v3414
      %v3440 = vpack.c.b16 %v3417, %v3416
      %v3441 = vpack.c.b16 %v3419, %v3418
      %v3442 = vpack.c.b16 %v3421, %v3420
      %v3443 = vpack.c.b16 %v3423, %v3422
      %v3444 = vpack.c.b16 %v3425, %v3424
      %v3445 = vpack.c.b16 %v3427, %v3426
      %v3446 = vpack.c.b16 %v3429, %v3428
      %v3447 = vpack.c.b16 %v3431, %v3430
      %v3449 = vsel %vm815, %v3432, 0
      %v3452 = vsel %vm815, %v3433, 0
      %v3455 = vsel %vm815, %v3434, 0
      %v3458 = vsel %vm815, %v3435, 0
      %v3461 = vsel %vm815, %v3436, 0
      %v3464 = vsel %vm815, %v3437, 0
      %v3467 = vsel %vm815, %v3438, 0
      %v3470 = vsel %vm815, %v3439, 0
      %v3473 = vsel %vm815, %v3440, 0
      %v3476 = vsel %vm815, %v3441, 0
      %v3479 = vsel %vm815, %v3442, 0
      %v3482 = vsel %vm815, %v3443, 0
      %v3485 = vsel %vm815, %v3444, 0
      %v3488 = vsel %vm815, %v3445, 0
      %v3491 = vsel %vm815, %v3446, 0
      %v3494 = vsel %vm815, %v3447, 0
      %v3497 = vsel %vm864, %v3367, 0
      %3499 = vmatprep.subr.bf16.mxu0 0
      %3500 = vmatpush1.bf16.msra.mxu0 %v3497
      %3501 = vmatprep.subr.bf16.mxu0 0
      %3502 = vmatpush1.bf16.msra.mxu0 0
      %3503 = vmatprep.subr.bf16.mxu0 0
      %3504 = vmatpush1.bf16.msra.mxu0 0
      %3505 = vmatprep.subr.bf16.mxu0 0
      %3506 = vmatpush1.bf16.msra.mxu0 0
      %3507 = vmatprep.subr.bf16.mxu0 0
      %3508 = vmatpush1.bf16.msra.mxu0 0
      %3509 = vmatprep.subr.bf16.mxu0 0
      %3510 = vmatpush1.bf16.msra.mxu0 0
      %3511 = vmatprep.subr.bf16.mxu0 0
      %3512 = vmatpush1.bf16.msra.mxu0 0
      %3513 = vmatprep.subr.bf16.mxu0 0
      %3514 = vmatpush1.bf16.msra.mxu0 0
      %3515 = vmatprep.subr.bf16.mxu0 0
      %3516 = vmatpush1.bf16.msra.mxu0 0
      %3517 = vmatprep.subr.bf16.mxu0 0
      %3518 = vmatpush1.bf16.msra.mxu0 0
      %3519 = vmatprep.subr.bf16.mxu0 0
      %3520 = vmatpush1.bf16.msra.mxu0 0
      %3521 = vmatprep.subr.bf16.mxu0 0
      %3522 = vmatpush1.bf16.msra.mxu0 0
      %3523 = vmatprep.subr.bf16.mxu0 0
      %3524 = vmatpush1.bf16.msra.mxu0 0
      %3525 = vmatprep.subr.bf16.mxu0 0
      %3526 = vmatpush1.bf16.msra.mxu0 0
      %3527 = vmatprep.subr.bf16.mxu0 0
      %3528 = vmatpush1.bf16.msra.mxu0 0
      %3529 = vmatprep.subr.bf16.mxu0 0
      %3530 = vmatpush1.bf16.msra.mxu0 0
      %3531 = vmatprep.mubr.bf16.mxu0 0
      %3532 = vmatmul.mubr.bf16.gmra.mrb[0].mxu0 %v3449
      %v3533 = vpop.f32.mrb[0].mxu0
      %v3534 = vadd.f32 0.0, %v3533
      %v3535 = vpop.f32.mrb[0].mxu0
      %v3536 = vpop.f32.mrb[0].mxu0
      %v3537 = vadd.f32 0.0, %v3536
      %v3538 = vpop.f32.mrb[0].mxu0
      %3539 = vmatprep.mubr.bf16.mxu0 0
      %3540 = vmatmul.mubr.bf16.gmra.mrb[0].mxu0 %v3452
      %v3541 = vpop.f32.mrb[0].mxu0
      %v3542 = vadd.f32 0.0, %v3541
      %v3543 = vpop.f32.mrb[0].mxu0
      %v3544 = vpop.f32.mrb[0].mxu0
      %v3545 = vadd.f32 0.0, %v3544
      %v3546 = vpop.f32.mrb[0].mxu0
      %3547 = vmatprep.mubr.bf16.mxu0 0
      %3548 = vmatmul.mubr.bf16.gmra.mrb[0].mxu0 %v3455
      %v3549 = vpop.f32.mrb[0].mxu0
      %v3550 = vadd.f32 0.0, %v3549
      %v3551 = vpop.f32.mrb[0].mxu0
      %v3552 = vpop.f32.mrb[0].mxu0
      %v3553 = vadd.f32 0.0, %v3552
      %v3554 = vpop.f32.mrb[0].mxu0
      %3555 = vmatprep.mubr.bf16.mxu0 0
      %3556 = vmatmul.mubr.bf16.gmra.mrb[0].mxu0 %v3458
      %v3557 = vpop.f32.mrb[0].mxu0
      %v3558 = vadd.f32 0.0, %v3557
      %v3559 = vpop.f32.mrb[0].mxu0
      %v3560 = vpop.f32.mrb[0].mxu0
      %v3561 = vadd.f32 0.0, %v3560
      %v3562 = vpop.f32.mrb[0].mxu0
      %3563 = vmatprep.mubr.bf16.mxu0 0
      %3564 = vmatmul.mubr.bf16.gmra.mrb[0].mxu0 %v3461
      %v3565 = vpop.f32.mrb[0].mxu0
      %v3566 = vadd.f32 0.0, %v3565
      %v3567 = vpop.f32.mrb[0].mxu0
      %v3568 = vpop.f32.mrb[0].mxu0
      %v3569 = vadd.f32 0.0, %v3568
      %v3570 = vpop.f32.mrb[0].mxu0
      %3571 = vmatprep.mubr.bf16.mxu0 0
      %3572 = vmatmul.mubr.bf16.gmra.mrb[0].mxu0 %v3464
      %v3573 = vpop.f32.mrb[0].mxu0
      %v3574 = vadd.f32 0.0, %v3573
      %v3575 = vpop.f32.mrb[0].mxu0
      %v3576 = vpop.f32.mrb[0].mxu0
      %v3577 = vadd.f32 0.0, %v3576
      %v3578 = vpop.f32.mrb[0].mxu0
      %3579 = vmatprep.mubr.bf16.mxu0 0
      %3580 = vmatmul.mubr.bf16.gmra.mrb[0].mxu0 %v3467
      %v3581 = vpop.f32.mrb[0].mxu0
      %v3582 = vadd.f32 0.0, %v3581
      %v3583 = vpop.f32.mrb[0].mxu0
      %v3584 = vpop.f32.mrb[0].mxu0
      %v3585 = vadd.f32 0.0, %v3584
      %v3586 = vpop.f32.mrb[0].mxu0
      %3587 = vmatprep.mubr.bf16.mxu0 0
      %3588 = vmatmul.mubr.bf16.gmra.mrb[0].mxu0 %v3470
      %v3589 = vpop.f32.mrb[0].mxu0
      %v3590 = vadd.f32 0.0, %v3589
      %v3591 = vpop.f32.mrb[0].mxu0
      %v3592 = vpop.f32.mrb[0].mxu0
      %v3593 = vadd.f32 0.0, %v3592
      %v3594 = vpop.f32.mrb[0].mxu0
      %3595 = vmatprep.mubr.bf16.mxu0 0
      %3596 = vmatmul.mubr.bf16.gmra.mrb[0].mxu0 %v3473
      %v3597 = vpop.f32.mrb[0].mxu0
      %v3598 = vadd.f32 0.0, %v3597
      %v3599 = vpop.f32.mrb[0].mxu0
      %v3600 = vpop.f32.mrb[0].mxu0
      %v3601 = vadd.f32 0.0, %v3600
      %v3602 = vpop.f32.mrb[0].mxu0
      %3603 = vmatprep.mubr.bf16.mxu0 0
      %3604 = vmatmul.mubr.bf16.gmra.mrb[0].mxu0 %v3476
      %v3605 = vpop.f32.mrb[0].mxu0
      %v3606 = vadd.f32 0.0, %v3605
      %v3607 = vpop.f32.mrb[0].mxu0
      %v3608 = vpop.f32.mrb[0].mxu0
      %v3609 = vadd.f32 0.0, %v3608
      %v3610 = vpop.f32.mrb[0].mxu0
      %3611 = vmatprep.mubr.bf16.mxu0 0
      %3612 = vmatmul.mubr.bf16.gmra.mrb[0].mxu0 %v3479
      %v3613 = vpop.f32.mrb[0].mxu0
      %v3614 = vadd.f32 0.0, %v3613
      %v3615 = vpop.f32.mrb[0].mxu0
      %v3616 = vpop.f32.mrb[0].mxu0
      %v3617 = vadd.f32 0.0, %v3616
      %v3618 = vpop.f32.mrb[0].mxu0
      %3619 = vmatprep.mubr.bf16.mxu0 0
      %3620 = vmatmul.mubr.bf16.gmra.mrb[0].mxu0 %v3482
      %v3621 = vpop.f32.mrb[0].mxu0
      %v3622 = vadd.f32 0.0, %v3621
      %v3623 = vpop.f32.mrb[0].mxu0
      %v3624 = vpop.f32.mrb[0].mxu0
      %v3625 = vadd.f32 0.0, %v3624
      %v3626 = vpop.f32.mrb[0].mxu0
      %3627 = vmatprep.mubr.bf16.mxu0 0
      %3628 = vmatmul.mubr.bf16.gmra.mrb[0].mxu0 %v3485
      %v3629 = vpop.f32.mrb[0].mxu0
      %v3630 = vadd.f32 0.0, %v3629
      %v3631 = vpop.f32.mrb[0].mxu0
      %v3632 = vpop.f32.mrb[0].mxu0
      %v3633 = vadd.f32 0.0, %v3632
      %v3634 = vpop.f32.mrb[0].mxu0
      %3635 = vmatprep.mubr.bf16.mxu0 0
      %3636 = vmatmul.mubr.bf16.gmra.mrb[0].mxu0 %v3488
      %v3637 = vpop.f32.mrb[0].mxu0
      %v3638 = vadd.f32 0.0, %v3637
      %v3639 = vpop.f32.mrb[0].mxu0
      %v3640 = vpop.f32.mrb[0].mxu0
      %v3641 = vadd.f32 0.0, %v3640
      %v3642 = vpop.f32.mrb[0].mxu0
      %3643 = vmatprep.mubr.bf16.mxu0 0
      %3644 = vmatmul.mubr.bf16.gmra.mrb[0].mxu0 %v3491
      %v3645 = vpop.f32.mrb[0].mxu0
      %v3646 = vadd.f32 0.0, %v3645
      %v3647 = vpop.f32.mrb[0].mxu0
      %v3648 = vpop.f32.mrb[0].mxu0
      %v3649 = vadd.f32 0.0, %v3648
      %v3650 = vpop.f32.mrb[0].mxu0
      %3651 = vmatprep.mubr.bf16.mxu0 0
      %3652 = vmatmul.mubr.bf16.gmra.mrb[0].mxu0 %v3494
      %v3653 = vpop.f32.mrb[0].mxu0
      %v3654 = vadd.f32 0.0, %v3653
      %v3655 = vpop.f32.mrb[0].mxu0
      %v3656 = vpop.f32.mrb[0].mxu0
      %v3657 = vadd.f32 0.0, %v3656
      %v3658 = vpop.f32.mrb[0].mxu0
      %3659 = vdwg.mxu0
      %v3660 = vadd.f32 %v3301, %v3534
      %v3661 = vadd.f32 %v3302, %v3537
      %v3662 = vadd.f32 %v3303, %v3542
      %v3663 = vadd.f32 %v3304, %v3545
      %v3664 = vadd.f32 %v3305, %v3550
      %v3665 = vadd.f32 %v3306, %v3553
      %v3666 = vadd.f32 %v3307, %v3558
      %v3667 = vadd.f32 %v3308, %v3561
      %v3668 = vadd.f32 %v3309, %v3566
      %v3669 = vadd.f32 %v3310, %v3569
      %v3670 = vadd.f32 %v3311, %v3574
      %v3671 = vadd.f32 %v3312, %v3577
      %v3672 = vadd.f32 %v3313, %v3582
      %v3673 = vadd.f32 %v3314, %v3585
      %v3674 = vadd.f32 %v3315, %v3590
      %v3675 = vadd.f32 %v3316, %v3593
      %v3676 = vadd.f32 %v3317, %v3598
      %v3677 = vadd.f32 %v3318, %v3601
      %v3678 = vadd.f32 %v3319, %v3606
      %v3679 = vadd.f32 %v3320, %v3609
      %v3680 = vadd.f32 %v3321, %v3614
      %v3681 = vadd.f32 %v3322, %v3617
      %v3682 = vadd.f32 %v3323, %v3622
      %v3683 = vadd.f32 %v3324, %v3625
      %v3684 = vadd.f32 %v3325, %v3630
      %v3685 = vadd.f32 %v3326, %v3633
      %v3686 = vadd.f32 %v3327, %v3638
      %v3687 = vadd.f32 %v3328, %v3641
      %v3688 = vadd.f32 %v3329, %v3646
      %v3689 = vadd.f32 %v3330, %v3649
      %v3690 = vadd.f32 %v3331, %v3654
      %v3691 = vadd.f32 %v3332, %v3657
      %v3692 = vld [vmem:[%s3333] sm:$0xf]
      %v3693 = vld [vmem:[%s3333 + $0x4] sm:$0xf]
      %v3694 = vld [vmem:[%s3333 + $0x8] sm:$0x1]
      %v3695 = vld [vmem:[%s3333 + $0xc] sm:$0xf]
      %v3696 = vld [vmem:[%s3333 + $0x10] sm:$0xf]
      %v3697 = vld [vmem:[%s3333 + $0x14] sm:$0x1]
      %v3698 = vld [vmem:[%s3333 + $0x18] sm:$0xf]
      %v3699 = vld [vmem:[%s3333 + $0x1c] sm:$0xf]
      %v3700 = vld [vmem:[%s3333 + $0x20] sm:$0x1]
      %v3701 = vld [vmem:[%s3333 + $0x24] sm:$0xf]
      %v3702 = vld [vmem:[%s3333 + $0x28] sm:$0xf]
      %v3703 = vld [vmem:[%s3333 + $0x2c] sm:$0x1]
      %v3704 = vld [vmem:[%s3333 + $0x30] sm:$0xf]
      %v3705 = vld [vmem:[%s3333 + $0x34] sm:$0xf]
      %v3706 = vld [vmem:[%s3333 + $0x38] sm:$0x1]
      %v3707 = vld [vmem:[%s3333 + $0x3c] sm:$0xf]
      %v3708 = vld [vmem:[%s3333 + $0x40] sm:$0xf]
      %v3709 = vld [vmem:[%s3333 + $0x44] sm:$0x1]
      %v3710 = vld [vmem:[%s3333 + $0x48] sm:$0xf]
      %v3711 = vld [vmem:[%s3333 + $0x4c] sm:$0xf]
      %v3712 = vld [vmem:[%s3333 + $0x50] sm:$0x1]
      %v3713 = vld [vmem:[%s3333 + $0x54] sm:$0xf]
      %v3714 = vld [vmem:[%s3333 + $0x58] sm:$0xf]
      %v3715 = vld [vmem:[%s3333 + $0x5c] sm:$0x1]
      %v3716 = vld [vmem:[%s3333 + $0x60] sm:$0xf]
      %v3717 = vld [vmem:[%s3333 + $0x64] sm:$0xf]
      %v3718 = vld [vmem:[%s3333 + $0x68] sm:$0x1]
      %v3719 = vld [vmem:[%s3333 + $0x6c] sm:$0xf]
      %v3720 = vld [vmem:[%s3333 + $0x70] sm:$0xf]
      %v3721 = vld [vmem:[%s3333 + $0x74] sm:$0x1]
      %v3722 = vld [vmem:[%s3333 + $0x78] sm:$0xf]
      %v3723 = vld [vmem:[%s3333 + $0x7c] sm:$0xf]
      %v3724 = vld [vmem:[%s3333 + $0x80] sm:$0x1]
      %v3725 = vld [vmem:[%s3333 + $0x84] sm:$0xf]
      %v3726 = vld [vmem:[%s3333 + $0x88] sm:$0xf]
      %v3727 = vld [vmem:[%s3333 + $0x8c] sm:$0x1]
      %v3728 = vld [vmem:[%s3333 + $0x90] sm:$0xf]
      %v3729 = vld [vmem:[%s3333 + $0x94] sm:$0xf]
      %v3730 = vld [vmem:[%s3333 + $0x98] sm:$0x1]
      %v3731 = vld [vmem:[%s3333 + $0x9c] sm:$0xf]
      %v3732 = vld [vmem:[%s3333 + $0xa0] sm:$0xf]
      %v3733 = vld [vmem:[%s3333 + $0xa4] sm:$0x1]
      %v3734 = vld [vmem:[%s3333 + $0xa8] sm:$0xf]
      %v3735 = vld [vmem:[%s3333 + $0xac] sm:$0xf]
      %v3736 = vld [vmem:[%s3333 + $0xb0] sm:$0x1]
      %v3737 = vld [vmem:[%s3333 + $0xb4] sm:$0xf]
      %v3738 = vld [vmem:[%s3333 + $0xb8] sm:$0xf]
      %v3739 = vld [vmem:[%s3333 + $0xbc] sm:$0x1]
      %v3741 = vshrl.u32 %v3692, 16
      %v3743 = vrot.slane %v3741, 4
      %v3744 = vshll.u32 %v3692, 16
      %v3746 = vrot.slane %v3744, 5
      %v3747 = vor.u32 %v3743, %v3746
      %v3748 = vrot.slane %v3747, 4
      %v3750 = vshll.u32 %v3693, 16
      %v3752 = vrot.slane %v3750, 5
      %v3753 = vsel %vm380, %v3748, %v3752
      %v3754 = vshrl.u32 %v3693, 16
      %v3756 = vrot.slane %v3754, 4
      %v3757 = vor.u32 %v3756, %v3752
      %v3758 = vrot.slane %v3757, 4
      %v3760 = vshll.u32 %v3694, 16
      %v3762 = vrot.slane %v3760, 5
      %v3763 = vsel %vm380, %v3758, %v3762
      %v3765 = vshrl.u32 %v3695, 16
      %v3767 = vrot.slane %v3765, 4
      %v3768 = vshll.u32 %v3695, 16
      %v3770 = vrot.slane %v3768, 5
      %v3771 = vor.u32 %v3767, %v3770
      %v3772 = vrot.slane %v3771, 4
      %v3774 = vshll.u32 %v3696, 16
      %v3776 = vrot.slane %v3774, 5
      %v3777 = vsel %vm380, %v3772, %v3776
      %v3778 = vshrl.u32 %v3696, 16
      %v3780 = vrot.slane %v3778, 4
      %v3781 = vor.u32 %v3780, %v3776
      %v3782 = vrot.slane %v3781, 4
      %v3784 = vshll.u32 %v3697, 16
      %v3786 = vrot.slane %v3784, 5
      %v3787 = vsel %vm380, %v3782, %v3786
      %v3789 = vshrl.u32 %v3698, 16
      %v3791 = vrot.slane %v3789, 4
      %v3792 = vshll.u32 %v3698, 16
      %v3794 = vrot.slane %v3792, 5
      %v3795 = vor.u32 %v3791, %v3794
      %v3796 = vrot.slane %v3795, 4
      %v3798 = vshll.u32 %v3699, 16
      %v3800 = vrot.slane %v3798, 5
      %v3801 = vsel %vm380, %v3796, %v3800
      %v3802 = vshrl.u32 %v3699, 16
      %v3804 = vrot.slane %v3802, 4
      %v3805 = vor.u32 %v3804, %v3800
      %v3806 = vrot.slane %v3805, 4
      %v3808 = vshll.u32 %v3700, 16
      %v3810 = vrot.slane %v3808, 5
      %v3811 = vsel %vm380, %v3806, %v3810
      %v3813 = vshrl.u32 %v3701, 16
      %v3815 = vrot.slane %v3813, 4
      %v3816 = vshll.u32 %v3701, 16
      %v3818 = vrot.slane %v3816, 5
      %v3819 = vor.u32 %v3815, %v3818
      %v3820 = vrot.slane %v3819, 4
      %v3822 = vshll.u32 %v3702, 16
      %v3824 = vrot.slane %v3822, 5
      %v3825 = vsel %vm380, %v3820, %v3824
      %v3826 = vshrl.u32 %v3702, 16
      %v3828 = vrot.slane %v3826, 4
      %v3829 = vor.u32 %v3828, %v3824
      %v3830 = vrot.slane %v3829, 4
      %v3832 = vshll.u32 %v3703, 16
      %v3834 = vrot.slane %v3832, 5
      %v3835 = vsel %vm380, %v3830, %v3834
      %v3837 = vshrl.u32 %v3704, 16
      %v3839 = vrot.slane %v3837, 4
      %v3840 = vshll.u32 %v3704, 16
      %v3842 = vrot.slane %v3840, 5
      %v3843 = vor.u32 %v3839, %v3842
      %v3844 = vrot.slane %v3843, 4
      %v3846 = vshll.u32 %v3705, 16
      %v3848 = vrot.slane %v3846, 5
      %v3849 = vsel %vm380, %v3844, %v3848
      %v3850 = vshrl.u32 %v3705, 16
      %v3852 = vrot.slane %v3850, 4
      %v3853 = vor.u32 %v3852, %v3848
      %v3854 = vrot.slane %v3853, 4
      %v3856 = vshll.u32 %v3706, 16
      %v3858 = vrot.slane %v3856, 5
      %v3859 = vsel %vm380, %v3854, %v3858
      %v3861 = vshrl.u32 %v3707, 16
      %v3863 = vrot.slane %v3861, 4
      %v3864 = vshll.u32 %v3707, 16
      %v3866 = vrot.slane %v3864, 5
      %v3867 = vor.u32 %v3863, %v3866
      %v3868 = vrot.slane %v3867, 4
      %v3870 = vshll.u32 %v3708, 16
      %v3872 = vrot.slane %v3870, 5
      %v3873 = vsel %vm380, %v3868, %v3872
      %v3874 = vshrl.u32 %v3708, 16
      %v3876 = vrot.slane %v3874, 4
      %v3877 = vor.u32 %v3876, %v3872
      %v3878 = vrot.slane %v3877, 4
      %v3880 = vshll.u32 %v3709, 16
      %v3882 = vrot.slane %v3880, 5
      %v3883 = vsel %vm380, %v3878, %v3882
      %v3885 = vshrl.u32 %v3710, 16
      %v3887 = vrot.slane %v3885, 4
      %v3888 = vshll.u32 %v3710, 16
      %v3890 = vrot.slane %v3888, 5
      %v3891 = vor.u32 %v3887, %v3890
      %v3892 = vrot.slane %v3891, 4
      %v3894 = vshll.u32 %v3711, 16
      %v3896 = vrot.slane %v3894, 5
      %v3897 = vsel %vm380, %v3892, %v3896
      %v3898 = vshrl.u32 %v3711, 16
      %v3900 = vrot.slane %v3898, 4
      %v3901 = vor.u32 %v3900, %v3896
      %v3902 = vrot.slane %v3901, 4
      %v3904 = vshll.u32 %v3712, 16
      %v3906 = vrot.slane %v3904, 5
      %v3907 = vsel %vm380, %v3902, %v3906
      %v3909 = vshrl.u32 %v3713, 16
      %v3911 = vrot.slane %v3909, 4
      %v3912 = vshll.u32 %v3713, 16
      %v3914 = vrot.slane %v3912, 5
      %v3915 = vor.u32 %v3911, %v3914
      %v3916 = vrot.slane %v3915, 4
      %v3918 = vshll.u32 %v3714, 16
      %v3920 = vrot.slane %v3918, 5
      %v3921 = vsel %vm380, %v3916, %v3920
      %v3922 = vshrl.u32 %v3714, 16
      %v3924 = vrot.slane %v3922, 4
      %v3925 = vor.u32 %v3924, %v3920
      %v3926 = vrot.slane %v3925, 4
      %v3928 = vshll.u32 %v3715, 16
      %v3930 = vrot.slane %v3928, 5
      %v3931 = vsel %vm380, %v3926, %v3930
      %v3933 = vshrl.u32 %v3716, 16
      %v3935 = vrot.slane %v3933, 4
      %v3936 = vshll.u32 %v3716, 16
      %v3938 = vrot.slane %v3936, 5
      %v3939 = vor.u32 %v3935, %v3938
      %v3940 = vrot.slane %v3939, 4
      %v3942 = vshll.u32 %v3717, 16
      %v3944 = vrot.slane %v3942, 5
      %v3945 = vsel %vm380, %v3940, %v3944
      %v3946 = vshrl.u32 %v3717, 16
      %v3948 = vrot.slane %v3946, 4
      %v3949 = vor.u32 %v3948, %v3944
      %v3950 = vrot.slane %v3949, 4
      %v3952 = vshll.u32 %v3718, 16
      %v3954 = vrot.slane %v3952, 5
      %v3955 = vsel %vm380, %v3950, %v3954
      %v3957 = vshrl.u32 %v3719, 16
      %v3959 = vrot.slane %v3957, 4
      %v3960 = vshll.u32 %v3719, 16
      %v3962 = vrot.slane %v3960, 5
      %v3963 = vor.u32 %v3959, %v3962
      %v3964 = vrot.slane %v3963, 4
      %v3966 = vshll.u32 %v3720, 16
      %v3968 = vrot.slane %v3966, 5
      %v3969 = vsel %vm380, %v3964, %v3968
      %v3970 = vshrl.u32 %v3720, 16
      %v3972 = vrot.slane %v3970, 4
      %v3973 = vor.u32 %v3972, %v3968
      %v3974 = vrot.slane %v3973, 4
      %v3976 = vshll.u32 %v3721, 16
      %v3978 = vrot.slane %v3976, 5
      %v3979 = vsel %vm380, %v3974, %v3978
      %v3981 = vshrl.u32 %v3722, 16
      %v3983 = vrot.slane %v3981, 4
      %v3984 = vshll.u32 %v3722, 16
      %v3986 = vrot.slane %v3984, 5
      %v3987 = vor.u32 %v3983, %v3986
      %v3988 = vrot.slane %v3987, 4
      %v3990 = vshll.u32 %v3723, 16
      %v3992 = vrot.slane %v3990, 5
      %v3993 = vsel %vm380, %v3988, %v3992
      %v3994 = vshrl.u32 %v3723, 16
      %v3996 = vrot.slane %v3994, 4
      %v3997 = vor.u32 %v3996, %v3992
      %v3998 = vrot.slane %v3997, 4
      %v4000 = vshll.u32 %v3724, 16
      %v4002 = vrot.slane %v4000, 5
      %v4003 = vsel %vm380, %v3998, %v4002
      %v4005 = vshrl.u32 %v3725, 16
      %v4007 = vrot.slane %v4005, 4
      %v4008 = vshll.u32 %v3725, 16
      %v4010 = vrot.slane %v4008, 5
      %v4011 = vor.u32 %v4007, %v4010
      %v4012 = vrot.slane %v4011, 4
      %v4014 = vshll.u32 %v3726, 16
      %v4016 = vrot.slane %v4014, 5
      %v4017 = vsel %vm380, %v4012, %v4016
      %v4018 = vshrl.u32 %v3726, 16
      %v4020 = vrot.slane %v4018, 4
      %v4021 = vor.u32 %v4020, %v4016
      %v4022 = vrot.slane %v4021, 4
      %v4024 = vshll.u32 %v3727, 16
      %v4026 = vrot.slane %v4024, 5
      %v4027 = vsel %vm380, %v4022, %v4026
      %v4029 = vshrl.u32 %v3728, 16
      %v4031 = vrot.slane %v4029, 4
      %v4032 = vshll.u32 %v3728, 16
      %v4034 = vrot.slane %v4032, 5
      %v4035 = vor.u32 %v4031, %v4034
      %v4036 = vrot.slane %v4035, 4
      %v4038 = vshll.u32 %v3729, 16
      %v4040 = vrot.slane %v4038, 5
      %v4041 = vsel %vm380, %v4036, %v4040
      %v4042 = vshrl.u32 %v3729, 16
      %v4044 = vrot.slane %v4042, 4
      %v4045 = vor.u32 %v4044, %v4040
      %v4046 = vrot.slane %v4045, 4
      %v4048 = vshll.u32 %v3730, 16
      %v4050 = vrot.slane %v4048, 5
      %v4051 = vsel %vm380, %v4046, %v4050
      %v4053 = vshrl.u32 %v3731, 16
      %v4055 = vrot.slane %v4053, 4
      %v4056 = vshll.u32 %v3731, 16
      %v4058 = vrot.slane %v4056, 5
      %v4059 = vor.u32 %v4055, %v4058
      %v4060 = vrot.slane %v4059, 4
      %v4062 = vshll.u32 %v3732, 16
      %v4064 = vrot.slane %v4062, 5
      %v4065 = vsel %vm380, %v4060, %v4064
      %v4066 = vshrl.u32 %v3732, 16
      %v4068 = vrot.slane %v4066, 4
      %v4069 = vor.u32 %v4068, %v4064
      %v4070 = vrot.slane %v4069, 4
      %v4072 = vshll.u32 %v3733, 16
      %v4074 = vrot.slane %v4072, 5
      %v4075 = vsel %vm380, %v4070, %v4074
      %v4077 = vshrl.u32 %v3734, 16
      %v4079 = vrot.slane %v4077, 4
      %v4080 = vshll.u32 %v3734, 16
      %v4082 = vrot.slane %v4080, 5
      %v4083 = vor.u32 %v4079, %v4082
      %v4084 = vrot.slane %v4083, 4
      %v4086 = vshll.u32 %v3735, 16
      %v4088 = vrot.slane %v4086, 5
      %v4089 = vsel %vm380, %v4084, %v4088
      %v4090 = vshrl.u32 %v3735, 16
      %v4092 = vrot.slane %v4090, 4
      %v4093 = vor.u32 %v4092, %v4088
      %v4094 = vrot.slane %v4093, 4
      %v4096 = vshll.u32 %v3736, 16
      %v4098 = vrot.slane %v4096, 5
      %v4099 = vsel %vm380, %v4094, %v4098
      %v4101 = vshrl.u32 %v3737, 16
      %v4103 = vrot.slane %v4101, 4
      %v4104 = vshll.u32 %v3737, 16
      %v4106 = vrot.slane %v4104, 5
      %v4107 = vor.u32 %v4103, %v4106
      %v4108 = vrot.slane %v4107, 4
      %v4110 = vshll.u32 %v3738, 16
      %v4112 = vrot.slane %v4110, 5
      %v4113 = vsel %vm380, %v4108, %v4112
      %v4114 = vshrl.u32 %v3738, 16
      %v4116 = vrot.slane %v4114, 4
      %v4117 = vor.u32 %v4116, %v4112
      %v4118 = vrot.slane %v4117, 4
      %v4120 = vshll.u32 %v3739, 16
      %v4122 = vrot.slane %v4120, 5
      %v4123 = vsel %vm380, %v4118, %v4122
      %s4124 = scalar_lea.vmem %s277, 14
      %v4125 = vld [vmem:[%s4124] sm:$0x3]
      %v4126 = vunpack.c.l.b16 %v3753
      %v4127 = vunpack.c.l.b16 %v3763
      %v4128 = vunpack.c.l.b16 %v3777
      %v4129 = vunpack.c.l.b16 %v3787
      %v4130 = vunpack.c.l.b16 %v3801
      %v4131 = vunpack.c.l.b16 %v3811
      %v4132 = vunpack.c.l.b16 %v3825
      %v4133 = vunpack.c.l.b16 %v3835
      %v4134 = vunpack.c.l.b16 %v3849
      %v4135 = vunpack.c.l.b16 %v3859
      %v4136 = vunpack.c.l.b16 %v3873
      %v4137 = vunpack.c.l.b16 %v3883
      %v4138 = vunpack.c.l.b16 %v3897
      %v4139 = vunpack.c.l.b16 %v3907
      %v4140 = vunpack.c.l.b16 %v3921
      %v4141 = vunpack.c.l.b16 %v3931
      %v4142 = vunpack.c.l.b16 %v3945
      %v4143 = vunpack.c.l.b16 %v3955
      %v4144 = vunpack.c.l.b16 %v3969
      %v4145 = vunpack.c.l.b16 %v3979
      %v4146 = vunpack.c.l.b16 %v3993
      %v4147 = vunpack.c.l.b16 %v4003
      %v4148 = vunpack.c.l.b16 %v4017
      %v4149 = vunpack.c.l.b16 %v4027
      %v4150 = vunpack.c.l.b16 %v4041
      %v4151 = vunpack.c.l.b16 %v4051
      %v4152 = vunpack.c.l.b16 %v4065
      %v4153 = vunpack.c.l.b16 %v4075
      %v4154 = vunpack.c.l.b16 %v4089
      %v4155 = vunpack.c.l.b16 %v4099
      %v4156 = vunpack.c.l.b16 %v4113
      %v4157 = vunpack.c.l.b16 %v4123
      %v4158 = vpack.c.b16 %v4127, %v4126
      %v4159 = vpack.c.b16 %v4129, %v4128
      %v4160 = vpack.c.b16 %v4131, %v4130
      %v4161 = vpack.c.b16 %v4133, %v4132
      %v4162 = vpack.c.b16 %v4135, %v4134
      %v4163 = vpack.c.b16 %v4137, %v4136
      %v4164 = vpack.c.b16 %v4139, %v4138
      %v4165 = vpack.c.b16 %v4141, %v4140
      %v4166 = vpack.c.b16 %v4143, %v4142
      %v4167 = vpack.c.b16 %v4145, %v4144
      %v4168 = vpack.c.b16 %v4147, %v4146
      %v4169 = vpack.c.b16 %v4149, %v4148
      %v4170 = vpack.c.b16 %v4151, %v4150
      %v4171 = vpack.c.b16 %v4153, %v4152
      %v4172 = vpack.c.b16 %v4155, %v4154
      %v4173 = vpack.c.b16 %v4157, %v4156
      %v4175 = vsel %vm815, %v4158, 0
      %v4178 = vsel %vm815, %v4159, 0
      %v4181 = vsel %vm815, %v4160, 0
      %v4184 = vsel %vm815, %v4161, 0
      %v4187 = vsel %vm815, %v4162, 0
      %v4190 = vsel %vm815, %v4163, 0
      %v4193 = vsel %vm815, %v4164, 0
      %v4196 = vsel %vm815, %v4165, 0
      %v4199 = vsel %vm815, %v4166, 0
      %v4202 = vsel %vm815, %v4167, 0
      %v4205 = vsel %vm815, %v4168, 0
      %v4208 = vsel %vm815, %v4169, 0
      %v4211 = vsel %vm815, %v4170, 0
      %v4214 = vsel %vm815, %v4171, 0
      %v4217 = vsel %vm815, %v4172, 0
      %v4220 = vsel %vm815, %v4173, 0
      %v4223 = vsel %vm864, %v4125, 0
      %4225 = vmatprep.subr.bf16.mxu0 0
      %4226 = vmatpush1.bf16.msra.mxu0 %v4223
      %4227 = vmatprep.subr.bf16.mxu0 0
      %4228 = vmatpush1.bf16.msra.mxu0 0
      %4229 = vmatprep.subr.bf16.mxu0 0
      %4230 = vmatpush1.bf16.msra.mxu0 0
      %4231 = vmatprep.subr.bf16.mxu0 0
      %4232 = vmatpush1.bf16.msra.mxu0 0
      %4233 = vmatprep.subr.bf16.mxu0 0
      %4234 = vmatpush1.bf16.msra.mxu0 0
      %4235 = vmatprep.subr.bf16.mxu0 0
      %4236 = vmatpush1.bf16.msra.mxu0 0
      %4237 = vmatprep.subr.bf16.mxu0 0
      %4238 = vmatpush1.bf16.msra.mxu0 0
      %4239 = vmatprep.subr.bf16.mxu0 0
      %4240 = vmatpush1.bf16.msra.mxu0 0
      %4241 = vmatprep.subr.bf16.mxu0 0
      %4242 = vmatpush1.bf16.msra.mxu0 0
      %4243 = vmatprep.subr.bf16.mxu0 0
      %4244 = vmatpush1.bf16.msra.mxu0 0
      %4245 = vmatprep.subr.bf16.mxu0 0
      %4246 = vmatpush1.bf16.msra.mxu0 0
      %4247 = vmatprep.subr.bf16.mxu0 0
      %4248 = vmatpush1.bf16.msra.mxu0 0
      %4249 = vmatprep.subr.bf16.mxu0 0
      %4250 = vmatpush1.bf16.msra.mxu0 0
      %4251 = vmatprep.subr.bf16.mxu0 0
      %4252 = vmatpush1.bf16.msra.mxu0 0
      %4253 = vmatprep.subr.bf16.mxu0 0
      %4254 = vmatpush1.bf16.msra.mxu0 0
      %4255 = vmatprep.subr.bf16.mxu0 0
      %4256 = vmatpush1.bf16.msra.mxu0 0
      %4257 = vmatprep.mubr.bf16.mxu0 0
      %4258 = vmatmul.mubr.bf16.gmra.mrb[0].mxu0 %v4175
      %v4259 = vpop.f32.mrb[0].mxu0
      %v4260 = vadd.f32 0.0, %v4259
      %v4261 = vpop.f32.mrb[0].mxu0
      %v4262 = vpop.f32.mrb[0].mxu0
      %v4263 = vadd.f32 0.0, %v4262
      %v4264 = vpop.f32.mrb[0].mxu0
      %4265 = vmatprep.mubr.bf16.mxu0 0
      %4266 = vmatmul.mubr.bf16.gmra.mrb[0].mxu0 %v4178
      %v4267 = vpop.f32.mrb[0].mxu0
      %v4268 = vadd.f32 0.0, %v4267
      %v4269 = vpop.f32.mrb[0].mxu0
      %v4270 = vpop.f32.mrb[0].mxu0
      %v4271 = vadd.f32 0.0, %v4270
      %v4272 = vpop.f32.mrb[0].mxu0
      %4273 = vmatprep.mubr.bf16.mxu0 0
      %4274 = vmatmul.mubr.bf16.gmra.mrb[0].mxu0 %v4181
      %v4275 = vpop.f32.mrb[0].mxu0
      %v4276 = vadd.f32 0.0, %v4275
      %v4277 = vpop.f32.mrb[0].mxu0
      %v4278 = vpop.f32.mrb[0].mxu0
      %v4279 = vadd.f32 0.0, %v4278
      %v4280 = vpop.f32.mrb[0].mxu0
      %4281 = vmatprep.mubr.bf16.mxu0 0
      %4282 = vmatmul.mubr.bf16.gmra.mrb[0].mxu0 %v4184
      %v4283 = vpop.f32.mrb[0].mxu0
      %v4284 = vadd.f32 0.0, %v4283
      %v4285 = vpop.f32.mrb[0].mxu0
      %v4286 = vpop.f32.mrb[0].mxu0
      %v4287 = vadd.f32 0.0, %v4286
      %v4288 = vpop.f32.mrb[0].mxu0
      %4289 = vmatprep.mubr.bf16.mxu0 0
      %4290 = vmatmul.mubr.bf16.gmra.mrb[0].mxu0 %v4187
      %v4291 = vpop.f32.mrb[0].mxu0
      %v4292 = vadd.f32 0.0, %v4291
      %v4293 = vpop.f32.mrb[0].mxu0
      %v4294 = vpop.f32.mrb[0].mxu0
      %v4295 = vadd.f32 0.0, %v4294
      %v4296 = vpop.f32.mrb[0].mxu0
      %4297 = vmatprep.mubr.bf16.mxu0 0
      %4298 = vmatmul.mubr.bf16.gmra.mrb[0].mxu0 %v4190
      %v4299 = vpop.f32.mrb[0].mxu0
      %v4300 = vadd.f32 0.0, %v4299
      %v4301 = vpop.f32.mrb[0].mxu0
      %v4302 = vpop.f32.mrb[0].mxu0
      %v4303 = vadd.f32 0.0, %v4302
      %v4304 = vpop.f32.mrb[0].mxu0
      %4305 = vmatprep.mubr.bf16.mxu0 0
      %4306 = vmatmul.mubr.bf16.gmra.mrb[0].mxu0 %v4193
      %v4307 = vpop.f32.mrb[0].mxu0
      %v4308 = vadd.f32 0.0, %v4307
      %v4309 = vpop.f32.mrb[0].mxu0
      %v4310 = vpop.f32.mrb[0].mxu0
      %v4311 = vadd.f32 0.0, %v4310
      %v4312 = vpop.f32.mrb[0].mxu0
      %4313 = vmatprep.mubr.bf16.mxu0 0
      %4314 = vmatmul.mubr.bf16.gmra.mrb[0].mxu0 %v4196
      %v4315 = vpop.f32.mrb[0].mxu0
      %v4316 = vadd.f32 0.0, %v4315
      %v4317 = vpop.f32.mrb[0].mxu0
      %v4318 = vpop.f32.mrb[0].mxu0
      %v4319 = vadd.f32 0.0, %v4318
      %v4320 = vpop.f32.mrb[0].mxu0
      %4321 = vmatprep.mubr.bf16.mxu0 0
      %4322 = vmatmul.mubr.bf16.gmra.mrb[0].mxu0 %v4199
      %v4323 = vpop.f32.mrb[0].mxu0
      %v4324 = vadd.f32 0.0, %v4323
      %v4325 = vpop.f32.mrb[0].mxu0
      %v4326 = vpop.f32.mrb[0].mxu0
      %v4327 = vadd.f32 0.0, %v4326
      %v4328 = vpop.f32.mrb[0].mxu0
      %4329 = vmatprep.mubr.bf16.mxu0 0
      %4330 = vmatmul.mubr.bf16.gmra.mrb[0].mxu0 %v4202
      %v4331 = vpop.f32.mrb[0].mxu0
      %v4332 = vadd.f32 0.0, %v4331
      %v4333 = vpop.f32.mrb[0].mxu0
      %v4334 = vpop.f32.mrb[0].mxu0
      %v4335 = vadd.f32 0.0, %v4334
      %v4336 = vpop.f32.mrb[0].mxu0
      %4337 = vmatprep.mubr.bf16.mxu0 0
      %4338 = vmatmul.mubr.bf16.gmra.mrb[0].mxu0 %v4205
      %v4339 = vpop.f32.mrb[0].mxu0
      %v4340 = vadd.f32 0.0, %v4339
      %v4341 = vpop.f32.mrb[0].mxu0
      %v4342 = vpop.f32.mrb[0].mxu0
      %v4343 = vadd.f32 0.0, %v4342
      %v4344 = vpop.f32.mrb[0].mxu0
      %4345 = vmatprep.mubr.bf16.mxu0 0
      %4346 = vmatmul.mubr.bf16.gmra.mrb[0].mxu0 %v4208
      %v4347 = vpop.f32.mrb[0].mxu0
      %v4348 = vadd.f32 0.0, %v4347
      %v4349 = vpop.f32.mrb[0].mxu0
      %v4350 = vpop.f32.mrb[0].mxu0
      %v4351 = vadd.f32 0.0, %v4350
      %v4352 = vpop.f32.mrb[0].mxu0
      %4353 = vmatprep.mubr.bf16.mxu0 0
      %4354 = vmatmul.mubr.bf16.gmra.mrb[0].mxu0 %v4211
      %v4355 = vpop.f32.mrb[0].mxu0
      %v4356 = vadd.f32 0.0, %v4355
      %v4357 = vpop.f32.mrb[0].mxu0
      %v4358 = vpop.f32.mrb[0].mxu0
      %v4359 = vadd.f32 0.0, %v4358
      %v4360 = vpop.f32.mrb[0].mxu0
      %4361 = vmatprep.mubr.bf16.mxu0 0
      %4362 = vmatmul.mubr.bf16.gmra.mrb[0].mxu0 %v4214
      %v4363 = vpop.f32.mrb[0].mxu0
      %v4364 = vadd.f32 0.0, %v4363
      %v4365 = vpop.f32.mrb[0].mxu0
      %v4366 = vpop.f32.mrb[0].mxu0
      %v4367 = vadd.f32 0.0, %v4366
      %v4368 = vpop.f32.mrb[0].mxu0
      %4369 = vmatprep.mubr.bf16.mxu0 0
      %4370 = vmatmul.mubr.bf16.gmra.mrb[0].mxu0 %v4217
      %v4371 = vpop.f32.mrb[0].mxu0
      %v4372 = vadd.f32 0.0, %v4371
      %v4373 = vpop.f32.mrb[0].mxu0
      %v4374 = vpop.f32.mrb[0].mxu0
      %v4375 = vadd.f32 0.0, %v4374
      %v4376 = vpop.f32.mrb[0].mxu0
      %4377 = vmatprep.mubr.bf16.mxu0 0
      %4378 = vmatmul.mubr.bf16.gmra.mrb[0].mxu0 %v4220
      %v4379 = vpop.f32.mrb[0].mxu0
      %v4380 = vadd.f32 0.0, %v4379
      %v4381 = vpop.f32.mrb[0].mxu0
      %v4382 = vpop.f32.mrb[0].mxu0
      %v4383 = vadd.f32 0.0, %v4382
      %v4384 = vpop.f32.mrb[0].mxu0
      %4385 = vdwg.mxu0
      %v4386 = vadd.f32 %v3660, %v4260
      %v4387 = vadd.f32 %v3661, %v4263
      %v4388 = vadd.f32 %v3662, %v4268
      %v4389 = vadd.f32 %v3663, %v4271
      %v4390 = vadd.f32 %v3664, %v4276
      %v4391 = vadd.f32 %v3665, %v4279
      %v4392 = vadd.f32 %v3666, %v4284
      %v4393 = vadd.f32 %v3667, %v4287
      %v4394 = vadd.f32 %v3668, %v4292
      %v4395 = vadd.f32 %v3669, %v4295
      %v4396 = vadd.f32 %v3670, %v4300
      %v4397 = vadd.f32 %v3671, %v4303
      %v4398 = vadd.f32 %v3672, %v4308
      %v4399 = vadd.f32 %v3673, %v4311
      %v4400 = vadd.f32 %v3674, %v4316
      %v4401 = vadd.f32 %v3675, %v4319
      %v4402 = vadd.f32 %v3676, %v4324
      %v4403 = vadd.f32 %v3677, %v4327
      %v4404 = vadd.f32 %v3678, %v4332
      %v4405 = vadd.f32 %v3679, %v4335
      %v4406 = vadd.f32 %v3680, %v4340
      %v4407 = vadd.f32 %v3681, %v4343
      %v4408 = vadd.f32 %v3682, %v4348
      %v4409 = vadd.f32 %v3683, %v4351
      %v4410 = vadd.f32 %v3684, %v4356
      %v4411 = vadd.f32 %v3685, %v4359
      %v4412 = vadd.f32 %v3686, %v4364
      %v4413 = vadd.f32 %v3687, %v4367
      %v4414 = vadd.f32 %v3688, %v4372
      %v4415 = vadd.f32 %v3689, %v4375
      %v4416 = vadd.f32 %v3690, %v4380
      %v4417 = vadd.f32 %v3691, %v4383
      %v4418 = vld [vmem:[%s3333] sm:$0xe]
      %v4419 = vld [vmem:[%s3333 + $0xc] sm:$0xe]
      %v4420 = vld [vmem:[%s3333 + $0x18] sm:$0xe]
      %v4421 = vld [vmem:[%s3333 + $0x24] sm:$0xe]
      %v4422 = vld [vmem:[%s3333 + $0x30] sm:$0xe]
      %v4423 = vld [vmem:[%s3333 + $0x3c] sm:$0xe]
      %v4424 = vld [vmem:[%s3333 + $0x48] sm:$0xe]
      %v4425 = vld [vmem:[%s3333 + $0x54] sm:$0xe]
      %v4426 = vld [vmem:[%s3333 + $0x60] sm:$0xe]
      %v4427 = vld [vmem:[%s3333 + $0x6c] sm:$0xe]
      %v4428 = vld [vmem:[%s3333 + $0x78] sm:$0xe]
      %v4429 = vld [vmem:[%s3333 + $0x84] sm:$0xe]
      %v4430 = vld [vmem:[%s3333 + $0x90] sm:$0xe]
      %v4431 = vld [vmem:[%s3333 + $0x9c] sm:$0xe]
      %v4432 = vld [vmem:[%s3333 + $0xa8] sm:$0xe]
      %v4433 = vld [vmem:[%s3333 + $0xb4] sm:$0xe]
      %v4482 = vrot.slane %v4418, 5
      %v4483 = vrot.slane %v4482, 4
      %v4484 = vrot.slane %v3693, 5
      %v4485 = vsel %vm1371, %v4483, %v4484
      %v4486 = vrot.slane %v4484, 4
      %v4487 = vrot.slane %v3694, 5
      %v4488 = vsel %vm1371, %v4486, %v4487
      %v4489 = vrot.slane %v4419, 5
      %v4490 = vrot.slane %v4489, 4
      %v4491 = vrot.slane %v3696, 5
      %v4492 = vsel %vm1371, %v4490, %v4491
      %v4493 = vrot.slane %v4491, 4
      %v4494 = vrot.slane %v3697, 5
      %v4495 = vsel %vm1371, %v4493, %v4494
      %v4496 = vrot.slane %v4420, 5
      %v4497 = vrot.slane %v4496, 4
      %v4498 = vrot.slane %v3699, 5
      %v4499 = vsel %vm1371, %v4497, %v4498
      %v4500 = vrot.slane %v4498, 4
      %v4501 = vrot.slane %v3700, 5
      %v4502 = vsel %vm1371, %v4500, %v4501
      %v4503 = vrot.slane %v4421, 5
      %v4504 = vrot.slane %v4503, 4
      %v4505 = vrot.slane %v3702, 5
      %v4506 = vsel %vm1371, %v4504, %v4505
      %v4507 = vrot.slane %v4505, 4
      %v4508 = vrot.slane %v3703, 5
      %v4509 = vsel %vm1371, %v4507, %v4508
      %v4510 = vrot.slane %v4422, 5
      %v4511 = vrot.slane %v4510, 4
      %v4512 = vrot.slane %v3705, 5
      %v4513 = vsel %vm1371, %v4511, %v4512
      %v4514 = vrot.slane %v4512, 4
      %v4515 = vrot.slane %v3706, 5
      %v4516 = vsel %vm1371, %v4514, %v4515
      %v4517 = vrot.slane %v4423, 5
      %v4518 = vrot.slane %v4517, 4
      %v4519 = vrot.slane %v3708, 5
      %v4520 = vsel %vm1371, %v4518, %v4519
      %v4521 = vrot.slane %v4519, 4
      %v4522 = vrot.slane %v3709, 5
      %v4523 = vsel %vm1371, %v4521, %v4522
      %v4524 = vrot.slane %v4424, 5
      %v4525 = vrot.slane %v4524, 4
      %v4526 = vrot.slane %v3711, 5
      %v4527 = vsel %vm1371, %v4525, %v4526
      %v4528 = vrot.slane %v4526, 4
      %v4529 = vrot.slane %v3712, 5
      %v4530 = vsel %vm1371, %v4528, %v4529
      %v4531 = vrot.slane %v4425, 5
      %v4532 = vrot.slane %v4531, 4
      %v4533 = vrot.slane %v3714, 5
      %v4534 = vsel %vm1371, %v4532, %v4533
      %v4535 = vrot.slane %v4533, 4
      %v4536 = vrot.slane %v3715, 5
      %v4537 = vsel %vm1371, %v4535, %v4536
      %v4538 = vrot.slane %v4426, 5
      %v4539 = vrot.slane %v4538, 4
      %v4540 = vrot.slane %v3717, 5
      %v4541 = vsel %vm1371, %v4539, %v4540
      %v4542 = vrot.slane %v4540, 4
      %v4543 = vrot.slane %v3718, 5
      %v4544 = vsel %vm1371, %v4542, %v4543
      %v4545 = vrot.slane %v4427, 5
      %v4546 = vrot.slane %v4545, 4
      %v4547 = vrot.slane %v3720, 5
      %v4548 = vsel %vm1371, %v4546, %v4547
      %v4549 = vrot.slane %v4547, 4
      %v4550 = vrot.slane %v3721, 5
      %v4551 = vsel %vm1371, %v4549, %v4550
      %v4552 = vrot.slane %v4428, 5
      %v4553 = vrot.slane %v4552, 4
      %v4554 = vrot.slane %v3723, 5
      %v4555 = vsel %vm1371, %v4553, %v4554
      %v4556 = vrot.slane %v4554, 4
      %v4557 = vrot.slane %v3724, 5
      %v4558 = vsel %vm1371, %v4556, %v4557
      %v4559 = vrot.slane %v4429, 5
      %v4560 = vrot.slane %v4559, 4
      %v4561 = vrot.slane %v3726, 5
      %v4562 = vsel %vm1371, %v4560, %v4561
      %v4563 = vrot.slane %v4561, 4
      %v4564 = vrot.slane %v3727, 5
      %v4565 = vsel %vm1371, %v4563, %v4564
      %v4566 = vrot.slane %v4430, 5
      %v4567 = vrot.slane %v4566, 4
      %v4568 = vrot.slane %v3729, 5
      %v4569 = vsel %vm1371, %v4567, %v4568
      %v4570 = vrot.slane %v4568, 4
      %v4571 = vrot.slane %v3730, 5
      %v4572 = vsel %vm1371, %v4570, %v4571
      %v4573 = vrot.slane %v4431, 5
      %v4574 = vrot.slane %v4573, 4
      %v4575 = vrot.slane %v3732, 5
      %v4576 = vsel %vm1371, %v4574, %v4575
      %v4577 = vrot.slane %v4575, 4
      %v4578 = vrot.slane %v3733, 5
      %v4579 = vsel %vm1371, %v4577, %v4578
      %v4580 = vrot.slane %v4432, 5
      %v4581 = vrot.slane %v4580, 4
      %v4582 = vrot.slane %v3735, 5
      %v4583 = vsel %vm1371, %v4581, %v4582
      %v4584 = vrot.slane %v4582, 4
      %v4585 = vrot.slane %v3736, 5
      %v4586 = vsel %vm1371, %v4584, %v4585
      %v4587 = vrot.slane %v4433, 5
      %v4588 = vrot.slane %v4587, 4
      %v4589 = vrot.slane %v3738, 5
      %v4590 = vsel %vm1371, %v4588, %v4589
      %v4591 = vrot.slane %v4589, 4
      %v4592 = vrot.slane %v3739, 5
      %v4593 = vsel %vm1371, %v4591, %v4592
      %s4594 = scalar_lea.vmem %s277, 16
      %v4595 = vld [vmem:[%s4594] sm:$0x3]
      %v4596 = vunpack.c.l.b16 %v4485
      %v4597 = vunpack.c.l.b16 %v4488
      %v4598 = vunpack.c.l.b16 %v4492
      %v4599 = vunpack.c.l.b16 %v4495
      %v4600 = vunpack.c.l.b16 %v4499
      %v4601 = vunpack.c.l.b16 %v4502
      %v4602 = vunpack.c.l.b16 %v4506
      %v4603 = vunpack.c.l.b16 %v4509
      %v4604 = vunpack.c.l.b16 %v4513
      %v4605 = vunpack.c.l.b16 %v4516
      %v4606 = vunpack.c.l.b16 %v4520
      %v4607 = vunpack.c.l.b16 %v4523
      %v4608 = vunpack.c.l.b16 %v4527
      %v4609 = vunpack.c.l.b16 %v4530
      %v4610 = vunpack.c.l.b16 %v4534
      %v4611 = vunpack.c.l.b16 %v4537
      %v4612 = vunpack.c.l.b16 %v4541
      %v4613 = vunpack.c.l.b16 %v4544
      %v4614 = vunpack.c.l.b16 %v4548
      %v4615 = vunpack.c.l.b16 %v4551
      %v4616 = vunpack.c.l.b16 %v4555
      %v4617 = vunpack.c.l.b16 %v4558
      %v4618 = vunpack.c.l.b16 %v4562
      %v4619 = vunpack.c.l.b16 %v4565
      %v4620 = vunpack.c.l.b16 %v4569
      %v4621 = vunpack.c.l.b16 %v4572
      %v4622 = vunpack.c.l.b16 %v4576
      %v4623 = vunpack.c.l.b16 %v4579
      %v4624 = vunpack.c.l.b16 %v4583
      %v4625 = vunpack.c.l.b16 %v4586
      %v4626 = vunpack.c.l.b16 %v4590
      %v4627 = vunpack.c.l.b16 %v4593
      %v4628 = vpack.c.b16 %v4597, %v4596
      %v4629 = vpack.c.b16 %v4599, %v4598
      %v4630 = vpack.c.b16 %v4601, %v4600
      %v4631 = vpack.c.b16 %v4603, %v4602
      %v4632 = vpack.c.b16 %v4605, %v4604
      %v4633 = vpack.c.b16 %v4607, %v4606
      %v4634 = vpack.c.b16 %v4609, %v4608
      %v4635 = vpack.c.b16 %v4611, %v4610
      %v4636 = vpack.c.b16 %v4613, %v4612
      %v4637 = vpack.c.b16 %v4615, %v4614
      %v4638 = vpack.c.b16 %v4617, %v4616
      %v4639 = vpack.c.b16 %v4619, %v4618
      %v4640 = vpack.c.b16 %v4621, %v4620
      %v4641 = vpack.c.b16 %v4623, %v4622
      %v4642 = vpack.c.b16 %v4625, %v4624
      %v4643 = vpack.c.b16 %v4627, %v4626
      %v4645 = vsel %vm815, %v4628, 0
      %v4648 = vsel %vm815, %v4629, 0
      %v4651 = vsel %vm815, %v4630, 0
      %v4654 = vsel %vm815, %v4631, 0
      %v4657 = vsel %vm815, %v4632, 0
      %v4660 = vsel %vm815, %v4633, 0
      %v4663 = vsel %vm815, %v4634, 0
      %v4666 = vsel %vm815, %v4635, 0
      %v4669 = vsel %vm815, %v4636, 0
      %v4672 = vsel %vm815, %v4637, 0
      %v4675 = vsel %vm815, %v4638, 0
      %v4678 = vsel %vm815, %v4639, 0
      %v4681 = vsel %vm815, %v4640, 0
      %v4684 = vsel %vm815, %v4641, 0
      %v4687 = vsel %vm815, %v4642, 0
      %v4690 = vsel %vm815, %v4643, 0
      %v4693 = vsel %vm864, %v4595, 0
      %4695 = vmatprep.subr.bf16.mxu0 0
      %4696 = vmatpush1.bf16.msra.mxu0 %v4693
      %4697 = vmatprep.subr.bf16.mxu0 0
      %4698 = vmatpush1.bf16.msra.mxu0 0
      %4699 = vmatprep.subr.bf16.mxu0 0
      %4700 = vmatpush1.bf16.msra.mxu0 0
      %4701 = vmatprep.subr.bf16.mxu0 0
      %4702 = vmatpush1.bf16.msra.mxu0 0
      %4703 = vmatprep.subr.bf16.mxu0 0
      %4704 = vmatpush1.bf16.msra.mxu0 0
      %4705 = vmatprep.subr.bf16.mxu0 0
      %4706 = vmatpush1.bf16.msra.mxu0 0
      %4707 = vmatprep.subr.bf16.mxu0 0
      %4708 = vmatpush1.bf16.msra.mxu0 0
      %4709 = vmatprep.subr.bf16.mxu0 0
      %4710 = vmatpush1.bf16.msra.mxu0 0
      %4711 = vmatprep.subr.bf16.mxu0 0
      %4712 = vmatpush1.bf16.msra.mxu0 0
      %4713 = vmatprep.subr.bf16.mxu0 0
      %4714 = vmatpush1.bf16.msra.mxu0 0
      %4715 = vmatprep.subr.bf16.mxu0 0
      %4716 = vmatpush1.bf16.msra.mxu0 0
      %4717 = vmatprep.subr.bf16.mxu0 0
      %4718 = vmatpush1.bf16.msra.mxu0 0
      %4719 = vmatprep.subr.bf16.mxu0 0
      %4720 = vmatpush1.bf16.msra.mxu0 0
      %4721 = vmatprep.subr.bf16.mxu0 0
      %4722 = vmatpush1.bf16.msra.mxu0 0
      %4723 = vmatprep.subr.bf16.mxu0 0
      %4724 = vmatpush1.bf16.msra.mxu0 0
      %4725 = vmatprep.subr.bf16.mxu0 0
      %4726 = vmatpush1.bf16.msra.mxu0 0
      %4727 = vmatprep.mubr.bf16.mxu0 0
      %4728 = vmatmul.mubr.bf16.gmra.mrb[0].mxu0 %v4645
      %v4729 = vpop.f32.mrb[0].mxu0
      %v4730 = vadd.f32 0.0, %v4729
      %v4731 = vpop.f32.mrb[0].mxu0
      %v4732 = vpop.f32.mrb[0].mxu0
      %v4733 = vadd.f32 0.0, %v4732
      %v4734 = vpop.f32.mrb[0].mxu0
      %4735 = vmatprep.mubr.bf16.mxu0 0
      %4736 = vmatmul.mubr.bf16.gmra.mrb[0].mxu0 %v4648
      %v4737 = vpop.f32.mrb[0].mxu0
      %v4738 = vadd.f32 0.0, %v4737
      %v4739 = vpop.f32.mrb[0].mxu0
      %v4740 = vpop.f32.mrb[0].mxu0
      %v4741 = vadd.f32 0.0, %v4740
      %v4742 = vpop.f32.mrb[0].mxu0
      %4743 = vmatprep.mubr.bf16.mxu0 0
      %4744 = vmatmul.mubr.bf16.gmra.mrb[0].mxu0 %v4651
      %v4745 = vpop.f32.mrb[0].mxu0
      %v4746 = vadd.f32 0.0, %v4745
      %v4747 = vpop.f32.mrb[0].mxu0
      %v4748 = vpop.f32.mrb[0].mxu0
      %v4749 = vadd.f32 0.0, %v4748
      %v4750 = vpop.f32.mrb[0].mxu0
      %4751 = vmatprep.mubr.bf16.mxu0 0
      %4752 = vmatmul.mubr.bf16.gmra.mrb[0].mxu0 %v4654
      %v4753 = vpop.f32.mrb[0].mxu0
      %v4754 = vadd.f32 0.0, %v4753
      %v4755 = vpop.f32.mrb[0].mxu0
      %v4756 = vpop.f32.mrb[0].mxu0
      %v4757 = vadd.f32 0.0, %v4756
      %v4758 = vpop.f32.mrb[0].mxu0
      %4759 = vmatprep.mubr.bf16.mxu0 0
      %4760 = vmatmul.mubr.bf16.gmra.mrb[0].mxu0 %v4657
      %v4761 = vpop.f32.mrb[0].mxu0
      %v4762 = vadd.f32 0.0, %v4761
      %v4763 = vpop.f32.mrb[0].mxu0
      %v4764 = vpop.f32.mrb[0].mxu0
      %v4765 = vadd.f32 0.0, %v4764
      %v4766 = vpop.f32.mrb[0].mxu0
      %4767 = vmatprep.mubr.bf16.mxu0 0
      %4768 = vmatmul.mubr.bf16.gmra.mrb[0].mxu0 %v4660
      %v4769 = vpop.f32.mrb[0].mxu0
      %v4770 = vadd.f32 0.0, %v4769
      %v4771 = vpop.f32.mrb[0].mxu0
      %v4772 = vpop.f32.mrb[0].mxu0
      %v4773 = vadd.f32 0.0, %v4772
      %v4774 = vpop.f32.mrb[0].mxu0
      %4775 = vmatprep.mubr.bf16.mxu0 0
      %4776 = vmatmul.mubr.bf16.gmra.mrb[0].mxu0 %v4663
      %v4777 = vpop.f32.mrb[0].mxu0
      %v4778 = vadd.f32 0.0, %v4777
      %v4779 = vpop.f32.mrb[0].mxu0
      %v4780 = vpop.f32.mrb[0].mxu0
      %v4781 = vadd.f32 0.0, %v4780
      %v4782 = vpop.f32.mrb[0].mxu0
      %4783 = vmatprep.mubr.bf16.mxu0 0
      %4784 = vmatmul.mubr.bf16.gmra.mrb[0].mxu0 %v4666
      %v4785 = vpop.f32.mrb[0].mxu0
      %v4786 = vadd.f32 0.0, %v4785
      %v4787 = vpop.f32.mrb[0].mxu0
      %v4788 = vpop.f32.mrb[0].mxu0
      %v4789 = vadd.f32 0.0, %v4788
      %v4790 = vpop.f32.mrb[0].mxu0
      %4791 = vmatprep.mubr.bf16.mxu0 0
      %4792 = vmatmul.mubr.bf16.gmra.mrb[0].mxu0 %v4669
      %v4793 = vpop.f32.mrb[0].mxu0
      %v4794 = vadd.f32 0.0, %v4793
      %v4795 = vpop.f32.mrb[0].mxu0
      %v4796 = vpop.f32.mrb[0].mxu0
      %v4797 = vadd.f32 0.0, %v4796
      %v4798 = vpop.f32.mrb[0].mxu0
      %4799 = vmatprep.mubr.bf16.mxu0 0
      %4800 = vmatmul.mubr.bf16.gmra.mrb[0].mxu0 %v4672
      %v4801 = vpop.f32.mrb[0].mxu0
      %v4802 = vadd.f32 0.0, %v4801
      %v4803 = vpop.f32.mrb[0].mxu0
      %v4804 = vpop.f32.mrb[0].mxu0
      %v4805 = vadd.f32 0.0, %v4804
      %v4806 = vpop.f32.mrb[0].mxu0
      %4807 = vmatprep.mubr.bf16.mxu0 0
      %4808 = vmatmul.mubr.bf16.gmra.mrb[0].mxu0 %v4675
      %v4809 = vpop.f32.mrb[0].mxu0
      %v4810 = vadd.f32 0.0, %v4809
      %v4811 = vpop.f32.mrb[0].mxu0
      %v4812 = vpop.f32.mrb[0].mxu0
      %v4813 = vadd.f32 0.0, %v4812
      %v4814 = vpop.f32.mrb[0].mxu0
      %4815 = vmatprep.mubr.bf16.mxu0 0
      %4816 = vmatmul.mubr.bf16.gmra.mrb[0].mxu0 %v4678
      %v4817 = vpop.f32.mrb[0].mxu0
      %v4818 = vadd.f32 0.0, %v4817
      %v4819 = vpop.f32.mrb[0].mxu0
      %v4820 = vpop.f32.mrb[0].mxu0
      %v4821 = vadd.f32 0.0, %v4820
      %v4822 = vpop.f32.mrb[0].mxu0
      %4823 = vmatprep.mubr.bf16.mxu0 0
      %4824 = vmatmul.mubr.bf16.gmra.mrb[0].mxu0 %v4681
      %v4825 = vpop.f32.mrb[0].mxu0
      %v4826 = vadd.f32 0.0, %v4825
      %v4827 = vpop.f32.mrb[0].mxu0
      %v4828 = vpop.f32.mrb[0].mxu0
      %v4829 = vadd.f32 0.0, %v4828
      %v4830 = vpop.f32.mrb[0].mxu0
      %4831 = vmatprep.mubr.bf16.mxu0 0
      %4832 = vmatmul.mubr.bf16.gmra.mrb[0].mxu0 %v4684
      %v4833 = vpop.f32.mrb[0].mxu0
      %v4834 = vadd.f32 0.0, %v4833
      %v4835 = vpop.f32.mrb[0].mxu0
      %v4836 = vpop.f32.mrb[0].mxu0
      %v4837 = vadd.f32 0.0, %v4836
      %v4838 = vpop.f32.mrb[0].mxu0
      %4839 = vmatprep.mubr.bf16.mxu0 0
      %4840 = vmatmul.mubr.bf16.gmra.mrb[0].mxu0 %v4687
      %v4841 = vpop.f32.mrb[0].mxu0
      %v4842 = vadd.f32 0.0, %v4841
      %v4843 = vpop.f32.mrb[0].mxu0
      %v4844 = vpop.f32.mrb[0].mxu0
      %v4845 = vadd.f32 0.0, %v4844
      %v4846 = vpop.f32.mrb[0].mxu0
      %4847 = vmatprep.mubr.bf16.mxu0 0
      %4848 = vmatmul.mubr.bf16.gmra.mrb[0].mxu0 %v4690
      %v4849 = vpop.f32.mrb[0].mxu0
      %v4850 = vadd.f32 0.0, %v4849
      %v4851 = vpop.f32.mrb[0].mxu0
      %v4852 = vpop.f32.mrb[0].mxu0
      %v4853 = vadd.f32 0.0, %v4852
      %v4854 = vpop.f32.mrb[0].mxu0
      %4855 = vdwg.mxu0
      %v4856 = vadd.f32 %v4386, %v4730
      %v4857 = vadd.f32 %v4387, %v4733
      %v4858 = vadd.f32 %v4388, %v4738
      %v4859 = vadd.f32 %v4389, %v4741
      %v4860 = vadd.f32 %v4390, %v4746
      %v4861 = vadd.f32 %v4391, %v4749
      %v4862 = vadd.f32 %v4392, %v4754
      %v4863 = vadd.f32 %v4393, %v4757
      %v4864 = vadd.f32 %v4394, %v4762
      %v4865 = vadd.f32 %v4395, %v4765
      %v4866 = vadd.f32 %v4396, %v4770
      %v4867 = vadd.f32 %v4397, %v4773
      %v4868 = vadd.f32 %v4398, %v4778
      %v4869 = vadd.f32 %v4399, %v4781
      %v4870 = vadd.f32 %v4400, %v4786
      %v4871 = vadd.f32 %v4401, %v4789
      %v4872 = vadd.f32 %v4402, %v4794
      %v4873 = vadd.f32 %v4403, %v4797
      %v4874 = vadd.f32 %v4404, %v4802
      %v4875 = vadd.f32 %v4405, %v4805
      %v4876 = vadd.f32 %v4406, %v4810
      %v4877 = vadd.f32 %v4407, %v4813
      %v4878 = vadd.f32 %v4408, %v4818
      %v4879 = vadd.f32 %v4409, %v4821
      %v4880 = vadd.f32 %v4410, %v4826
      %v4881 = vadd.f32 %v4411, %v4829
      %v4882 = vadd.f32 %v4412, %v4834
      %v4883 = vadd.f32 %v4413, %v4837
      %v4884 = vadd.f32 %v4414, %v4842
      %v4885 = vadd.f32 %v4415, %v4845
      %v4886 = vadd.f32 %v4416, %v4850
      %v4887 = vadd.f32 %v4417, %v4853
      %v4888 = vld [vmem:[#allocation2] sm:$0xff]
      %v4889 = vld [vmem:[#allocation2 + $0x8] sm:$0xff]
      %v4890 = vld [vmem:[#allocation2 + $0x10] sm:$0xff]
      %v4891 = vld [vmem:[#allocation2 + $0x18] sm:$0xff]
      %v4892 = vld [vmem:[#allocation2 + $0x20] sm:$0xff]
      %v4893 = vld [vmem:[#allocation2 + $0x28] sm:$0xff]
      %v4894 = vld [vmem:[#allocation2 + $0x30] sm:$0xff]
      %v4895 = vld [vmem:[#allocation2 + $0x38] sm:$0xff]
      %v4896 = vld [vmem:[#allocation2 + $0x40] sm:$0xff]
      %v4897 = vld [vmem:[#allocation2 + $0x48] sm:$0xff]
      %v4898 = vld [vmem:[#allocation2 + $0x50] sm:$0xff]
      %v4899 = vld [vmem:[#allocation2 + $0x58] sm:$0xff]
      %v4900 = vld [vmem:[#allocation2 + $0x60] sm:$0xff]
      %v4901 = vld [vmem:[#allocation2 + $0x68] sm:$0xff]
      %v4902 = vld [vmem:[#allocation2 + $0x70] sm:$0xff]
      %v4903 = vld [vmem:[#allocation2 + $0x78] sm:$0xff]
      %v4904 = vld [vmem:[#allocation2 + $0x80] sm:$0xff]
      %v4905 = vld [vmem:[#allocation2 + $0x88] sm:$0xff]
      %v4906 = vld [vmem:[#allocation2 + $0x90] sm:$0xff]
      %v4907 = vld [vmem:[#allocation2 + $0x98] sm:$0xff]
      %v4908 = vld [vmem:[#allocation2 + $0xa0] sm:$0xff]
      %v4909 = vld [vmem:[#allocation2 + $0xa8] sm:$0xff]
      %v4910 = vld [vmem:[#allocation2 + $0xb0] sm:$0xff]
      %v4911 = vld [vmem:[#allocation2 + $0xb8] sm:$0xff]
      %v4912 = vld [vmem:[#allocation2 + $0xc0] sm:$0xff]
      %v4913 = vld [vmem:[#allocation2 + $0xc8] sm:$0xff]
      %v4914 = vld [vmem:[#allocation2 + $0xd0] sm:$0xff]
      %v4915 = vld [vmem:[#allocation2 + $0xd8] sm:$0xff]
      %v4916 = vld [vmem:[#allocation2 + $0xe0] sm:$0xff]
      %v4917 = vld [vmem:[#allocation2 + $0xe8] sm:$0xff]
      %v4918 = vld [vmem:[#allocation2 + $0xf0] sm:$0xff]
      %v4919 = vld [vmem:[#allocation2 + $0xf8] sm:$0xff]
      %v4920 = vadd.f32 %v4888, %v4856
      %v4921 = vadd.f32 %v4889, %v4857
      %v4922 = vadd.f32 %v4890, %v4858
      %v4923 = vadd.f32 %v4891, %v4859
      %v4924 = vadd.f32 %v4892, %v4860
      %v4925 = vadd.f32 %v4893, %v4861
      %v4926 = vadd.f32 %v4894, %v4862
      %v4927 = vadd.f32 %v4895, %v4863
      %v4928 = vadd.f32 %v4896, %v4864
      %v4929 = vadd.f32 %v4897, %v4865
      %v4930 = vadd.f32 %v4898, %v4866
      %v4931 = vadd.f32 %v4899, %v4867
      %v4932 = vadd.f32 %v4900, %v4868
      %v4933 = vadd.f32 %v4901, %v4869
      %v4934 = vadd.f32 %v4902, %v4870
      %v4935 = vadd.f32 %v4903, %v4871
      %v4936 = vadd.f32 %v4904, %v4872
      %v4937 = vadd.f32 %v4905, %v4873
      %v4938 = vadd.f32 %v4906, %v4874
      %v4939 = vadd.f32 %v4907, %v4875
      %v4940 = vadd.f32 %v4908, %v4876
      %v4941 = vadd.f32 %v4909, %v4877
      %v4942 = vadd.f32 %v4910, %v4878
      %v4943 = vadd.f32 %v4911, %v4879
      %v4944 = vadd.f32 %v4912, %v4880
      %v4945 = vadd.f32 %v4913, %v4881
      %v4946 = vadd.f32 %v4914, %v4882
      %v4947 = vadd.f32 %v4915, %v4883
      %v4948 = vadd.f32 %v4916, %v4884
      %v4949 = vadd.f32 %v4917, %v4885
      %v4950 = vadd.f32 %v4918, %v4886
      %v4951 = vadd.f32 %v4919, %v4887
      %4952 = vst [vmem:[#allocation2] sm:$0xff] %v4920
      %4953 = vst [vmem:[#allocation2 + $0x8] sm:$0xff] %v4921
      %4954 = vst [vmem:[#allocation2 + $0x10] sm:$0xff] %v4922
      %4955 = vst [vmem:[#allocation2 + $0x18] sm:$0xff] %v4923
      %4956 = vst [vmem:[#allocation2 + $0x20] sm:$0xff] %v4924
      %4957 = vst [vmem:[#allocation2 + $0x28] sm:$0xff] %v4925
      %4958 = vst [vmem:[#allocation2 + $0x30] sm:$0xff] %v4926
      %4959 = vst [vmem:[#allocation2 + $0x38] sm:$0xff] %v4927
      %4960 = vst [vmem:[#allocation2 + $0x40] sm:$0xff] %v4928
      %4961 = vst [vmem:[#allocation2 + $0x48] sm:$0xff] %v4929
      %4962 = vst [vmem:[#allocation2 + $0x50] sm:$0xff] %v4930
      %4963 = vst [vmem:[#allocation2 + $0x58] sm:$0xff] %v4931
      %4964 = vst [vmem:[#allocation2 + $0x60] sm:$0xff] %v4932
      %4965 = vst [vmem:[#allocation2 + $0x68] sm:$0xff] %v4933
      %4966 = vst [vmem:[#allocation2 + $0x70] sm:$0xff] %v4934
      %4967 = vst [vmem:[#allocation2 + $0x78] sm:$0xff] %v4935
      %4968 = vst [vmem:[#allocation2 + $0x80] sm:$0xff] %v4936
      %4969 = vst [vmem:[#allocation2 + $0x88] sm:$0xff] %v4937
      %4970 = vst [vmem:[#allocation2 + $0x90] sm:$0xff] %v4938
      %4971 = vst [vmem:[#allocation2 + $0x98] sm:$0xff] %v4939
      %4972 = vst [vmem:[#allocation2 + $0xa0] sm:$0xff] %v4940
      %4973 = vst [vmem:[#allocation2 + $0xa8] sm:$0xff] %v4941
      %4974 = vst [vmem:[#allocation2 + $0xb0] sm:$0xff] %v4942
      %4975 = vst [vmem:[#allocation2 + $0xb8] sm:$0xff] %v4943
      %4976 = vst [vmem:[#allocation2 + $0xc0] sm:$0xff] %v4944
      %4977 = vst [vmem:[#allocation2 + $0xc8] sm:$0xff] %v4945
      %4978 = vst [vmem:[#allocation2 + $0xd0] sm:$0xff] %v4946
      %4979 = vst [vmem:[#allocation2 + $0xd8] sm:$0xff] %v4947
      %4980 = vst [vmem:[#allocation2 + $0xe0] sm:$0xff] %v4948
      %4981 = vst [vmem:[#allocation2 + $0xe8] sm:$0xff] %v4949
      %4982 = vst [vmem:[#allocation2 + $0xf0] sm:$0xff] %v4950
      %4983 = vst [vmem:[#allocation2 + $0xf8] sm:$0xff] %v4951
      // Predicated region
      $region41: #{conv_block_forward.1} parent=35 // pred_check
        %p4984 = pneg %p293
      $region42: #{conv_block_forward.1} parent=35 // pred_check_branch
        %4986 = sbr.rel (%p4984) target = $region44
      $region43: #{conv_block_forward.1} parent=35 // pred_region
        %v4987 = vld [vmem:[#allocation2] sm:$0xff]
        %v4988 = vld [vmem:[#allocation2 + $0x8] sm:$0xff]
        %v4989 = vld [vmem:[#allocation2 + $0x10] sm:$0xff]
        %v4990 = vld [vmem:[#allocation2 + $0x18] sm:$0xff]
        %v4991 = vld [vmem:[#allocation2 + $0x20] sm:$0xff]
        %v4992 = vld [vmem:[#allocation2 + $0x28] sm:$0xff]
        %v4993 = vld [vmem:[#allocation2 + $0x30] sm:$0xff]
        %v4994 = vld [vmem:[#allocation2 + $0x38] sm:$0xff]
        %v4995 = vld [vmem:[#allocation2 + $0x40] sm:$0xff]
        %v4996 = vld [vmem:[#allocation2 + $0x48] sm:$0xff]
        %v4997 = vld [vmem:[#allocation2 + $0x50] sm:$0xff]
        %v4998 = vld [vmem:[#allocation2 + $0x58] sm:$0xff]
        %v4999 = vld [vmem:[#allocation2 + $0x60] sm:$0xff]
        %v5000 = vld [vmem:[#allocation2 + $0x68] sm:$0xff]
        %v5001 = vld [vmem:[#allocation2 + $0x70] sm:$0xff]
        %v5002 = vld [vmem:[#allocation2 + $0x78] sm:$0xff]
        %v5003 = vld [vmem:[#allocation2 + $0x80] sm:$0xff]
        %v5004 = vld [vmem:[#allocation2 + $0x88] sm:$0xff]
        %v5005 = vld [vmem:[#allocation2 + $0x90] sm:$0xff]
        %v5006 = vld [vmem:[#allocation2 + $0x98] sm:$0xff]
        %v5007 = vld [vmem:[#allocation2 + $0xa0] sm:$0xff]
        %v5008 = vld [vmem:[#allocation2 + $0xa8] sm:$0xff]
        %v5009 = vld [vmem:[#allocation2 + $0xb0] sm:$0xff]
        %v5010 = vld [vmem:[#allocation2 + $0xb8] sm:$0xff]
        %v5011 = vld [vmem:[#allocation2 + $0xc0] sm:$0xff]
        %v5012 = vld [vmem:[#allocation2 + $0xc8] sm:$0xff]
        %v5013 = vld [vmem:[#allocation2 + $0xd0] sm:$0xff]
        %v5014 = vld [vmem:[#allocation2 + $0xd8] sm:$0xff]
        %v5015 = vld [vmem:[#allocation2 + $0xe0] sm:$0xff]
        %v5016 = vld [vmem:[#allocation2 + $0xe8] sm:$0xff]
        %v5017 = vld [vmem:[#allocation2 + $0xf0] sm:$0xff]
        %v5018 = vld [vmem:[#allocation2 + $0xf8] sm:$0xff]
        %v5019 = vld [vmem:[%s280] sm:$0x1]
        %v5021 = vlaneseq
        %v5022 = vshrl.u32 %v5021, 7
        %v5023 = vsub.s32 0, %v5022
        %v5024 = vrot.slane %v5019, %v5023
        %v5026 = vmul.f32 %v4987, %v5024
        %v5027 = vmul.f32 %v4988, %v5024
        %v5028 = vmul.f32 %v4989, %v5024
        %v5029 = vmul.f32 %v4990, %v5024
        %v5030 = vmul.f32 %v4991, %v5024
        %v5031 = vmul.f32 %v4992, %v5024
        %v5032 = vmul.f32 %v4993, %v5024
        %v5033 = vmul.f32 %v4994, %v5024
        %v5034 = vmul.f32 %v4995, %v5024
        %v5035 = vmul.f32 %v4996, %v5024
        %v5036 = vmul.f32 %v4997, %v5024
        %v5037 = vmul.f32 %v4998, %v5024
        %v5038 = vmul.f32 %v4999, %v5024
        %v5039 = vmul.f32 %v5000, %v5024
        %v5040 = vmul.f32 %v5001, %v5024
        %v5041 = vmul.f32 %v5002, %v5024
        %v5042 = vmul.f32 %v5003, %v5024
        %v5043 = vmul.f32 %v5004, %v5024
        %v5044 = vmul.f32 %v5005, %v5024
        %v5045 = vmul.f32 %v5006, %v5024
        %v5046 = vmul.f32 %v5007, %v5024
        %v5047 = vmul.f32 %v5008, %v5024
        %v5048 = vmul.f32 %v5009, %v5024
        %v5049 = vmul.f32 %v5010, %v5024
        %v5050 = vmul.f32 %v5011, %v5024
        %v5051 = vmul.f32 %v5012, %v5024
        %v5052 = vmul.f32 %v5013, %v5024
        %v5053 = vmul.f32 %v5014, %v5024
        %v5054 = vmul.f32 %v5015, %v5024
        %v5055 = vmul.f32 %v5016, %v5024
        %v5056 = vmul.f32 %v5017, %v5024
        %v5057 = vmul.f32 %v5018, %v5024
        %v5058 = vld [vmem:[%s283] sm:$0x1]
        %v5060 = vlaneseq
        %v5061 = vshrl.u32 %v5060, 7
        %v5062 = vsub.s32 0, %v5061
        %v5063 = vrot.slane %v5058, %v5062
        %v5065 = vadd.f32 %v5026, %v5063
        %v5066 = vadd.f32 %v5027, %v5063
        %v5067 = vadd.f32 %v5028, %v5063
        %v5068 = vadd.f32 %v5029, %v5063
        %v5069 = vadd.f32 %v5030, %v5063
        %v5070 = vadd.f32 %v5031, %v5063
        %v5071 = vadd.f32 %v5032, %v5063
        %v5072 = vadd.f32 %v5033, %v5063
        %v5073 = vadd.f32 %v5034, %v5063
        %v5074 = vadd.f32 %v5035, %v5063
        %v5075 = vadd.f32 %v5036, %v5063
        %v5076 = vadd.f32 %v5037, %v5063
        %v5077 = vadd.f32 %v5038, %v5063
        %v5078 = vadd.f32 %v5039, %v5063
        %v5079 = vadd.f32 %v5040, %v5063
        %v5080 = vadd.f32 %v5041, %v5063
        %v5081 = vadd.f32 %v5042, %v5063
        %v5082 = vadd.f32 %v5043, %v5063
        %v5083 = vadd.f32 %v5044, %v5063
        %v5084 = vadd.f32 %v5045, %v5063
        %v5085 = vadd.f32 %v5046, %v5063
        %v5086 = vadd.f32 %v5047, %v5063
        %v5087 = vadd.f32 %v5048, %v5063
        %v5088 = vadd.f32 %v5049, %v5063
        %v5089 = vadd.f32 %v5050, %v5063
        %v5090 = vadd.f32 %v5051, %v5063
        %v5091 = vadd.f32 %v5052, %v5063
        %v5092 = vadd.f32 %v5053, %v5063
        %v5093 = vadd.f32 %v5054, %v5063
        %v5094 = vadd.f32 %v5055, %v5063
        %v5095 = vadd.f32 %v5056, %v5063
        %v5096 = vadd.f32 %v5057, %v5063
        %vm5097 = vcmp.gt.f32.partialorder %v5065, 0.0
        %vm5098 = vcmp.gt.f32.partialorder %v5066, 0.0
        %vm5099 = vcmp.gt.f32.partialorder %v5067, 0.0
        %vm5100 = vcmp.gt.f32.partialorder %v5068, 0.0
        %vm5101 = vcmp.gt.f32.partialorder %v5069, 0.0
        %vm5102 = vcmp.gt.f32.partialorder %v5070, 0.0
        %vm5103 = vcmp.gt.f32.partialorder %v5071, 0.0
        %vm5104 = vcmp.gt.f32.partialorder %v5072, 0.0
        %vm5105 = vcmp.gt.f32.partialorder %v5073, 0.0
        %vm5106 = vcmp.gt.f32.partialorder %v5074, 0.0
        %vm5107 = vcmp.gt.f32.partialorder %v5075, 0.0
        %vm5108 = vcmp.gt.f32.partialorder %v5076, 0.0
        %vm5109 = vcmp.gt.f32.partialorder %v5077, 0.0
        %vm5110 = vcmp.gt.f32.partialorder %v5078, 0.0
        %vm5111 = vcmp.gt.f32.partialorder %v5079, 0.0
        %vm5112 = vcmp.gt.f32.partialorder %v5080, 0.0
        %vm5113 = vcmp.gt.f32.partialorder %v5081, 0.0
        %vm5114 = vcmp.gt.f32.partialorder %v5082, 0.0
        %vm5115 = vcmp.gt.f32.partialorder %v5083, 0.0
        %vm5116 = vcmp.gt.f32.partialorder %v5084, 0.0
        %vm5117 = vcmp.gt.f32.partialorder %v5085, 0.0
        %vm5118 = vcmp.gt.f32.partialorder %v5086, 0.0
        %vm5119 = vcmp.gt.f32.partialorder %v5087, 0.0
        %vm5120 = vcmp.gt.f32.partialorder %v5088, 0.0
        %vm5121 = vcmp.gt.f32.partialorder %v5089, 0.0
        %vm5122 = vcmp.gt.f32.partialorder %v5090, 0.0
        %vm5123 = vcmp.gt.f32.partialorder %v5091, 0.0
        %vm5124 = vcmp.gt.f32.partialorder %v5092, 0.0
        %vm5125 = vcmp.gt.f32.partialorder %v5093, 0.0
        %vm5126 = vcmp.gt.f32.partialorder %v5094, 0.0
        %vm5127 = vcmp.gt.f32.partialorder %v5095, 0.0
        %vm5128 = vcmp.gt.f32.partialorder %v5096, 0.0
        %v5129 = vmul.f32 %v5065, 0.1
        %v5130 = vmul.f32 %v5066, 0.1
        %v5131 = vmul.f32 %v5067, 0.1
        %v5132 = vmul.f32 %v5068, 0.1
        %v5133 = vmul.f32 %v5069, 0.1
        %v5134 = vmul.f32 %v5070, 0.1
        %v5135 = vmul.f32 %v5071, 0.1
        %v5136 = vmul.f32 %v5072, 0.1
        %v5137 = vmul.f32 %v5073, 0.1
        %v5138 = vmul.f32 %v5074, 0.1
        %v5139 = vmul.f32 %v5075, 0.1
        %v5140 = vmul.f32 %v5076, 0.1
        %v5141 = vmul.f32 %v5077, 0.1
        %v5142 = vmul.f32 %v5078, 0.1
        %v5143 = vmul.f32 %v5079, 0.1
        %v5144 = vmul.f32 %v5080, 0.1
        %v5145 = vmul.f32 %v5081, 0.1
        %v5146 = vmul.f32 %v5082, 0.1
        %v5147 = vmul.f32 %v5083, 0.1
        %v5148 = vmul.f32 %v5084, 0.1
        %v5149 = vmul.f32 %v5085, 0.1
        %v5150 = vmul.f32 %v5086, 0.1
        %v5151 = vmul.f32 %v5087, 0.1
        %v5152 = vmul.f32 %v5088, 0.1
        %v5153 = vmul.f32 %v5089, 0.1
        %v5154 = vmul.f32 %v5090, 0.1
        %v5155 = vmul.f32 %v5091, 0.1
        %v5156 = vmul.f32 %v5092, 0.1
        %v5157 = vmul.f32 %v5093, 0.1
        %v5158 = vmul.f32 %v5094, 0.1
        %v5159 = vmul.f32 %v5095, 0.1
        %v5160 = vmul.f32 %v5096, 0.1
        %v5161 = vsel %vm5097, %v5065, %v5129
        %v5162 = vsel %vm5098, %v5066, %v5130
        %v5163 = vsel %vm5099, %v5067, %v5131
        %v5164 = vsel %vm5100, %v5068, %v5132
        %v5165 = vsel %vm5101, %v5069, %v5133
        %v5166 = vsel %vm5102, %v5070, %v5134
        %v5167 = vsel %vm5103, %v5071, %v5135
        %v5168 = vsel %vm5104, %v5072, %v5136
        %v5169 = vsel %vm5105, %v5073, %v5137
        %v5170 = vsel %vm5106, %v5074, %v5138
        %v5171 = vsel %vm5107, %v5075, %v5139
        %v5172 = vsel %vm5108, %v5076, %v5140
        %v5173 = vsel %vm5109, %v5077, %v5141
        %v5174 = vsel %vm5110, %v5078, %v5142
        %v5175 = vsel %vm5111, %v5079, %v5143
        %v5176 = vsel %vm5112, %v5080, %v5144
        %v5177 = vsel %vm5113, %v5081, %v5145
        %v5178 = vsel %vm5114, %v5082, %v5146
        %v5179 = vsel %vm5115, %v5083, %v5147
        %v5180 = vsel %vm5116, %v5084, %v5148
        %v5181 = vsel %vm5117, %v5085, %v5149
        %v5182 = vsel %vm5118, %v5086, %v5150
        %v5183 = vsel %vm5119, %v5087, %v5151
        %v5184 = vsel %vm5120, %v5088, %v5152
        %v5185 = vsel %vm5121, %v5089, %v5153
        %v5186 = vsel %vm5122, %v5090, %v5154
        %v5187 = vsel %vm5123, %v5091, %v5155
        %v5188 = vsel %vm5124, %v5092, %v5156
        %v5189 = vsel %vm5125, %v5093, %v5157
        %v5190 = vsel %vm5126, %v5094, %v5158
        %v5191 = vsel %vm5127, %v5095, %v5159
        %v5192 = vsel %vm5128, %v5096, %v5160
        %v5193 = vpack.c.bf16 %v5162, %v5161
        %v5194 = vpack.c.bf16 %v5164, %v5163
        %v5195 = vpack.c.bf16 %v5166, %v5165
        %v5196 = vpack.c.bf16 %v5168, %v5167
        %v5197 = vpack.c.bf16 %v5170, %v5169
        %v5198 = vpack.c.bf16 %v5172, %v5171
        %v5199 = vpack.c.bf16 %v5174, %v5173
        %v5200 = vpack.c.bf16 %v5176, %v5175
        %v5201 = vpack.c.bf16 %v5178, %v5177
        %v5202 = vpack.c.bf16 %v5180, %v5179
        %v5203 = vpack.c.bf16 %v5182, %v5181
        %v5204 = vpack.c.bf16 %v5184, %v5183
        %v5205 = vpack.c.bf16 %v5186, %v5185
        %v5206 = vpack.c.bf16 %v5188, %v5187
        %v5207 = vpack.c.bf16 %v5190, %v5189
        %v5208 = vpack.c.bf16 %v5192, %v5191
        %v5225 = vunpack.c.l.b16 %v5193
        %v5226 = vunpack.c.h.b16 %v5193
        %v5227 = vunpack.c.l.b16 %v5194
        %v5228 = vunpack.c.h.b16 %v5194
        %v5229 = vunpack.c.l.b16 %v5195
        %v5230 = vunpack.c.h.b16 %v5195
        %v5231 = vunpack.c.l.b16 %v5196
        %v5232 = vunpack.c.h.b16 %v5196
        %v5233 = vunpack.c.l.b16 %v5197
        %v5234 = vunpack.c.h.b16 %v5197
        %v5235 = vunpack.c.l.b16 %v5198
        %v5236 = vunpack.c.h.b16 %v5198
        %v5237 = vunpack.c.l.b16 %v5199
        %v5238 = vunpack.c.h.b16 %v5199
        %v5239 = vunpack.c.l.b16 %v5200
        %v5240 = vunpack.c.h.b16 %v5200
        %v5241 = vunpack.c.l.b16 %v5201
        %v5242 = vunpack.c.h.b16 %v5201
        %v5243 = vunpack.c.l.b16 %v5202
        %v5244 = vunpack.c.h.b16 %v5202
        %v5245 = vunpack.c.l.b16 %v5203
        %v5246 = vunpack.c.h.b16 %v5203
        %v5247 = vunpack.c.l.b16 %v5204
        %v5248 = vunpack.c.h.b16 %v5204
        %v5249 = vunpack.c.l.b16 %v5205
        %v5250 = vunpack.c.h.b16 %v5205
        %v5251 = vunpack.c.l.b16 %v5206
        %v5252 = vunpack.c.h.b16 %v5206
        %v5253 = vunpack.c.l.b16 %v5207
        %v5254 = vunpack.c.h.b16 %v5207
        %v5255 = vunpack.c.l.b16 %v5208
        %v5256 = vunpack.c.h.b16 %v5208
        %v5257 = vpack.c.b16 %v5225, %v5225
        %v5258 = vpack.c.b16 %v5226, %v5226
        %v5259 = vpack.c.b16 %v5227, %v5227
        %v5260 = vpack.c.b16 %v5228, %v5228
        %v5261 = vpack.c.b16 %v5229, %v5229
        %v5262 = vpack.c.b16 %v5230, %v5230
        %v5263 = vpack.c.b16 %v5231, %v5231
        %v5264 = vpack.c.b16 %v5232, %v5232
        %v5265 = vpack.c.b16 %v5233, %v5233
        %v5266 = vpack.c.b16 %v5234, %v5234
        %v5267 = vpack.c.b16 %v5235, %v5235
        %v5268 = vpack.c.b16 %v5236, %v5236
        %v5269 = vpack.c.b16 %v5237, %v5237
        %v5270 = vpack.c.b16 %v5238, %v5238
        %v5271 = vpack.c.b16 %v5239, %v5239
        %v5272 = vpack.c.b16 %v5240, %v5240
        %v5273 = vpack.c.b16 %v5241, %v5241
        %v5274 = vpack.c.b16 %v5242, %v5242
        %v5275 = vpack.c.b16 %v5243, %v5243
        %v5276 = vpack.c.b16 %v5244, %v5244
        %v5277 = vpack.c.b16 %v5245, %v5245
        %v5278 = vpack.c.b16 %v5246, %v5246
        %v5279 = vpack.c.b16 %v5247, %v5247
        %v5280 = vpack.c.b16 %v5248, %v5248
        %v5281 = vpack.c.b16 %v5249, %v5249
        %v5282 = vpack.c.b16 %v5250, %v5250
        %v5283 = vpack.c.b16 %v5251, %v5251
        %v5284 = vpack.c.b16 %v5252, %v5252
        %v5285 = vpack.c.b16 %v5253, %v5253
        %v5286 = vpack.c.b16 %v5254, %v5254
        %v5287 = vpack.c.b16 %v5255, %v5255
        %v5288 = vpack.c.b16 %v5256, %v5256
        %5321 = vst [vmem:[%s291] sm:$0xf] %v5257
        %5322 = vst [vmem:[%s291 + $0x4] sm:$0xf] %v5258
        %5323 = vst [vmem:[%s291 + $0x8] sm:$0xf] %v5259
        %5324 = vst [vmem:[%s291 + $0xc] sm:$0xf] %v5260
        %5325 = vst [vmem:[%s291 + $0x10] sm:$0xf] %v5261
        %5326 = vst [vmem:[%s291 + $0x14] sm:$0xf] %v5262
        %5327 = vst [vmem:[%s291 + $0x18] sm:$0xf] %v5263
        %5328 = vst [vmem:[%s291 + $0x1c] sm:$0xf] %v5264
        %5329 = vst [vmem:[%s291 + $0x20] sm:$0xf] %v5265
        %5330 = vst [vmem:[%s291 + $0x24] sm:$0xf] %v5266
        %5331 = vst [vmem:[%s291 + $0x28] sm:$0xf] %v5267
        %5332 = vst [vmem:[%s291 + $0x2c] sm:$0xf] %v5268
        %5333 = vst [vmem:[%s291 + $0x30] sm:$0xf] %v5269
        %5334 = vst [vmem:[%s291 + $0x34] sm:$0xf] %v5270
        %5335 = vst [vmem:[%s291 + $0x38] sm:$0xf] %v5271
        %5336 = vst [vmem:[%s291 + $0x3c] sm:$0xf] %v5272
        %5337 = vst [vmem:[%s291 + $0x40] sm:$0xf] %v5273
        %5338 = vst [vmem:[%s291 + $0x44] sm:$0xf] %v5274
        %5339 = vst [vmem:[%s291 + $0x48] sm:$0xf] %v5275
        %5340 = vst [vmem:[%s291 + $0x4c] sm:$0xf] %v5276
        %5341 = vst [vmem:[%s291 + $0x50] sm:$0xf] %v5277
        %5342 = vst [vmem:[%s291 + $0x54] sm:$0xf] %v5278
        %5343 = vst [vmem:[%s291 + $0x58] sm:$0xf] %v5279
        %5344 = vst [vmem:[%s291 + $0x5c] sm:$0xf] %v5280
        %5345 = vst [vmem:[%s291 + $0x60] sm:$0xf] %v5281
        %5346 = vst [vmem:[%s291 + $0x64] sm:$0xf] %v5282
        %5347 = vst [vmem:[%s291 + $0x68] sm:$0xf] %v5283
        %5348 = vst [vmem:[%s291 + $0x6c] sm:$0xf] %v5284
        %5349 = vst [vmem:[%s291 + $0x70] sm:$0xf] %v5285
        %5350 = vst [vmem:[%s291 + $0x74] sm:$0xf] %v5286
        %5351 = vst [vmem:[%s291 + $0x78] sm:$0xf] %v5287
        %5352 = vst [vmem:[%s291 + $0x7c] sm:$0xf] %v5288
      $region44: #{conv_block_forward.1} parent=35 // pred_fallthru
        _
      %p5353 = scmp.lt.s32.totalorder %s20, 1
      %s5354 = scalar_select %p5353, %s20, 1
      %p5355 = scmp.lt.s32.totalorder %s21, 0
      %s5356 = scalar_select %p5355, %s21, 0
      %s5357 = smul.addr %s5354, 32
      %s5358 = sadd.s32 %s5356, %s5357
      %s5359 = smul.addr %s5358, 4
      %s5360 = scalar_lea.vmem %s4, %s5359
      // Predicated region
      $region45: #{conv_block_forward.1} parent=35 // pred_check
        %p5361 = pneg %p162
      $region46: #{conv_block_forward.1} parent=35 // pred_check_branch
        %5363 = sbr.rel (%p5361) target = $region48
      $region47: #{conv_block_forward.1} parent=35 // pred_region
        _
      $region48: #{conv_block_forward.1} parent=35 // pred_fallthru
        _
    $region36: #{conv_block_forward.1} parent=5 // pred_fallthru
      _
    %p5364 = scmp.le.s32.totalorder 2, %s10
    // Predicated region
    $region49: #{conv_block_forward.1} parent=5 // pred_check
      %p5365 = pneg %p5364
    $region50: #{conv_block_forward.1} parent=5 // pred_check_branch
      %5367 = sbr.rel (%p5365) target = $region52
    $region51: #{conv_block_forward.1} parent=5 // pred_region
      %s5368 = ssub.s32 %s10, 2
      // Predicated region
      $region53: #{conv_block_forward.1} parent=51 // pred_check
        %p5369 = pneg %p168
      $region54: #{conv_block_forward.1} parent=51 // pred_check_branch
        %5371 = sbr.rel (%p5369) target = $region56
      $region55: #{conv_block_forward.1} parent=51 // pred_region
        %p5372 = scmp.lt.s32.totalorder %s23, 1
        %s5373 = scalar_select %p5372, %s23, 1
        %p5374 = scmp.lt.s32.totalorder %s24, 0
        %s5375 = scalar_select %p5374, %s24, 0
        %s5376 = smul.addr %s5373, 32
        %s5377 = sadd.s32 %s5375, %s5376
        %s5378 = smul.addr %s5377, 4
        %s5379 = scalar_lea.vmem %s4, %s5378
      $region56: #{conv_block_forward.1} parent=51 // pred_fallthru
        _
    $region52: #{conv_block_forward.1} parent=5 // pred_fallthru
      _
  $region6: #{conv_block_forward.1} parent=0 // loop_footer
    %s14 = sadd.s32 1, %s10
  $region7: #{conv_block_forward.1} parent=0 // loop_footer_branch
    %9 = sbr.rel target = $region3
  $region8: #{conv_block_forward.1} parent=0 // loop_exit
    _

</llo_original>
